<compile_context>
chip_gen: v6e
topology: v6e:2x2x1
jax: 0.10.0
libtpu: 0.0.40
codegen_flags: <defaults>
</compile_context>

<pallas_src>
import functools

import jax
import jax.numpy as jnp
from jax import lax
from jax.experimental import pallas as pl
from jax.experimental.pallas import tpu as pltpu

EPS = 1e-5
LANE = 128


def _round_up(x, m):
    return (x + m - 1) // m * m


def _choose_tiles(rows, target=2048):
    """Row-tile TM (multiple of 8), tile count MT, padded row count MT*TM."""
    r8 = _round_up(rows, 8)
    mt = -(-r8 // target)
    tm = _round_up(-(-r8 // mt), 8)
    return tm, mt, tm * mt


# ---------------------------------------------------------------------------
# Pallas kernels
# ---------------------------------------------------------------------------
def _conv3x3_kernel(x_ref, w_ref, b_ref, m_ref, y_ref, s_ref, *, wp, tm, mt):
    """3x3 / stride-1 / pad-1 conv on a flat zero-padded image (one row tile).

    x_ref : (1, R_in, Cin)  f32   flattened (H+2, W+2) zero-padded image
    w_ref : (9, Cin, Cp)    bf16  per-tap weights, Cp = lane-padded Cout
    b_ref : (1, Cp)         f32   bias (zeros when the conv has no bias)
    m_ref : (TM, 1)         f32   1.0 on valid output positions, 0.0 on the
                                  junk columns / slack rows of the flat layout
    y_ref : (1, TM, Cp)     bf16  raw (pre-BN) conv output tile
    s_ref : (1, 1, 2, Cp)   f32   masked per-tile [sum ; sum-of-squares]
    """
    if mt == 1:
        base = 0
    else:
        base = pl.multiple_of(pl.program_id(1) * tm, 8)
    cp = y_ref.shape[2]
    acc = jnp.broadcast_to(b_ref[...], (tm, cp))          # f32 local accumulator
    for dy in range(3):
        for dx in range(3):
            t = dy * 3 + dx
            xt = x_ref[0, pl.ds(base + dy * wp + dx, tm), :].astype(jnp.bfloat16)
            acc = acc + jnp.dot(xt, w_ref[t],
                                preferred_element_type=jnp.float32)
    y_ref[0] = acc.astype(y_ref.dtype)
    masked = acc * m_ref[...]
    s_ref[0, 0, 0:1, :] = jnp.sum(masked, axis=0, keepdims=True)
    s_ref[0, 0, 1:2, :] = jnp.sum(masked * masked, axis=0, keepdims=True)


def _epilogue_kernel(y_ref, sc1_ref, sh1_ref, r_ref, scr_ref, shr_ref, o_ref,
                     *, tm, mt, r_off, planes):
    """out = relu(bn1(y1) + affine(residual)); residual read at a row offset."""
    if mt == 1:
        base = 0
    else:
        base = pl.multiple_of(pl.program_id(1) * tm, 8)
    a = y_ref[0, :, :planes].astype(jnp.float32) * sc1_ref[...] + sh1_ref[...]
    r = r_ref[0, pl.ds(base + r_off, tm), :][:, :planes].astype(jnp.float32)
    b = r * scr_ref[...] + shr_ref[...]
    o_ref[0] = jnp.maximum(a + b, 0.0)


# ---------------------------------------------------------------------------
# pallas_call wrappers
# ---------------------------------------------------------------------------
def _conv3x3(x_flat, w9, bias, mask, wp, tm, mt):
    """x_flat: (N, R_in, Cin) f32; w9: (9, Cin, Cp) bf16; bias: (1, Cp) f32."""
    n, r_in, cin = x_flat.shape
    cp = w9.shape[2]
    r_pad = mask.shape[0]
    kernel = functools.partial(_conv3x3_kernel, wp=wp, tm=tm, mt=mt)
    flops = 2 * n * r_pad * 9 * cin * cp
    bytes_accessed = (x_flat.size * 4 + w9.size * 2 + bias.size * 4
                      + mask.size * 4 + n * r_pad * cp * 2 + n * mt * 2 * cp * 4)
    return pl.pallas_call(
        kernel,
        out_shape=(jax.ShapeDtypeStruct((n, r_pad, cp), jnp.bfloat16),
                   jax.ShapeDtypeStruct((n, mt, 2, cp), jnp.float32)),
        grid=(n, mt),
        in_specs=[
            pl.BlockSpec((1, r_in, cin), lambda i, j: (i, 0, 0)),   # resident per image
            pl.BlockSpec((9, cin, cp), lambda i, j: (0, 0, 0)),
            pl.BlockSpec((1, cp), lambda i, j: (0, 0)),
            pl.BlockSpec((tm, 1), lambda i, j: (j, 0)),
        ],
        out_specs=(
            pl.BlockSpec((1, tm, cp), lambda i, j: (i, j, 0)),
            pl.BlockSpec((1, 1, 2, cp), lambda i, j: (i, j, 0, 0)),
        ),
        compiler_params=pltpu.CompilerParams(
            dimension_semantics=("parallel", "parallel")),
        cost_estimate=pl.CostEstimate(flops=int(flops), transcendentals=0,
                                      bytes_accessed=int(bytes_accessed)),
    )(x_flat, w9, bias, mask)


def _epilogue(y1, sc1, sh1, r, scr, shr, tm, mt, r_off, planes):
    n, r_pad, cp = y1.shape
    r_rows, rch = r.shape[1], r.shape[2]
    kernel = functools.partial(_epilogue_kernel, tm=tm, mt=mt, r_off=r_off,
                               planes=planes)
    vec = pl.BlockSpec((1, planes), lambda i, j: (0, 0))
    return pl.pallas_call(
        kernel,
        out_shape=jax.ShapeDtypeStruct((n, r_pad, planes), jnp.float32),
        grid=(n, mt),
        in_specs=[
            pl.BlockSpec((1, tm, cp), lambda i, j: (i, j, 0)),
            vec, vec,
            pl.BlockSpec((1, r_rows, rch), lambda i, j: (i, 0, 0)),  # resident
            vec, vec,
        ],
        out_specs=pl.BlockSpec((1, tm, planes), lambda i, j: (i, j, 0)),
        compiler_params=pltpu.CompilerParams(
            dimension_semantics=("parallel", "parallel")),
    )(y1, sc1, sh1, r, scr, shr)


# ---------------------------------------------------------------------------
# Plain-JAX glue
# ---------------------------------------------------------------------------
def _prep_w(w, cp):
    # [Cout, Cin, 3, 3] -> (9, Cin, Cp) bf16, per-tap (dy, dx) layout.
    cout, cin, kh, kw = w.shape
    wt = jnp.transpose(w, (2, 3, 1, 0)).reshape(kh * kw, cin, cout)
    wt = jnp.pad(wt, ((0, 0), (0, 0), (0, cp - cout)))
    return wt.astype(jnp.bfloat16)


def _pad_vec(v, cp):
    return jnp.pad(v.astype(jnp.float32), (0, cp - v.shape[0]))[None, :]


def _flat_pad(a, r_rows):
    """(N, H, W, C) -> (N, r_rows, C) f32: zero-padded image, rows flattened."""
    n, h, w, c = a.shape
    ap = jnp.pad(a, ((0, 0), (1, 1), (1, 1), (0, 0)))
    ap = ap.reshape(n, (h + 2) * (w + 2), c)
    ap = jnp.pad(ap, ((0, 0), (0, r_rows - ap.shape[1]), (0, 0)))
    return ap.astype(jnp.float32)


def _col_mask(ho, wo, r_pad):
    wp = wo + 2
    j = jnp.arange(r_pad)
    valid = (j < ho * wp) & (j % wp < wo)
    return valid.astype(jnp.float32)[:, None]


def _bn_affine(stats, count, gamma, beta):
    """Reduce per-tile [sum; sumsq] -> per-channel scale/shift (training BN)."""
    c = gamma.shape[0]
    tot = jnp.sum(stats, axis=(0, 1))[:, :c]                 # (2, C)
    mean = tot[0] / count
    var = jnp.maximum(tot[1] / count - mean * mean, 0.0)
    istd = lax.rsqrt(var + EPS)
    scale = gamma.astype(jnp.float32) * istd
    shift = beta.astype(jnp.float32) - mean * scale
    return scale, shift


def _upsample_nearest(x, s):
    # TODO(synk): fold the nearest upsample into the conv staging / index math
    # instead of materializing it in HBM.
    return jnp.repeat(jnp.repeat(x, s, axis=1), s, axis=2)


def basic_block_dec(x_nchw, params, stride=1):
    """Forward of BasicBlockDec (training-mode BatchNorm).  x: (N, Cin, H, W) f32."""
    n, cin, h, w = x_nchw.shape
    planes = int(cin / stride)
    cp_in = _round_up(cin, LANE)       # lane-padded channels of conv2 output
    cp_out = _round_up(planes, LANE)   # lane-padded channels of conv1 / shortcut
    xh = jnp.transpose(x_nchw, (0, 2, 3, 1)).astype(jnp.float32)   # NHWC

    # --- conv2 (3x3, Cin->Cin, no bias), exact batch stats emitted ----------
    wp2 = w + 2
    tm2, mt2, rpad2 = _choose_tiles(h * wp2)
    rin2 = _round_up(rpad2 + 2 * wp2 + 2, 8)
    x2 = _flat_pad(xh, rin2)
    y2, s2 = _conv3x3(x2, _prep_w(params["conv2_w"], cp_in),
                      jnp.zeros((1, cp_in), jnp.float32),
                      _col_mask(h, w, rpad2), wp2, tm2, mt2)
    sc2, sh2 = _bn_affine(s2, n * h * w,
                          params["bn2_gamma"], params["bn2_beta"])

    # --- bn2 + relu, fused by XLA into the re-staging copy for conv1 --------
    a2 = y2[:, :h * wp2, :cin].reshape(n, h, wp2, cin)[:, :, :w, :]
    a2 = jnp.maximum(a2.astype(jnp.float32) * sc2 + sh2, 0.0)

    # --- conv1 (ResizeConv2d when stride != 1) + bn1 -------------------------
    if stride == 1:
        ho, wo = h, w
        a2_in = a2
        b1 = jnp.zeros((1, cp_out), jnp.float32)
    else:
        ho, wo = h * stride, w * stride
        a2_in = _upsample_nearest(a2, stride)      # nearest, like F.interpolate
        b1 = _pad_vec(params["conv1_b"], cp_out)
    wp1 = wo + 2
    tm1, mt1, rpad1 = _choose_tiles(ho * wp1)
    rin1 = _round_up(rpad1 + 2 * wp1 + 2, 8)
    mask1 = _col_mask(ho, wo, rpad1)
    x1 = _flat_pad(a2_in, rin1)
    y1, s1 = _conv3x3(x1, _prep_w(params["conv1_w"], cp_out), b1, mask1,
                      wp1, tm1, mt1)
    sc1, sh1 = _bn_affine(s1, n * ho * wo,
                          params["bn1_gamma"], params["bn1_beta"])

    # --- shortcut -------------------------------------------------------------
    if stride == 1:
        # identity: reuse the conv2 staging buffer (offset by one padded row+col)
        r = x2
        r_off = wp1 + 1
        scr = jnp.ones((planes,), jnp.float32)
        shr = jnp.zeros((planes,), jnp.float32)
    else:                                           # ResizeConv2d + BatchNorm
        xu = _flat_pad(_upsample_nearest(xh, stride), rin1)
        r, ssc = _conv3x3(xu, _prep_w(params["sc_w"], cp_out),
                          _pad_vec(params["sc_b"], cp_out), mask1,
                          wp1, tm1, mt1)
        scr, shr = _bn_affine(ssc, n * ho * wo,
                              params["sc_gamma"], params["sc_beta"])
        r_off = 0

    # --- fused epilogue: bn1(conv1) + shortcut + relu -------------------------
    out = _epilogue(y1, sc1[None, :], sh1[None, :], r,
                    scr[None, :], shr[None, :], tm1, mt1, r_off, planes)
    out = out[:, :ho * wp1, :].reshape(n, ho, wp1, planes)[:, :, :wo, :]
    return jnp.transpose(out, (0, 3, 1, 2))         # back to NCHW


# ---------------------------------------------------------------------------
# Deterministic parameter init (shapes mirror BasicBlockDec.__init__)
# ---------------------------------------------------------------------------
def init_params(key, in_planes, stride=1):
    planes = int(in_planes / stride)
    k = jax.random.split(key, 10)
    p = {
        "conv2_w": 0.1 * jax.random.normal(k[0], (in_planes, in_planes, 3, 3), jnp.float32),
        "bn2_gamma": 1.0 + 0.1 * jax.random.normal(k[1], (in_planes,), jnp.float32),
        "bn2_beta": 0.1 * jax.random.normal(k[2], (in_planes,), jnp.float32),
        "conv1_w": 0.1 * jax.random.normal(k[3], (planes, in_planes, 3, 3), jnp.float32),
        "bn1_gamma": 1.0 + 0.1 * jax.random.normal(k[4], (planes,), jnp.float32),
        "bn1_beta": 0.1 * jax.random.normal(k[5], (planes,), jnp.float32),
    }
    if stride != 1:  # ResizeConv2d convs carry a bias; shortcut has its own BN
        p["conv1_b"] = 0.1 * jax.random.normal(k[6], (planes,), jnp.float32)
        p["sc_w"] = 0.1 * jax.random.normal(k[7], (planes, in_planes, 3, 3), jnp.float32)
        p["sc_b"] = 0.1 * jax.random.normal(k[8], (planes,), jnp.float32)
        p["sc_gamma"] = 1.0 + 0.1 * jax.random.normal(k[9], (planes,), jnp.float32)
        p["sc_beta"] = jnp.zeros((planes,), jnp.float32)
    return p


# ---------------------------------------------------------------------------
# Pure-JAX f32 reference (mirrors the PyTorch forward, training-mode BN)
# ---------------------------------------------------------------------------
def _ref_conv(x, w, b=None):
    y = lax.conv_general_dilated(x, w, (1, 1), [(1, 1), (1, 1)],
                                 dimension_numbers=("NCHW", "OIHW", "NCHW"))
    if b is not None:
        y = y + b.reshape(1, -1, 1, 1)
    return y


def _ref_bn(x, g, b):
    mean = jnp.mean(x, axis=(0, 2, 3), keepdims=True)
    var = jnp.mean(jnp.square(x - mean), axis=(0, 2, 3), keepdims=True)
    return ((x - mean) * lax.rsqrt(var + EPS) * g.reshape(1, -1, 1, 1)
            + b.reshape(1, -1, 1, 1))


def _ref_up(x, s):
    return jnp.repeat(jnp.repeat(x, s, axis=2), s, axis=3)


def basic_block_dec_ref(x, params, stride=1):
    out = jax.nn.relu(_ref_bn(_ref_conv(x, params["conv2_w"]),
                              params["bn2_gamma"], params["bn2_beta"]))
    if stride == 1:
        out = _ref_bn(_ref_conv(out, params["conv1_w"]),
                      params["bn1_gamma"], params["bn1_beta"])
        sc = x
    else:
        out = _ref_bn(_ref_conv(_ref_up(out, stride), params["conv1_w"],
                                params["conv1_b"]),
                      params["bn1_gamma"], params["bn1_beta"])
        sc = _ref_bn(_ref_conv(_ref_up(x, stride), params["sc_w"], params["sc_b"]),
                     params["sc_gamma"], params["sc_beta"])
    return jax.nn.relu(out + sc)


if __name__ == "__main__":
    key = jax.random.PRNGKey(0)
    kx, kp1, kp2 = jax.random.split(key, 3)

    fwd = jax.jit(basic_block_dec, static_argnames=("stride",))

    # stride = 1 : plain conv1, identity shortcut
    n, c, h, w = 2, 4, 16, 16
    x = jax.random.normal(kx, (n, c, h, w), jnp.float32)
    params1 = init_params(kp1, c, stride=1)
    out1 = jax.block_until_ready(fwd(x, params1, stride=1))
    ref1 = basic_block_dec_ref(x, params1, stride=1)
    assert out1.shape == ref1.shape, (out1.shape, ref1.shape)
    assert jnp.allclose(out1, ref1, atol=5e-2, rtol=5e-2), \
        f"stride=1 mismatch, max|diff|={jnp.max(jnp.abs(out1 - ref1))}"

    # stride = 2 : ResizeConv2d (nearest upsample + conv) in conv1 and shortcut
    params2 = init_params(kp2, c, stride=2)
    out2 = jax.block_until_ready(fwd(x, params2, stride=2))
    ref2 = basic_block_dec_ref(x, params2, stride=2)
    assert out2.shape == ref2.shape, (out2.shape, ref2.shape)
    assert jnp.allclose(out2, ref2, atol=5e-2, rtol=5e-2), \
        f"stride=2 mismatch, max|diff|={jnp.max(jnp.abs(out2 - ref2))}"

    print("KERNEL_OK")
</pallas_src>

<mosaic_0001>
module attributes {stable_mosaic.version = 11 : i64} {
  func.func @_conv3x3_kernel(%arg0: i32, %arg1: i32, %arg2: memref<1x328x4xf32, #tpu.memory_space<vmem>>, %arg3: memref<9x4x128xbf16, #tpu.memory_space<vmem>>, %arg4: memref<1x128xf32, #tpu.memory_space<vmem>>, %arg5: memref<288x1xf32, #tpu.memory_space<vmem>>, %arg6: memref<1x288x128xbf16, #tpu.memory_space<vmem>>, %arg7: memref<1x1x2x128xf32, #tpu.memory_space<vmem>>) attributes {dimension_semantics = [#tpu.dimension_semantics<parallel>, #tpu.dimension_semantics<parallel>], iteration_bounds = array<i64: 2, 1>, scalar_prefetch = 0 : i64, scratch_operands = 0 : i64, tpu.core_type = #tpu.core_type<tc>, window_params = [{transform_indices = @transform_0, window_bounds = array<i64: 1, 328, 4>}, {pipeline_mode = #tpu.pipeline_mode<synchronous>, transform_indices = @transform_1, window_bounds = array<i64: 9, 4, 128>}, {pipeline_mode = #tpu.pipeline_mode<synchronous>, transform_indices = @transform_2, window_bounds = array<i64: 1, 128>}, {transform_indices = @transform_3, window_bounds = array<i64: 288, 1>}, {transform_indices = @transform_4, window_bounds = array<i64: 1, 288, 128>}, {transform_indices = @transform_5, window_bounds = array<i64: 1, 1, 2, 128>}]} {
    %c0 = arith.constant 0 : index
    %c0_0 = arith.constant 0 : index
    %0 = vector.load %arg4[%c0, %c0_0] : memref<1x128xf32, #tpu.memory_space<vmem>>, vector<1x128xf32>
    %1 = vector.shape_cast %0 : vector<1x128xf32> to vector<1x128xf32>
    %2 = vector.broadcast %1 : vector<1x128xf32> to vector<288x128xf32>
    %c0_1 = arith.constant 0 : index
    %c0_2 = arith.constant 0 : index
    %c0_3 = arith.constant 0 : index
    %3 = vector.load %arg2[%c0_1, %c0_2, %c0_3] : memref<1x328x4xf32, #tpu.memory_space<vmem>>, vector<1x288x4xf32>
    %4 = vector.shape_cast %3 : vector<1x288x4xf32> to vector<288x4xf32>
    %5 = arith.truncf %4 : vector<288x4xf32> to vector<288x4xbf16>
    %c0_4 = arith.constant 0 : index
    %c0_5 = arith.constant 0 : index
    %c0_6 = arith.constant 0 : index
    %6 = vector.load %arg3[%c0_4, %c0_5, %c0_6] : memref<9x4x128xbf16, #tpu.memory_space<vmem>>, vector<1x4x128xbf16>
    %7 = vector.shape_cast %6 : vector<1x4x128xbf16> to vector<4x128xbf16>
    %cst = arith.constant dense<0.000000e+00> : vector<288x128xf32>
    %8 = tpu.matmul %5, %7, %cst {dimension_numbers = #tpu.dot_dimension_numbers<[1], [0], [0], [1], [0, 0, 1, 1], [], []>} : vector<288x4xbf16>, vector<4x128xbf16>, vector<288x128xf32> -> vector<288x128xf32>
    %9 = arith.addf %2, %8 : vector<288x128xf32>
    %c0_7 = arith.constant 0 : index
    %c1 = arith.constant 1 : index
    %c0_8 = arith.constant 0 : index
    %10 = vector.load %arg2[%c0_7, %c1, %c0_8] : memref<1x328x4xf32, #tpu.memory_space<vmem>>, vector<1x288x4xf32>
    %11 = vector.shape_cast %10 : vector<1x288x4xf32> to vector<288x4xf32>
    %12 = arith.truncf %11 : vector<288x4xf32> to vector<288x4xbf16>
    %c1_9 = arith.constant 1 : index
    %c0_10 = arith.constant 0 : index
    %c0_11 = arith.constant 0 : index
    %13 = vector.load %arg3[%c1_9, %c0_10, %c0_11] : memref<9x4x128xbf16, #tpu.memory_space<vmem>>, vector<1x4x128xbf16>
    %14 = vector.shape_cast %13 : vector<1x4x128xbf16> to vector<4x128xbf16>
    %cst_12 = arith.constant dense<0.000000e+00> : vector<288x128xf32>
    %15 = tpu.matmul %12, %14, %cst_12 {dimension_numbers = #tpu.dot_dimension_numbers<[1], [0], [0], [1], [0, 0, 1, 1], [], []>} : vector<288x4xbf16>, vector<4x128xbf16>, vector<288x128xf32> -> vector<288x128xf32>
    %16 = arith.addf %9, %15 : vector<288x128xf32>
    %c0_13 = arith.constant 0 : index
    %c2 = arith.constant 2 : index
    %c0_14 = arith.constant 0 : index
    %17 = vector.load %arg2[%c0_13, %c2, %c0_14] : memref<1x328x4xf32, #tpu.memory_space<vmem>>, vector<1x288x4xf32>
    %18 = vector.shape_cast %17 : vector<1x288x4xf32> to vector<288x4xf32>
    %19 = arith.truncf %18 : vector<288x4xf32> to vector<288x4xbf16>
    %c2_15 = arith.constant 2 : index
    %c0_16 = arith.constant 0 : index
    %c0_17 = arith.constant 0 : index
    %20 = vector.load %arg3[%c2_15, %c0_16, %c0_17] : memref<9x4x128xbf16, #tpu.memory_space<vmem>>, vector<1x4x128xbf16>
    %21 = vector.shape_cast %20 : vector<1x4x128xbf16> to vector<4x128xbf16>
    %cst_18 = arith.constant dense<0.000000e+00> : vector<288x128xf32>
    %22 = tpu.matmul %19, %21, %cst_18 {dimension_numbers = #tpu.dot_dimension_numbers<[1], [0], [0], [1], [0, 0, 1, 1], [], []>} : vector<288x4xbf16>, vector<4x128xbf16>, vector<288x128xf32> -> vector<288x128xf32>
    %23 = arith.addf %16, %22 : vector<288x128xf32>
    %c0_19 = arith.constant 0 : index
    %c18 = arith.constant 18 : index
    %c0_20 = arith.constant 0 : index
    %24 = vector.load %arg2[%c0_19, %c18, %c0_20] : memref<1x328x4xf32, #tpu.memory_space<vmem>>, vector<1x288x4xf32>
    %25 = vector.shape_cast %24 : vector<1x288x4xf32> to vector<288x4xf32>
    %26 = arith.truncf %25 : vector<288x4xf32> to vector<288x4xbf16>
    %c3 = arith.constant 3 : index
    %c0_21 = arith.constant 0 : index
    %c0_22 = arith.constant 0 : index
    %27 = vector.load %arg3[%c3, %c0_21, %c0_22] : memref<9x4x128xbf16, #tpu.memory_space<vmem>>, vector<1x4x128xbf16>
    %28 = vector.shape_cast %27 : vector<1x4x128xbf16> to vector<4x128xbf16>
    %cst_23 = arith.constant dense<0.000000e+00> : vector<288x128xf32>
    %29 = tpu.matmul %26, %28, %cst_23 {dimension_numbers = #tpu.dot_dimension_numbers<[1], [0], [0], [1], [0, 0, 1, 1], [], []>} : vector<288x4xbf16>, vector<4x128xbf16>, vector<288x128xf32> -> vector<288x128xf32>
    %30 = arith.addf %23, %29 : vector<288x128xf32>
    %c0_24 = arith.constant 0 : index
    %c19 = arith.constant 19 : index
    %c0_25 = arith.constant 0 : index
    %31 = vector.load %arg2[%c0_24, %c19, %c0_25] : memref<1x328x4xf32, #tpu.memory_space<vmem>>, vector<1x288x4xf32>
    %32 = vector.shape_cast %31 : vector<1x288x4xf32> to vector<288x4xf32>
    %33 = arith.truncf %32 : vector<288x4xf32> to vector<288x4xbf16>
    %c4 = arith.constant 4 : index
    %c0_26 = arith.constant 0 : index
    %c0_27 = arith.constant 0 : index
    %34 = vector.load %arg3[%c4, %c0_26, %c0_27] : memref<9x4x128xbf16, #tpu.memory_space<vmem>>, vector<1x4x128xbf16>
    %35 = vector.shape_cast %34 : vector<1x4x128xbf16> to vector<4x128xbf16>
    %cst_28 = arith.constant dense<0.000000e+00> : vector<288x128xf32>
    %36 = tpu.matmul %33, %35, %cst_28 {dimension_numbers = #tpu.dot_dimension_numbers<[1], [0], [0], [1], [0, 0, 1, 1], [], []>} : vector<288x4xbf16>, vector<4x128xbf16>, vector<288x128xf32> -> vector<288x128xf32>
    %37 = arith.addf %30, %36 : vector<288x128xf32>
    %c0_29 = arith.constant 0 : index
    %c20 = arith.constant 20 : index
    %c0_30 = arith.constant 0 : index
    %38 = vector.load %arg2[%c0_29, %c20, %c0_30] : memref<1x328x4xf32, #tpu.memory_space<vmem>>, vector<1x288x4xf32>
    %39 = vector.shape_cast %38 : vector<1x288x4xf32> to vector<288x4xf32>
    %40 = arith.truncf %39 : vector<288x4xf32> to vector<288x4xbf16>
    %c5 = arith.constant 5 : index
    %c0_31 = arith.constant 0 : index
    %c0_32 = arith.constant 0 : index
    %41 = vector.load %arg3[%c5, %c0_31, %c0_32] : memref<9x4x128xbf16, #tpu.memory_space<vmem>>, vector<1x4x128xbf16>
    %42 = vector.shape_cast %41 : vector<1x4x128xbf16> to vector<4x128xbf16>
    %cst_33 = arith.constant dense<0.000000e+00> : vector<288x128xf32>
    %43 = tpu.matmul %40, %42, %cst_33 {dimension_numbers = #tpu.dot_dimension_numbers<[1], [0], [0], [1], [0, 0, 1, 1], [], []>} : vector<288x4xbf16>, vector<4x128xbf16>, vector<288x128xf32> -> vector<288x128xf32>
    %44 = arith.addf %37, %43 : vector<288x128xf32>
    %c0_34 = arith.constant 0 : index
    %c36 = arith.constant 36 : index
    %c0_35 = arith.constant 0 : index
    %45 = vector.load %arg2[%c0_34, %c36, %c0_35] : memref<1x328x4xf32, #tpu.memory_space<vmem>>, vector<1x288x4xf32>
    %46 = vector.shape_cast %45 : vector<1x288x4xf32> to vector<288x4xf32>
    %47 = arith.truncf %46 : vector<288x4xf32> to vector<288x4xbf16>
    %c6 = arith.constant 6 : index
    %c0_36 = arith.constant 0 : index
    %c0_37 = arith.constant 0 : index
    %48 = vector.load %arg3[%c6, %c0_36, %c0_37] : memref<9x4x128xbf16, #tpu.memory_space<vmem>>, vector<1x4x128xbf16>
    %49 = vector.shape_cast %48 : vector<1x4x128xbf16> to vector<4x128xbf16>
    %cst_38 = arith.constant dense<0.000000e+00> : vector<288x128xf32>
    %50 = tpu.matmul %47, %49, %cst_38 {dimension_numbers = #tpu.dot_dimension_numbers<[1], [0], [0], [1], [0, 0, 1, 1], [], []>} : vector<288x4xbf16>, vector<4x128xbf16>, vector<288x128xf32> -> vector<288x128xf32>
    %51 = arith.addf %44, %50 : vector<288x128xf32>
    %c0_39 = arith.constant 0 : index
    %c37 = arith.constant 37 : index
    %c0_40 = arith.constant 0 : index
    %52 = vector.load %arg2[%c0_39, %c37, %c0_40] : memref<1x328x4xf32, #tpu.memory_space<vmem>>, vector<1x288x4xf32>
    %53 = vector.shape_cast %52 : vector<1x288x4xf32> to vector<288x4xf32>
    %54 = arith.truncf %53 : vector<288x4xf32> to vector<288x4xbf16>
    %c7 = arith.constant 7 : index
    %c0_41 = arith.constant 0 : index
    %c0_42 = arith.constant 0 : index
    %55 = vector.load %arg3[%c7, %c0_41, %c0_42] : memref<9x4x128xbf16, #tpu.memory_space<vmem>>, vector<1x4x128xbf16>
    %56 = vector.shape_cast %55 : vector<1x4x128xbf16> to vector<4x128xbf16>
    %cst_43 = arith.constant dense<0.000000e+00> : vector<288x128xf32>
    %57 = tpu.matmul %54, %56, %cst_43 {dimension_numbers = #tpu.dot_dimension_numbers<[1], [0], [0], [1], [0, 0, 1, 1], [], []>} : vector<288x4xbf16>, vector<4x128xbf16>, vector<288x128xf32> -> vector<288x128xf32>
    %58 = arith.addf %51, %57 : vector<288x128xf32>
    %c0_44 = arith.constant 0 : index
    %c38 = arith.constant 38 : index
    %c0_45 = arith.constant 0 : index
    %59 = vector.load %arg2[%c0_44, %c38, %c0_45] : memref<1x328x4xf32, #tpu.memory_space<vmem>>, vector<1x288x4xf32>
    %60 = vector.shape_cast %59 : vector<1x288x4xf32> to vector<288x4xf32>
    %61 = arith.truncf %60 : vector<288x4xf32> to vector<288x4xbf16>
    %c8 = arith.constant 8 : index
    %c0_46 = arith.constant 0 : index
    %c0_47 = arith.constant 0 : index
    %62 = vector.load %arg3[%c8, %c0_46, %c0_47] : memref<9x4x128xbf16, #tpu.memory_space<vmem>>, vector<1x4x128xbf16>
    %63 = vector.shape_cast %62 : vector<1x4x128xbf16> to vector<4x128xbf16>
    %cst_48 = arith.constant dense<0.000000e+00> : vector<288x128xf32>
    %64 = tpu.matmul %61, %63, %cst_48 {dimension_numbers = #tpu.dot_dimension_numbers<[1], [0], [0], [1], [0, 0, 1, 1], [], []>} : vector<288x4xbf16>, vector<4x128xbf16>, vector<288x128xf32> -> vector<288x128xf32>
    %65 = arith.addf %58, %64 : vector<288x128xf32>
    %66 = arith.truncf %65 : vector<288x128xf32> to vector<288x128xbf16>
    %c0_49 = arith.constant 0 : index
    %c0_50 = arith.constant 0 : index
    %c0_51 = arith.constant 0 : index
    %67 = vector.load %arg6[%c0_49, %c0_50, %c0_51] : memref<1x288x128xbf16, #tpu.memory_space<vmem>>, vector<1x288x128xbf16>
    %68 = vector.shape_cast %67 : vector<1x288x128xbf16> to vector<288x128xbf16>
    %69 = vector.shape_cast %66 : vector<288x128xbf16> to vector<1x288x128xbf16>
    tpu.vector_store %arg6[%c0_49, %c0_50, %c0_51], %69 {strides = array<i32>} : memref<1x288x128xbf16, #tpu.memory_space<vmem>>, vector<1x288x128xbf16>,
    %c0_52 = arith.constant 0 : index
    %c0_53 = arith.constant 0 : index
    %70 = vector.load %arg5[%c0_52, %c0_53] : memref<288x1xf32, #tpu.memory_space<vmem>>, vector<288x1xf32>
    %71 = vector.broadcast %70 : vector<288x1xf32> to vector<288x128xf32>
    %72 = arith.mulf %65, %71 : vector<288x128xf32>
    %cst_54 = arith.constant dense<0.000000e+00> : vector<128xf32>
    %73 = vector.multi_reduction <add>, %72, %cst_54 [0] : vector<288x128xf32> to vector<128xf32>
    %74 = vector.shape_cast %73 : vector<128xf32> to vector<1x128xf32>
    %c0_55 = arith.constant 0 : index
    %c0_56 = arith.constant 0 : index
    %c0_57 = arith.constant 0 : index
    %c0_58 = arith.constant 0 : index
    %75 = vector.load %arg7[%c0_55, %c0_56, %c0_57, %c0_58] : memref<1x1x2x128xf32, #tpu.memory_space<vmem>>, vector<1x1x1x128xf32>
    %76 = vector.shape_cast %75 : vector<1x1x1x128xf32> to vector<1x128xf32>
    %77 = vector.shape_cast %74 : vector<1x128xf32> to vector<1x1x1x128xf32>
    tpu.vector_store %arg7[%c0_55, %c0_56, %c0_57, %c0_58], %77 {strides = array<i32>} : memref<1x1x2x128xf32, #tpu.memory_space<vmem>>, vector<1x1x1x128xf32>,
    %78 = arith.mulf %72, %72 : vector<288x128xf32>
    %cst_59 = arith.constant dense<0.000000e+00> : vector<128xf32>
    %79 = vector.multi_reduction <add>, %78, %cst_59 [0] : vector<288x128xf32> to vector<128xf32>
    %80 = vector.shape_cast %79 : vector<128xf32> to vector<1x128xf32>
    %c0_60 = arith.constant 0 : index
    %c0_61 = arith.constant 0 : index
    %c1_62 = arith.constant 1 : index
    %c0_63 = arith.constant 0 : index
    %81 = vector.load %arg7[%c0_60, %c0_61, %c1_62, %c0_63] : memref<1x1x2x128xf32, #tpu.memory_space<vmem>>, vector<1x1x1x128xf32>
    %82 = vector.shape_cast %81 : vector<1x1x1x128xf32> to vector<1x128xf32>
    %83 = vector.shape_cast %80 : vector<1x128xf32> to vector<1x1x1x128xf32>
    tpu.vector_store %arg7[%c0_60, %c0_61, %c1_62, %c0_63], %83 {strides = array<i32>} : memref<1x1x2x128xf32, #tpu.memory_space<vmem>>, vector<1x1x1x128xf32>,
    return
  }
  func.func @transform_0(%arg0: i32, %arg1: i32) -> (i32, i32, i32) {
    %c0_i32 = arith.constant 0 : i32
    %c0_i32_0 = arith.constant 0 : i32
    %c0_i32_1 = arith.constant 0 : i32
    return %arg0, %c0_i32, %c0_i32_0 : i32, i32, i32
  }
  func.func @transform_1(%arg0: i32, %arg1: i32) -> (i32, i32, i32) {
    %c0_i32 = arith.constant 0 : i32
    %c0_i32_0 = arith.constant 0 : i32
    %c0_i32_1 = arith.constant 0 : i32
    %c0_i32_2 = arith.constant 0 : i32
    return %c0_i32, %c0_i32_0, %c0_i32_1 : i32, i32, i32
  }
  func.func @transform_2(%arg0: i32, %arg1: i32) -> (i32, i32) {
    %c0_i32 = arith.constant 0 : i32
    %c0_i32_0 = arith.constant 0 : i32
    %c0_i32_1 = arith.constant 0 : i32
    return %c0_i32, %c0_i32_0 : i32, i32
  }
  func.func @transform_3(%arg0: i32, %arg1: i32) -> (i32, i32) {
    %c0_i32 = arith.constant 0 : i32
    %c0_i32_0 = arith.constant 0 : i32
    return %arg1, %c0_i32 : i32, i32
  }
  func.func @transform_4(%arg0: i32, %arg1: i32) -> (i32, i32, i32) {
    %c0_i32 = arith.constant 0 : i32
    %c0_i32_0 = arith.constant 0 : i32
    return %arg0, %arg1, %c0_i32 : i32, i32, i32
  }
  func.func @transform_5(%arg0: i32, %arg1: i32) -> (i32, i32, i32, i32) {
    %c0_i32 = arith.constant 0 : i32
    %c0_i32_0 = arith.constant 0 : i32
    %c0_i32_1 = arith.constant 0 : i32
    return %arg0, %arg1, %c0_i32, %c0_i32_0 : i32, i32, i32, i32
  }
}

module attributes {stable_mosaic.version = 11 : i64} {
  func.func @_epilogue_kernel(%arg0: i32, %arg1: i32, %arg2: memref<1x288x128xbf16, #tpu.memory_space<vmem>>, %arg3: memref<1x4xf32, #tpu.memory_space<vmem>>, %arg4: memref<1x4xf32, #tpu.memory_space<vmem>>, %arg5: memref<1x328x4xf32, #tpu.memory_space<vmem>>, %arg6: memref<1x4xf32, #tpu.memory_space<vmem>>, %arg7: memref<1x4xf32, #tpu.memory_space<vmem>>, %arg8: memref<1x288x4xf32, #tpu.memory_space<vmem>>) attributes {dimension_semantics = [#tpu.dimension_semantics<parallel>, #tpu.dimension_semantics<parallel>], iteration_bounds = array<i64: 2, 1>, scalar_prefetch = 0 : i64, scratch_operands = 0 : i64, tpu.core_type = #tpu.core_type<tc>, window_params = [{transform_indices = @transform_0, window_bounds = array<i64: 1, 288, 128>}, {pipeline_mode = #tpu.pipeline_mode<synchronous>, transform_indices = @transform_1, window_bounds = array<i64: 1, 4>}, {pipeline_mode = #tpu.pipeline_mode<synchronous>, transform_indices = @transform_2, window_bounds = array<i64: 1, 4>}, {transform_indices = @transform_3, window_bounds = array<i64: 1, 328, 4>}, {pipeline_mode = #tpu.pipeline_mode<synchronous>, transform_indices = @transform_4, window_bounds = array<i64: 1, 4>}, {pipeline_mode = #tpu.pipeline_mode<synchronous>, transform_indices = @transform_5, window_bounds = array<i64: 1, 4>}, {transform_indices = @transform_6, window_bounds = array<i64: 1, 288, 4>}]} {
    %c0 = arith.constant 0 : index
    %c0_0 = arith.constant 0 : index
    %c0_1 = arith.constant 0 : index
    %0 = vector.load %arg2[%c0, %c0_0, %c0_1] : memref<1x288x128xbf16, #tpu.memory_space<vmem>>, vector<1x288x4xbf16>
    %1 = vector.shape_cast %0 : vector<1x288x4xbf16> to vector<288x4xbf16>
    %2 = arith.extf %1 : vector<288x4xbf16> to vector<288x4xf32>
    %c0_2 = arith.constant 0 : index
    %c0_3 = arith.constant 0 : index
    %3 = vector.load %arg3[%c0_2, %c0_3] : memref<1x4xf32, #tpu.memory_space<vmem>>, vector<1x4xf32>
    %4 = vector.broadcast %3 : vector<1x4xf32> to vector<288x4xf32>
    %5 = arith.mulf %2, %4 : vector<288x4xf32>
    %c0_4 = arith.constant 0 : index
    %c0_5 = arith.constant 0 : index
    %6 = vector.load %arg4[%c0_4, %c0_5] : memref<1x4xf32, #tpu.memory_space<vmem>>, vector<1x4xf32>
    %7 = vector.broadcast %6 : vector<1x4xf32> to vector<288x4xf32>
    %8 = arith.addf %5, %7 : vector<288x4xf32>
    %c0_6 = arith.constant 0 : index
    %c19 = arith.constant 19 : index
    %c0_7 = arith.constant 0 : index
    %9 = vector.load %arg5[%c0_6, %c19, %c0_7] : memref<1x328x4xf32, #tpu.memory_space<vmem>>, vector<1x288x4xf32>
    %10 = vector.shape_cast %9 : vector<1x288x4xf32> to vector<288x4xf32>
    %c0_8 = arith.constant 0 : index
    %c0_9 = arith.constant 0 : index
    %11 = vector.load %arg6[%c0_8, %c0_9] : memref<1x4xf32, #tpu.memory_space<vmem>>, vector<1x4xf32>
    %12 = vector.broadcast %11 : vector<1x4xf32> to vector<288x4xf32>
    %13 = arith.mulf %10, %12 : vector<288x4xf32>
    %c0_10 = arith.constant 0 : index
    %c0_11 = arith.constant 0 : index
    %14 = vector.load %arg7[%c0_10, %c0_11] : memref<1x4xf32, #tpu.memory_space<vmem>>, vector<1x4xf32>
    %15 = vector.broadcast %14 : vector<1x4xf32> to vector<288x4xf32>
    %16 = arith.addf %13, %15 : vector<288x4xf32>
    %17 = arith.addf %8, %16 : vector<288x4xf32>
    %cst = arith.constant 0.000000e+00 : f32
    %18 = vector.broadcast %cst : f32 to vector<288x4xf32>
    %19 = arith.maximumf %17, %18 : vector<288x4xf32>
    %c0_12 = arith.constant 0 : index
    %c0_13 = arith.constant 0 : index
    %c0_14 = arith.constant 0 : index
    %20 = vector.load %arg8[%c0_12, %c0_13, %c0_14] : memref<1x288x4xf32, #tpu.memory_space<vmem>>, vector<1x288x4xf32>
    %21 = vector.shape_cast %20 : vector<1x288x4xf32> to vector<288x4xf32>
    %22 = vector.shape_cast %19 : vector<288x4xf32> to vector<1x288x4xf32>
    tpu.vector_store %arg8[%c0_12, %c0_13, %c0_14], %22 {strides = array<i32>} : memref<1x288x4xf32, #tpu.memory_space<vmem>>, vector<1x288x4xf32>,
    return
  }
  func.func @transform_0(%arg0: i32, %arg1: i32) -> (i32, i32, i32) {
    %c0_i32 = arith.constant 0 : i32
    %c0_i32_0 = arith.constant 0 : i32
    return %arg0, %arg1, %c0_i32 : i32, i32, i32
  }
  func.func @transform_1(%arg0: i32, %arg1: i32) -> (i32, i32) {
    %c0_i32 = arith.constant 0 : i32
    %c0_i32_0 = arith.constant 0 : i32
    %c0_i32_1 = arith.constant 0 : i32
    return %c0_i32, %c0_i32_0 : i32, i32
  }
  func.func @transform_2(%arg0: i32, %arg1: i32) -> (i32, i32) {
    %c0_i32 = arith.constant 0 : i32
    %c0_i32_0 = arith.constant 0 : i32
    %c0_i32_1 = arith.constant 0 : i32
    return %c0_i32, %c0_i32_0 : i32, i32
  }
  func.func @transform_3(%arg0: i32, %arg1: i32) -> (i32, i32, i32) {
    %c0_i32 = arith.constant 0 : i32
    %c0_i32_0 = arith.constant 0 : i32
    %c0_i32_1 = arith.constant 0 : i32
    return %arg0, %c0_i32, %c0_i32_0 : i32, i32, i32
  }
  func.func @transform_4(%arg0: i32, %arg1: i32) -> (i32, i32) {
    %c0_i32 = arith.constant 0 : i32
    %c0_i32_0 = arith.constant 0 : i32
    %c0_i32_1 = arith.constant 0 : i32
    return %c0_i32, %c0_i32_0 : i32, i32
  }
  func.func @transform_5(%arg0: i32, %arg1: i32) -> (i32, i32) {
    %c0_i32 = arith.constant 0 : i32
    %c0_i32_0 = arith.constant 0 : i32
    %c0_i32_1 = arith.constant 0 : i32
    return %c0_i32, %c0_i32_0 : i32, i32
  }
  func.func @transform_6(%arg0: i32, %arg1: i32) -> (i32, i32, i32) {
    %c0_i32 = arith.constant 0 : i32
    %c0_i32_0 = arith.constant 0 : i32
    return %arg0, %arg1, %c0_i32 : i32, i32, i32
  }
}

</mosaic_0001>

<llo_original>
// kernel: basic_block_dec.5
$region0: #{basic_block_dec.5}
  #allocation0 [shape = 'u32[]', space=smem, size = 0x4, offset = 0x4, fixed_abs, tag = 'smem constant byte address 0x4 - core index']
  #allocation1 [shape = 'u32[144,128]{1,0:T(1,128)}', space=vmem, size = 0x12000, scoped, tag = 'internal scratch']
  %s0 = inlined_call_operand.vmem [shape: bf16[2,288,128], index: 0, kind: input, shape index: {}]
  %s1 = inlined_call_operand.vmem [shape: f32[1,4], index: 1, kind: input, shape index: {}]
  %s2 = inlined_call_operand.vmem [shape: f32[1,4], index: 2, kind: input, shape index: {}]
  %s3 = inlined_call_operand.vmem [shape: f32[2,328,4], index: 3, kind: input, shape index: {}]
  %s4 = inlined_call_operand.vmem [shape: f32[1,4], index: 4, kind: input, shape index: {}]
  %s5 = inlined_call_operand.vmem [shape: f32[1,4], index: 5, kind: input, shape index: {}]
  %s6 = inlined_call_operand.vmem [shape: f32[2,288,4], index: 6, kind: output, shape index: {}]
  %s7 = sld [smem:[#allocation0]]
  $region57: #{basic_block_dec.5} parent=0
    _
  %s9 = ssub.s32 1, %s7
  %s10 = scalar_select 0, %s9, %s7
  loop: start=0, step=1, limit=4
  $region2: #{basic_block_dec.5} parent=0 // loop_pre_header
    _
  $region3: #{basic_block_dec.5} parent=0 // loop_header
    %s12 = sphi 0, %s16
    %p13 = scmp.ge.s32.totalorder %s12, 4
    %s19 = sphi 0, %s31
    %s20 = sphi 0, %s27
    %s21 = sphi 0, %s19
    %s22 = sphi 0, %s20
    %s23 = sphi 0, %s21
    %s24 = sphi 0, %s22
    %s36 = sphi 0, %s38
    %s39 = sphi 0, %s36
    %s40 = sphi 0, %s39
    %s56 = sphi 0, %s40
    %s60 = sphi 0, %s60
    %s62 = sphi 0, %s60
    %s63 = sphi 0, %s62
    %s77 = sphi 0, %s63
    %s81 = sphi 0, %s81
    %s83 = sphi 0, %s81
    %s84 = sphi 0, %s83
    %s98 = sphi 0, %s84
    %s104 = sphi 0, %s106
    %s107 = sphi 0, %s104
    %s108 = sphi 0, %s107
    %s124 = sphi 0, %s108
    %s128 = sphi 0, %s128
    %s130 = sphi 0, %s128
    %s131 = sphi 0, %s130
    %s145 = sphi 0, %s131
    %s149 = sphi 0, %s149
    %s151 = sphi 0, %s149
    %s152 = sphi 0, %s151
    %s166 = sphi 0, %s152
    %s174 = sphi 0, %s176
    %s177 = sphi 0, %s174
    %s178 = sphi 0, %s177
    %s194 = sphi 0, %s178
  $region4: #{basic_block_dec.5} parent=0 // loop_header_branch
    %15 = sbr.rel (%p13) target = $region8
  $region5: #{basic_block_dec.5} parent=0 // loop_body
    %s17 = ssub.s32 %s12, 1
    %s18 = ssub.s32 %s12, 2
    %s25 = sadd.s32 1, %s20
    %p26 = scmp.ge.s32.totalorder %s25, 1
    %s27 = scalar_select %p26, 0, %s25
    %s28 = sadd.s32 1, %s19
    %s29 = scalar_select %p26, %s28, %s19
    %p30 = scmp.ge.s32.totalorder %s29, 2
    %s31 = scalar_select %p30, 0, %s29
    %s32 = ssub.s32 %s19, %s31
    %s33 = ssub.s32 %s20, %s27
    %s34 = sor.u32 %s32, %s33
    %p35 = scmp.eq.s32.totalorder %s34, 0
    %s37 = sadd.s32 %s36, 1
    %s38 = scalar_select %p35, %s36, %s37
    %p41 = pneg %p35
    %p42 = scmp.eq.s32.totalorder %s12, 1
    %p43 = por %p41, %p42
    %p44 = scmp.ne.s32.totalorder %s36, %s39
    %p45 = scmp.eq.s32.totalorder %s12, 0
    %p46 = por %p44, %p45
    %p47 = scmp.ne.s32.totalorder %s36, %s39
    %p48 = scmp.eq.s32.totalorder %s17, 1
    %p49 = por %p47, %p48
    %p50 = scmp.ne.s32.totalorder %s39, %s40
    %p51 = scmp.eq.s32.totalorder %s17, 0
    %p52 = por %p50, %p51
    %p53 = scmp.ne.s32.totalorder %s39, %s40
    %p54 = scmp.eq.s32.totalorder %s18, 1
    %p55 = por %p53, %p54
    %p57 = scmp.ne.s32.totalorder %s40, %s56
    %p58 = scmp.eq.s32.totalorder %s18, 0
    %p59 = por %p57, %p58
    %s61 = sadd.s32 %s60, 1
    %p64 = scmp.eq.s32.totalorder %s12, 1
    %p65 = scmp.ne.s32.totalorder %s60, %s62
    %p66 = scmp.eq.s32.totalorder %s12, 0
    %p67 = por %p65, %p66
    %p68 = scmp.ne.s32.totalorder %s60, %s62
    %p69 = scmp.eq.s32.totalorder %s17, 1
    %p70 = por %p68, %p69
    %p71 = scmp.ne.s32.totalorder %s62, %s63
    %p72 = scmp.eq.s32.totalorder %s17, 0
    %p73 = por %p71, %p72
    %p74 = scmp.ne.s32.totalorder %s62, %s63
    %p75 = scmp.eq.s32.totalorder %s18, 1
    %p76 = por %p74, %p75
    %p78 = scmp.ne.s32.totalorder %s63, %s77
    %p79 = scmp.eq.s32.totalorder %s18, 0
    %p80 = por %p78, %p79
    %s82 = sadd.s32 %s81, 1
    %p85 = scmp.eq.s32.totalorder %s12, 1
    %p86 = scmp.ne.s32.totalorder %s81, %s83
    %p87 = scmp.eq.s32.totalorder %s12, 0
    %p88 = por %p86, %p87
    %p89 = scmp.ne.s32.totalorder %s81, %s83
    %p90 = scmp.eq.s32.totalorder %s17, 1
    %p91 = por %p89, %p90
    %p92 = scmp.ne.s32.totalorder %s83, %s84
    %p93 = scmp.eq.s32.totalorder %s17, 0
    %p94 = por %p92, %p93
    %p95 = scmp.ne.s32.totalorder %s83, %s84
    %p96 = scmp.eq.s32.totalorder %s18, 1
    %p97 = por %p95, %p96
    %p99 = scmp.ne.s32.totalorder %s84, %s98
    %p100 = scmp.eq.s32.totalorder %s18, 0
    %p101 = por %p99, %p100
    %s102 = ssub.s32 %s19, %s31
    %p103 = scmp.eq.s32.totalorder %s102, 0
    %s105 = sadd.s32 %s104, 1
    %s106 = scalar_select %p103, %s104, %s105
    %p109 = pneg %p103
    %p110 = scmp.eq.s32.totalorder %s12, 1
    %p111 = por %p109, %p110
    %p112 = scmp.ne.s32.totalorder %s104, %s107
    %p113 = scmp.eq.s32.totalorder %s12, 0
    %p114 = por %p112, %p113
    %p115 = scmp.ne.s32.totalorder %s104, %s107
    %p116 = scmp.eq.s32.totalorder %s17, 1
    %p117 = por %p115, %p116
    %p118 = scmp.ne.s32.totalorder %s107, %s108
    %p119 = scmp.eq.s32.totalorder %s17, 0
    %p120 = por %p118, %p119
    %p121 = scmp.ne.s32.totalorder %s107, %s108
    %p122 = scmp.eq.s32.totalorder %s18, 1
    %p123 = por %p121, %p122
    %p125 = scmp.ne.s32.totalorder %s108, %s124
    %p126 = scmp.eq.s32.totalorder %s18, 0
    %p127 = por %p125, %p126
    %s129 = sadd.s32 %s128, 1
    %p132 = scmp.eq.s32.totalorder %s12, 1
    %p133 = scmp.ne.s32.totalorder %s128, %s130
    %p134 = scmp.eq.s32.totalorder %s12, 0
    %p135 = por %p133, %p134
    %p136 = scmp.ne.s32.totalorder %s128, %s130
    %p137 = scmp.eq.s32.totalorder %s17, 1
    %p138 = por %p136, %p137
    %p139 = scmp.ne.s32.totalorder %s130, %s131
    %p140 = scmp.eq.s32.totalorder %s17, 0
    %p141 = por %p139, %p140
    %p142 = scmp.ne.s32.totalorder %s130, %s131
    %p143 = scmp.eq.s32.totalorder %s18, 1
    %p144 = por %p142, %p143
    %p146 = scmp.ne.s32.totalorder %s131, %s145
    %p147 = scmp.eq.s32.totalorder %s18, 0
    %p148 = por %p146, %p147
    %s150 = sadd.s32 %s149, 1
    %p153 = scmp.eq.s32.totalorder %s12, 1
    %p154 = scmp.ne.s32.totalorder %s149, %s151
    %p155 = scmp.eq.s32.totalorder %s12, 0
    %p156 = por %p154, %p155
    %p157 = scmp.ne.s32.totalorder %s149, %s151
    %p158 = scmp.eq.s32.totalorder %s17, 1
    %p159 = por %p157, %p158
    %p160 = scmp.ne.s32.totalorder %s151, %s152
    %p161 = scmp.eq.s32.totalorder %s17, 0
    %p162 = por %p160, %p161
    %p163 = scmp.ne.s32.totalorder %s151, %s152
    %p164 = scmp.eq.s32.totalorder %s18, 1
    %p165 = por %p163, %p164
    %p167 = scmp.ne.s32.totalorder %s152, %s166
    %p168 = scmp.eq.s32.totalorder %s18, 0
    %p169 = por %p167, %p168
    %s170 = ssub.s32 %s19, %s31
    %s171 = ssub.s32 %s20, %s27
    %s172 = sor.u32 %s170, %s171
    %p173 = scmp.eq.s32.totalorder %s172, 0
    %s175 = sadd.s32 %s174, 1
    %s176 = scalar_select %p173, %s174, %s175
    %p179 = pneg %p173
    %p180 = scmp.eq.s32.totalorder %s12, 1
    %p181 = por %p179, %p180
    %p182 = scmp.ne.s32.totalorder %s174, %s177
    %p183 = scmp.eq.s32.totalorder %s12, 0
    %p184 = por %p182, %p183
    %p185 = scmp.ne.s32.totalorder %s174, %s177
    %p186 = scmp.eq.s32.totalorder %s17, 1
    %p187 = por %p185, %p186
    %p188 = scmp.ne.s32.totalorder %s177, %s178
    %p189 = scmp.eq.s32.totalorder %s17, 0
    %p190 = por %p188, %p189
    %p191 = scmp.ne.s32.totalorder %s177, %s178
    %p192 = scmp.eq.s32.totalorder %s18, 1
    %p193 = por %p191, %p192
    %p195 = scmp.ne.s32.totalorder %s178, %s194
    %p196 = scmp.eq.s32.totalorder %s18, 0
    %p197 = por %p195, %p196
    %p198 = scmp.le.s32.totalorder 1, %s12
    %p199 = scmp.lt.s32.totalorder %s12, 3
    %p200 = pnand %p198, %p199
    %p201 = pneg %p200
    // Predicated region
    $region9: #{basic_block_dec.5} parent=5 // pred_check
      _
    $region10: #{basic_block_dec.5} parent=5 // pred_check_branch
      %203 = sbr.rel (%p200) target = $region12
    $region11: #{basic_block_dec.5} parent=5 // pred_region
      %s204 = ssub.s32 %s12, 1
      // Predicated region
      $region13: #{basic_block_dec.5} parent=11 // pred_check
        %p205 = pneg %p73
      $region14: #{basic_block_dec.5} parent=11 // pred_check_branch
        %207 = sbr.rel (%p205) target = $region16
      $region15: #{basic_block_dec.5} parent=11 // pred_region
        _
      $region16: #{basic_block_dec.5} parent=11 // pred_fallthru
        _
      // Predicated region
      $region17: #{basic_block_dec.5} parent=11 // pred_check
        %p208 = pneg %p94
      $region18: #{basic_block_dec.5} parent=11 // pred_check_branch
        %210 = sbr.rel (%p208) target = $region20
      $region19: #{basic_block_dec.5} parent=11 // pred_region
        _
      $region20: #{basic_block_dec.5} parent=11 // pred_fallthru
        _
      // Predicated region
      $region21: #{basic_block_dec.5} parent=11 // pred_check
        %p211 = pneg %p141
      $region22: #{basic_block_dec.5} parent=11 // pred_check_branch
        %213 = sbr.rel (%p211) target = $region24
      $region23: #{basic_block_dec.5} parent=11 // pred_region
        _
      $region24: #{basic_block_dec.5} parent=11 // pred_fallthru
        _
      // Predicated region
      $region25: #{basic_block_dec.5} parent=11 // pred_check
        %p214 = pneg %p162
      $region26: #{basic_block_dec.5} parent=11 // pred_check_branch
        %216 = sbr.rel (%p214) target = $region28
      $region27: #{basic_block_dec.5} parent=11 // pred_region
        _
      $region28: #{basic_block_dec.5} parent=11 // pred_fallthru
        _
    $region12: #{basic_block_dec.5} parent=5 // pred_fallthru
      _
    %p217 = scmp.lt.s32.totalorder %s12, 2
    // Predicated region
    $region29: #{basic_block_dec.5} parent=5 // pred_check
      %p218 = pneg %p217
    $region30: #{basic_block_dec.5} parent=5 // pred_check_branch
      %220 = sbr.rel (%p218) target = $region32
    $region31: #{basic_block_dec.5} parent=5 // pred_region
      // Predicated region
      $region33: #{basic_block_dec.5} parent=31 // pred_check
        %p221 = pneg %p46
      $region34: #{basic_block_dec.5} parent=31 // pred_check_branch
        %223 = sbr.rel (%p221) target = $region36
      $region35: #{basic_block_dec.5} parent=31 // pred_region
        %s224 = smul.u32 36, %s20
        %p225 = scmp.lt.s32.totalorder %s19, 1
        %s226 = scalar_select %p225, %s19, 1
        %p227 = scmp.lt.s32.totalorder %s224, 35
        %s228 = scalar_select %p227, %s224, 35
        %s229 = smul.addr %s226, 36
        %s230 = sadd.s32 %s228, %s229
        %s231 = smul.addr %s230, 4
        %s232 = scalar_lea.vmem %s0, %s231
        %s233 = smul.u32 36, %s20
      $region36: #{basic_block_dec.5} parent=31 // pred_fallthru
        _
      // Predicated region
      $region37: #{basic_block_dec.5} parent=31 // pred_check
        %p234 = pneg %p114
      $region38: #{basic_block_dec.5} parent=31 // pred_check_branch
        %236 = sbr.rel (%p234) target = $region40
      $region39: #{basic_block_dec.5} parent=31 // pred_region
        %p237 = scmp.lt.s32.totalorder %s19, 1
        %s238 = scalar_select %p237, %s19, 1
        %s239 = smul.addr %s238, 41
        %s240 = smul.addr %s239, 8
        %s241 = scalar_lea.vmem %s3, %s240
      $region40: #{basic_block_dec.5} parent=31 // pred_fallthru
        _
    $region32: #{basic_block_dec.5} parent=5 // pred_fallthru
      _
    %p242 = scmp.le.s32.totalorder 1, %s12
    %p243 = scmp.lt.s32.totalorder %s12, 3
    %p244 = pnand %p242, %p243
    %p245 = pneg %p244
    // Predicated region
    $region41: #{basic_block_dec.5} parent=5 // pred_check
      _
    $region42: #{basic_block_dec.5} parent=5 // pred_check_branch
      %247 = sbr.rel (%p244) target = $region44
    $region43: #{basic_block_dec.5} parent=5 // pred_region
      %s248 = ssub.s32 %s12, 1
      %s249 = smul.u32 36, %s22
      %p250 = scmp.lt.s32.totalorder %s21, 1
      %s251 = scalar_select %p250, %s21, 1
      %p252 = scmp.lt.s32.totalorder %s249, 35
      %s253 = scalar_select %p252, %s249, 35
      %s254 = smul.addr %s251, 36
      %s255 = sadd.s32 %s253, %s254
      %s256 = smul.addr %s255, 4
      %s257 = scalar_lea.vmem %s0, %s256
      %p258 = pneg %p52
      %p259 = pneg %p49
      %p260 = pneg %p73
      %p261 = pneg %p70
      %p262 = pneg %p94
      %p263 = pneg %p91
      %p264 = scmp.lt.s32.totalorder %s21, 1
      %s265 = scalar_select %p264, %s21, 1
      %s266 = smul.addr %s265, 41
      %s267 = smul.addr %s266, 8
      %s268 = scalar_lea.vmem %s3, %s267
      %p269 = pneg %p120
      %p270 = pneg %p117
      %p271 = pneg %p141
      %p272 = pneg %p138
      %p273 = pneg %p162
      %p274 = pneg %p159
      %p275 = pneg %p190
      %p276 = pneg %p187
      %s277 = smul.u32 36, %s22
      %p278 = scmp.lt.s32.totalorder %s21, 1
      %s279 = scalar_select %p278, %s21, 1
      %p280 = scmp.lt.s32.totalorder %s277, 35
      %s281 = scalar_select %p280, %s277, 35
      %s282 = smul.addr %s279, 36
      %s283 = sadd.s32 %s281, %s282
      %s284 = smul.addr %s283, 8
      %s285 = scalar_lea.vmem %s6, %s284
      %s286 = smul.u32 36, %s22
      %p287 = scmp.lt.s32.totalorder %s21, 1
      %s288 = scalar_select %p287, %s21, 1
      %p289 = scmp.lt.s32.totalorder %s286, 35
      %s290 = scalar_select %p289, %s286, 35
      %s291 = smul.addr %s288, 36
      %s292 = sadd.s32 %s290, %s291
      %s293 = smul.addr %s292, 4
      %s294 = scalar_lea.vmem %s0, %s293
      %s295 = smul.u32 36, %s22
      %p296 = scmp.lt.s32.totalorder %s21, 1
      %s297 = scalar_select %p296, %s21, 1
      %s298 = smul.addr %s297, 41
      %s299 = smul.addr %s298, 8
      %s300 = scalar_lea.vmem %s3, %s299
      %s301 = smul.u32 36, %s22
      %p302 = scmp.lt.s32.totalorder %s21, 1
      %s303 = scalar_select %p302, %s21, 1
      %p304 = scmp.lt.s32.totalorder %s301, 35
      %s305 = scalar_select %p304, %s301, 35
      %s306 = smul.addr %s303, 36
      %s307 = sadd.s32 %s305, %s306
      %s308 = smul.addr %s307, 8
      %s309 = scalar_lea.vmem %s6, %s308
      %s310 = smul.u32 36, %s22
      %v311 = vld [vmem:[%s294] sm:$0xf]
      %v312 = vld [vmem:[%s294 + $0x4] sm:$0xf]
      %v313 = vld [vmem:[%s294 + $0x8] sm:$0xf]
      %v314 = vld [vmem:[%s294 + $0xc] sm:$0xf]
      %v315 = vld [vmem:[%s294 + $0x10] sm:$0xf]
      %v316 = vld [vmem:[%s294 + $0x14] sm:$0xf]
      %v317 = vld [vmem:[%s294 + $0x18] sm:$0xf]
      %v318 = vld [vmem:[%s294 + $0x1c] sm:$0xf]
      %v319 = vld [vmem:[%s294 + $0x20] sm:$0xf]
      %v320 = vld [vmem:[%s294 + $0x24] sm:$0xf]
      %v321 = vld [vmem:[%s294 + $0x28] sm:$0xf]
      %v322 = vld [vmem:[%s294 + $0x2c] sm:$0xf]
      %v323 = vld [vmem:[%s294 + $0x30] sm:$0xf]
      %v324 = vld [vmem:[%s294 + $0x34] sm:$0xf]
      %v325 = vld [vmem:[%s294 + $0x38] sm:$0xf]
      %v326 = vld [vmem:[%s294 + $0x3c] sm:$0xf]
      %v327 = vld [vmem:[%s294 + $0x40] sm:$0xf]
      %v328 = vld [vmem:[%s294 + $0x44] sm:$0xf]
      %v329 = vld [vmem:[%s294 + $0x48] sm:$0xf]
      %v330 = vld [vmem:[%s294 + $0x4c] sm:$0xf]
      %v331 = vld [vmem:[%s294 + $0x50] sm:$0xf]
      %v332 = vld [vmem:[%s294 + $0x54] sm:$0xf]
      %v333 = vld [vmem:[%s294 + $0x58] sm:$0xf]
      %v334 = vld [vmem:[%s294 + $0x5c] sm:$0xf]
      %v335 = vld [vmem:[%s294 + $0x60] sm:$0xf]
      %v336 = vld [vmem:[%s294 + $0x64] sm:$0xf]
      %v337 = vld [vmem:[%s294 + $0x68] sm:$0xf]
      %v338 = vld [vmem:[%s294 + $0x6c] sm:$0xf]
      %v339 = vld [vmem:[%s294 + $0x70] sm:$0xf]
      %v340 = vld [vmem:[%s294 + $0x74] sm:$0xf]
      %v341 = vld [vmem:[%s294 + $0x78] sm:$0xf]
      %v342 = vld [vmem:[%s294 + $0x7c] sm:$0xf]
      %v343 = vld [vmem:[%s294 + $0x80] sm:$0xf]
      %v344 = vld [vmem:[%s294 + $0x84] sm:$0xf]
      %v345 = vld [vmem:[%s294 + $0x88] sm:$0xf]
      %v346 = vld [vmem:[%s294 + $0x8c] sm:$0xf]
      %v347 = vunpack.c.l.bf16 %v311
      %v348 = vunpack.c.l.bf16 %v312
      %v349 = vunpack.c.l.bf16 %v313
      %v350 = vunpack.c.l.bf16 %v314
      %v351 = vunpack.c.l.bf16 %v315
      %v352 = vunpack.c.l.bf16 %v316
      %v353 = vunpack.c.l.bf16 %v317
      %v354 = vunpack.c.l.bf16 %v318
      %v355 = vunpack.c.l.bf16 %v319
      %v356 = vunpack.c.l.bf16 %v320
      %v357 = vunpack.c.l.bf16 %v321
      %v358 = vunpack.c.l.bf16 %v322
      %v359 = vunpack.c.l.bf16 %v323
      %v360 = vunpack.c.l.bf16 %v324
      %v361 = vunpack.c.l.bf16 %v325
      %v362 = vunpack.c.l.bf16 %v326
      %v363 = vunpack.c.l.bf16 %v327
      %v364 = vunpack.c.l.bf16 %v328
      %v365 = vunpack.c.l.bf16 %v329
      %v366 = vunpack.c.l.bf16 %v330
      %v367 = vunpack.c.l.bf16 %v331
      %v368 = vunpack.c.l.bf16 %v332
      %v369 = vunpack.c.l.bf16 %v333
      %v370 = vunpack.c.l.bf16 %v334
      %v371 = vunpack.c.l.bf16 %v335
      %v372 = vunpack.c.l.bf16 %v336
      %v373 = vunpack.c.l.bf16 %v337
      %v374 = vunpack.c.l.bf16 %v338
      %v375 = vunpack.c.l.bf16 %v339
      %v376 = vunpack.c.l.bf16 %v340
      %v377 = vunpack.c.l.bf16 %v341
      %v378 = vunpack.c.l.bf16 %v342
      %v379 = vunpack.c.l.bf16 %v343
      %v380 = vunpack.c.l.bf16 %v344
      %v381 = vunpack.c.l.bf16 %v345
      %v382 = vunpack.c.l.bf16 %v346
      %v383 = vld [vmem:[%s1] sm:$0x1]
      %v385 = vlaneseq
      %v386 = vshrl.u32 %v385, 7
      %v387 = vsub.s32 0, %v386
      %v388 = vrot.slane %v383, %v387
      %v390 = vmul.f32 %v347, %v388
      %v391 = vmul.f32 %v348, %v388
      %v392 = vmul.f32 %v349, %v388
      %v393 = vmul.f32 %v350, %v388
      %v394 = vmul.f32 %v351, %v388
      %v395 = vmul.f32 %v352, %v388
      %v396 = vmul.f32 %v353, %v388
      %v397 = vmul.f32 %v354, %v388
      %v398 = vmul.f32 %v355, %v388
      %v399 = vmul.f32 %v356, %v388
      %v400 = vmul.f32 %v357, %v388
      %v401 = vmul.f32 %v358, %v388
      %v402 = vmul.f32 %v359, %v388
      %v403 = vmul.f32 %v360, %v388
      %v404 = vmul.f32 %v361, %v388
      %v405 = vmul.f32 %v362, %v388
      %v406 = vmul.f32 %v363, %v388
      %v407 = vmul.f32 %v364, %v388
      %v408 = vmul.f32 %v365, %v388
      %v409 = vmul.f32 %v366, %v388
      %v410 = vmul.f32 %v367, %v388
      %v411 = vmul.f32 %v368, %v388
      %v412 = vmul.f32 %v369, %v388
      %v413 = vmul.f32 %v370, %v388
      %v414 = vmul.f32 %v371, %v388
      %v415 = vmul.f32 %v372, %v388
      %v416 = vmul.f32 %v373, %v388
      %v417 = vmul.f32 %v374, %v388
      %v418 = vmul.f32 %v375, %v388
      %v419 = vmul.f32 %v376, %v388
      %v420 = vmul.f32 %v377, %v388
      %v421 = vmul.f32 %v378, %v388
      %v422 = vmul.f32 %v379, %v388
      %v423 = vmul.f32 %v380, %v388
      %v424 = vmul.f32 %v381, %v388
      %v425 = vmul.f32 %v382, %v388
      %v426 = vld [vmem:[%s2] sm:$0x1]
      %v428 = vlaneseq
      %v429 = vshrl.u32 %v428, 7
      %v430 = vsub.s32 0, %v429
      %v431 = vrot.slane %v426, %v430
      %v433 = vadd.f32 %v390, %v431
      %v434 = vadd.f32 %v391, %v431
      %v435 = vadd.f32 %v392, %v431
      %v436 = vadd.f32 %v393, %v431
      %v437 = vadd.f32 %v394, %v431
      %v438 = vadd.f32 %v395, %v431
      %v439 = vadd.f32 %v396, %v431
      %v440 = vadd.f32 %v397, %v431
      %v441 = vadd.f32 %v398, %v431
      %v442 = vadd.f32 %v399, %v431
      %v443 = vadd.f32 %v400, %v431
      %v444 = vadd.f32 %v401, %v431
      %v445 = vadd.f32 %v402, %v431
      %v446 = vadd.f32 %v403, %v431
      %v447 = vadd.f32 %v404, %v431
      %v448 = vadd.f32 %v405, %v431
      %v449 = vadd.f32 %v406, %v431
      %v450 = vadd.f32 %v407, %v431
      %v451 = vadd.f32 %v408, %v431
      %v452 = vadd.f32 %v409, %v431
      %v453 = vadd.f32 %v410, %v431
      %v454 = vadd.f32 %v411, %v431
      %v455 = vadd.f32 %v412, %v431
      %v456 = vadd.f32 %v413, %v431
      %v457 = vadd.f32 %v414, %v431
      %v458 = vadd.f32 %v415, %v431
      %v459 = vadd.f32 %v416, %v431
      %v460 = vadd.f32 %v417, %v431
      %v461 = vadd.f32 %v418, %v431
      %v462 = vadd.f32 %v419, %v431
      %v463 = vadd.f32 %v420, %v431
      %v464 = vadd.f32 %v421, %v431
      %v465 = vadd.f32 %v422, %v431
      %v466 = vadd.f32 %v423, %v431
      %v467 = vadd.f32 %v424, %v431
      %v468 = vadd.f32 %v425, %v431
      %v469 = vld [vmem:[%s300 + $0x13] sm:$0xff]
      %v470 = vld [vmem:[%s300 + $0x1b] sm:$0xff]
      %v471 = vld [vmem:[%s300 + $0x23] sm:$0xff]
      %v472 = vld [vmem:[%s300 + $0x2b] sm:$0xff]
      %v473 = vld [vmem:[%s300 + $0x33] sm:$0xff]
      %v474 = vld [vmem:[%s300 + $0x3b] sm:$0xff]
      %v475 = vld [vmem:[%s300 + $0x43] sm:$0xff]
      %v476 = vld [vmem:[%s300 + $0x4b] sm:$0xff]
      %v477 = vld [vmem:[%s300 + $0x53] sm:$0xff]
      %v478 = vld [vmem:[%s300 + $0x5b] sm:$0xff]
      %v479 = vld [vmem:[%s300 + $0x63] sm:$0xff]
      %v480 = vld [vmem:[%s300 + $0x6b] sm:$0xff]
      %v481 = vld [vmem:[%s300 + $0x73] sm:$0xff]
      %v482 = vld [vmem:[%s300 + $0x7b] sm:$0xff]
      %v483 = vld [vmem:[%s300 + $0x83] sm:$0xff]
      %v484 = vld [vmem:[%s300 + $0x8b] sm:$0xff]
      %v485 = vld [vmem:[%s300 + $0x93] sm:$0xff]
      %v486 = vld [vmem:[%s300 + $0x9b] sm:$0xff]
      %v487 = vld [vmem:[%s300 + $0xa3] sm:$0xff]
      %v488 = vld [vmem:[%s300 + $0xab] sm:$0xff]
      %v489 = vld [vmem:[%s300 + $0xb3] sm:$0xff]
      %v490 = vld [vmem:[%s300 + $0xbb] sm:$0xff]
      %v491 = vld [vmem:[%s300 + $0xc3] sm:$0xff]
      %v492 = vld [vmem:[%s300 + $0xcb] sm:$0xff]
      %v493 = vld [vmem:[%s300 + $0xd3] sm:$0xff]
      %v494 = vld [vmem:[%s300 + $0xdb] sm:$0xff]
      %v495 = vld [vmem:[%s300 + $0xe3] sm:$0xff]
      %v496 = vld [vmem:[%s300 + $0xeb] sm:$0xff]
      %v497 = vld [vmem:[%s300 + $0xf3] sm:$0xff]
      %v498 = vld [vmem:[%s300 + $0xfb] sm:$0xff]
      %v499 = vld [vmem:[%s300 + $0x103] sm:$0xff]
      %v500 = vld [vmem:[%s300 + $0x10b] sm:$0xff]
      %v501 = vld [vmem:[%s300 + $0x113] sm:$0xff]
      %v502 = vld [vmem:[%s300 + $0x11b] sm:$0xff]
      %v503 = vld [vmem:[%s300 + $0x123] sm:$0xff]
      %v504 = vld [vmem:[%s300 + $0x12b] sm:$0xff]
      %v505 = vld [vmem:[%s4] sm:$0x1]
      %v507 = vlaneseq
      %v508 = vshrl.u32 %v507, 7
      %v509 = vsub.s32 0, %v508
      %v510 = vrot.slane %v505, %v509
      %v512 = vmul.f32 %v469, %v510
      %v513 = vmul.f32 %v470, %v510
      %v514 = vmul.f32 %v471, %v510
      %v515 = vmul.f32 %v472, %v510
      %v516 = vmul.f32 %v473, %v510
      %v517 = vmul.f32 %v474, %v510
      %v518 = vmul.f32 %v475, %v510
      %v519 = vmul.f32 %v476, %v510
      %v520 = vmul.f32 %v477, %v510
      %v521 = vmul.f32 %v478, %v510
      %v522 = vmul.f32 %v479, %v510
      %v523 = vmul.f32 %v480, %v510
      %v524 = vmul.f32 %v481, %v510
      %v525 = vmul.f32 %v482, %v510
      %v526 = vmul.f32 %v483, %v510
      %v527 = vmul.f32 %v484, %v510
      %v528 = vmul.f32 %v485, %v510
      %v529 = vmul.f32 %v486, %v510
      %v530 = vmul.f32 %v487, %v510
      %v531 = vmul.f32 %v488, %v510
      %v532 = vmul.f32 %v489, %v510
      %v533 = vmul.f32 %v490, %v510
      %v534 = vmul.f32 %v491, %v510
      %v535 = vmul.f32 %v492, %v510
      %v536 = vmul.f32 %v493, %v510
      %v537 = vmul.f32 %v494, %v510
      %v538 = vmul.f32 %v495, %v510
      %v539 = vmul.f32 %v496, %v510
      %v540 = vmul.f32 %v497, %v510
      %v541 = vmul.f32 %v498, %v510
      %v542 = vmul.f32 %v499, %v510
      %v543 = vmul.f32 %v500, %v510
      %v544 = vmul.f32 %v501, %v510
      %v545 = vmul.f32 %v502, %v510
      %v546 = vmul.f32 %v503, %v510
      %v547 = vmul.f32 %v504, %v510
      %v548 = vld [vmem:[%s5] sm:$0x1]
      %v550 = vlaneseq
      %v551 = vshrl.u32 %v550, 7
      %v552 = vsub.s32 0, %v551
      %v553 = vrot.slane %v548, %v552
      %v555 = vadd.f32 %v512, %v553
      %v556 = vadd.f32 %v513, %v553
      %v557 = vadd.f32 %v514, %v553
      %v558 = vadd.f32 %v515, %v553
      %v559 = vadd.f32 %v516, %v553
      %v560 = vadd.f32 %v517, %v553
      %v561 = vadd.f32 %v518, %v553
      %v562 = vadd.f32 %v519, %v553
      %v563 = vadd.f32 %v520, %v553
      %v564 = vadd.f32 %v521, %v553
      %v565 = vadd.f32 %v522, %v553
      %v566 = vadd.f32 %v523, %v553
      %v567 = vadd.f32 %v524, %v553
      %v568 = vadd.f32 %v525, %v553
      %v569 = vadd.f32 %v526, %v553
      %v570 = vadd.f32 %v527, %v553
      %v571 = vadd.f32 %v528, %v553
      %v572 = vadd.f32 %v529, %v553
      %v573 = vadd.f32 %v530, %v553
      %v574 = vadd.f32 %v531, %v553
      %v575 = vadd.f32 %v532, %v553
      %v576 = vadd.f32 %v533, %v553
      %v577 = vadd.f32 %v534, %v553
      %v578 = vadd.f32 %v535, %v553
      %v579 = vadd.f32 %v536, %v553
      %v580 = vadd.f32 %v537, %v553
      %v581 = vadd.f32 %v538, %v553
      %v582 = vadd.f32 %v539, %v553
      %v583 = vadd.f32 %v540, %v553
      %v584 = vadd.f32 %v541, %v553
      %v585 = vadd.f32 %v542, %v553
      %v586 = vadd.f32 %v543, %v553
      %v587 = vadd.f32 %v544, %v553
      %v588 = vadd.f32 %v545, %v553
      %v589 = vadd.f32 %v546, %v553
      %v590 = vadd.f32 %v547, %v553
      %v591 = vadd.f32 %v433, %v555
      %v592 = vadd.f32 %v434, %v556
      %v593 = vadd.f32 %v435, %v557
      %v594 = vadd.f32 %v436, %v558
      %v595 = vadd.f32 %v437, %v559
      %v596 = vadd.f32 %v438, %v560
      %v597 = vadd.f32 %v439, %v561
      %v598 = vadd.f32 %v440, %v562
      %v599 = vadd.f32 %v441, %v563
      %v600 = vadd.f32 %v442, %v564
      %v601 = vadd.f32 %v443, %v565
      %v602 = vadd.f32 %v444, %v566
      %v603 = vadd.f32 %v445, %v567
      %v604 = vadd.f32 %v446, %v568
      %v605 = vadd.f32 %v447, %v569
      %v606 = vadd.f32 %v448, %v570
      %v607 = vadd.f32 %v449, %v571
      %v608 = vadd.f32 %v450, %v572
      %v609 = vadd.f32 %v451, %v573
      %v610 = vadd.f32 %v452, %v574
      %v611 = vadd.f32 %v453, %v575
      %v612 = vadd.f32 %v454, %v576
      %v613 = vadd.f32 %v455, %v577
      %v614 = vadd.f32 %v456, %v578
      %v615 = vadd.f32 %v457, %v579
      %v616 = vadd.f32 %v458, %v580
      %v617 = vadd.f32 %v459, %v581
      %v618 = vadd.f32 %v460, %v582
      %v619 = vadd.f32 %v461, %v583
      %v620 = vadd.f32 %v462, %v584
      %v621 = vadd.f32 %v463, %v585
      %v622 = vadd.f32 %v464, %v586
      %v623 = vadd.f32 %v465, %v587
      %v624 = vadd.f32 %v466, %v588
      %v625 = vadd.f32 %v467, %v589
      %v626 = vadd.f32 %v468, %v590
      %v627 = vmax.f32 %v591, 0.0
      %v628 = vmax.f32 %v592, 0.0
      %v629 = vmax.f32 %v593, 0.0
      %v630 = vmax.f32 %v594, 0.0
      %v631 = vmax.f32 %v595, 0.0
      %v632 = vmax.f32 %v596, 0.0
      %v633 = vmax.f32 %v597, 0.0
      %v634 = vmax.f32 %v598, 0.0
      %v635 = vmax.f32 %v599, 0.0
      %v636 = vmax.f32 %v600, 0.0
      %v637 = vmax.f32 %v601, 0.0
      %v638 = vmax.f32 %v602, 0.0
      %v639 = vmax.f32 %v603, 0.0
      %v640 = vmax.f32 %v604, 0.0
      %v641 = vmax.f32 %v605, 0.0
      %v642 = vmax.f32 %v606, 0.0
      %v643 = vmax.f32 %v607, 0.0
      %v644 = vmax.f32 %v608, 0.0
      %v645 = vmax.f32 %v609, 0.0
      %v646 = vmax.f32 %v610, 0.0
      %v647 = vmax.f32 %v611, 0.0
      %v648 = vmax.f32 %v612, 0.0
      %v649 = vmax.f32 %v613, 0.0
      %v650 = vmax.f32 %v614, 0.0
      %v651 = vmax.f32 %v615, 0.0
      %v652 = vmax.f32 %v616, 0.0
      %v653 = vmax.f32 %v617, 0.0
      %v654 = vmax.f32 %v618, 0.0
      %v655 = vmax.f32 %v619, 0.0
      %v656 = vmax.f32 %v620, 0.0
      %v657 = vmax.f32 %v621, 0.0
      %v658 = vmax.f32 %v622, 0.0
      %v659 = vmax.f32 %v623, 0.0
      %v660 = vmax.f32 %v624, 0.0
      %v661 = vmax.f32 %v625, 0.0
      %v662 = vmax.f32 %v626, 0.0
      %vm663 = vcmask 31744
      %664 = vst.msk [vmem:[%s309] sm:$0xff] %vm663, %v627
      %665 = vst.msk [vmem:[%s309 + $0x8] sm:$0xff] %vm663, %v628
      %666 = vst.msk [vmem:[%s309 + $0x10] sm:$0xff] %vm663, %v629
      %667 = vst.msk [vmem:[%s309 + $0x18] sm:$0xff] %vm663, %v630
      %668 = vst.msk [vmem:[%s309 + $0x20] sm:$0xff] %vm663, %v631
      %669 = vst.msk [vmem:[%s309 + $0x28] sm:$0xff] %vm663, %v632
      %670 = vst.msk [vmem:[%s309 + $0x30] sm:$0xff] %vm663, %v633
      %671 = vst.msk [vmem:[%s309 + $0x38] sm:$0xff] %vm663, %v634
      %672 = vst.msk [vmem:[%s309 + $0x40] sm:$0xff] %vm663, %v635
      %673 = vst.msk [vmem:[%s309 + $0x48] sm:$0xff] %vm663, %v636
      %674 = vst.msk [vmem:[%s309 + $0x50] sm:$0xff] %vm663, %v637
      %675 = vst.msk [vmem:[%s309 + $0x58] sm:$0xff] %vm663, %v638
      %676 = vst.msk [vmem:[%s309 + $0x60] sm:$0xff] %vm663, %v639
      %677 = vst.msk [vmem:[%s309 + $0x68] sm:$0xff] %vm663, %v640
      %678 = vst.msk [vmem:[%s309 + $0x70] sm:$0xff] %vm663, %v641
      %679 = vst.msk [vmem:[%s309 + $0x78] sm:$0xff] %vm663, %v642
      %680 = vst.msk [vmem:[%s309 + $0x80] sm:$0xff] %vm663, %v643
      %681 = vst.msk [vmem:[%s309 + $0x88] sm:$0xff] %vm663, %v644
      %682 = vst.msk [vmem:[%s309 + $0x90] sm:$0xff] %vm663, %v645
      %683 = vst.msk [vmem:[%s309 + $0x98] sm:$0xff] %vm663, %v646
      %684 = vst.msk [vmem:[%s309 + $0xa0] sm:$0xff] %vm663, %v647
      %685 = vst.msk [vmem:[%s309 + $0xa8] sm:$0xff] %vm663, %v648
      %686 = vst.msk [vmem:[%s309 + $0xb0] sm:$0xff] %vm663, %v649
      %687 = vst.msk [vmem:[%s309 + $0xb8] sm:$0xff] %vm663, %v650
      %688 = vst.msk [vmem:[%s309 + $0xc0] sm:$0xff] %vm663, %v651
      %689 = vst.msk [vmem:[%s309 + $0xc8] sm:$0xff] %vm663, %v652
      %690 = vst.msk [vmem:[%s309 + $0xd0] sm:$0xff] %vm663, %v653
      %691 = vst.msk [vmem:[%s309 + $0xd8] sm:$0xff] %vm663, %v654
      %692 = vst.msk [vmem:[%s309 + $0xe0] sm:$0xff] %vm663, %v655
      %693 = vst.msk [vmem:[%s309 + $0xe8] sm:$0xff] %vm663, %v656
      %694 = vst.msk [vmem:[%s309 + $0xf0] sm:$0xff] %vm663, %v657
      %695 = vst.msk [vmem:[%s309 + $0xf8] sm:$0xff] %vm663, %v658
      %696 = vst.msk [vmem:[%s309 + $0x100] sm:$0xff] %vm663, %v659
      %697 = vst.msk [vmem:[%s309 + $0x108] sm:$0xff] %vm663, %v660
      %698 = vst.msk [vmem:[%s309 + $0x110] sm:$0xff] %vm663, %v661
      %699 = vst.msk [vmem:[%s309 + $0x118] sm:$0xff] %vm663, %v662
      %s700 = smul.u32 36, %s22
      %p701 = scmp.lt.s32.totalorder %s21, 1
      %s702 = scalar_select %p701, %s21, 1
      %p703 = scmp.lt.s32.totalorder %s700, 35
      %s704 = scalar_select %p703, %s700, 35
      %s705 = smul.addr %s702, 36
      %s706 = sadd.s32 %s704, %s705
      %s707 = smul.addr %s706, 8
      %s708 = scalar_lea.vmem %s6, %s707
      // Predicated region
      $region45: #{basic_block_dec.5} parent=43 // pred_check
        %p709 = pneg %p187
      $region46: #{basic_block_dec.5} parent=43 // pred_check_branch
        %711 = sbr.rel (%p709) target = $region48
      $region47: #{basic_block_dec.5} parent=43 // pred_region
        %s712 = smul.u32 36, %s22
      $region48: #{basic_block_dec.5} parent=43 // pred_fallthru
        _
    $region44: #{basic_block_dec.5} parent=5 // pred_fallthru
      _
    %p713 = scmp.le.s32.totalorder 2, %s12
    // Predicated region
    $region49: #{basic_block_dec.5} parent=5 // pred_check
      %p714 = pneg %p713
    $region50: #{basic_block_dec.5} parent=5 // pred_check_branch
      %716 = sbr.rel (%p714) target = $region52
    $region51: #{basic_block_dec.5} parent=5 // pred_region
      %s717 = ssub.s32 %s12, 2
      // Predicated region
      $region53: #{basic_block_dec.5} parent=51 // pred_check
        %p718 = pneg %p193
      $region54: #{basic_block_dec.5} parent=51 // pred_check_branch
        %720 = sbr.rel (%p718) target = $region56
      $region55: #{basic_block_dec.5} parent=51 // pred_region
        %s721 = smul.u32 36, %s24
        %p722 = scmp.lt.s32.totalorder %s23, 1
        %s723 = scalar_select %p722, %s23, 1
        %p724 = scmp.lt.s32.totalorder %s721, 35
        %s725 = scalar_select %p724, %s721, 35
        %s726 = smul.addr %s723, 36
        %s727 = sadd.s32 %s725, %s726
        %s728 = smul.addr %s727, 8
        %s729 = scalar_lea.vmem %s6, %s728
      $region56: #{basic_block_dec.5} parent=51 // pred_fallthru
        _
    $region52: #{basic_block_dec.5} parent=5 // pred_fallthru
      _
  $region6: #{basic_block_dec.5} parent=0 // loop_footer
    %s16 = sadd.s32 1, %s12
  $region7: #{basic_block_dec.5} parent=0 // loop_footer_branch
    %11 = sbr.rel target = $region3
  $region8: #{basic_block_dec.5} parent=0 // loop_exit
    _

// kernel: basic_block_dec.3
$region0: #{basic_block_dec.3}
  #allocation0 [shape = 'u32[]', space=smem, size = 0x4, offset = 0x4, fixed_abs, tag = 'smem constant byte address 0x4 - core index']
  #allocation1 [shape = 'u32[144,128]{1,0:T(1,128)}', space=vmem, size = 0x12000, scoped, tag = 'internal scratch']
  %s0 = inlined_call_operand.vmem [shape: f32[2,328,4], index: 0, kind: input, shape index: {}]
  %s1 = inlined_call_operand.vmem [shape: bf16[9,4,128], index: 1, kind: input, shape index: {}]
  %s2 = inlined_call_operand.vmem [shape: f32[1,128], index: 2, kind: input, shape index: {}]
  %s3 = inlined_call_operand.vmem [shape: f32[288,1], index: 3, kind: input, shape index: {}]
  %s4 = inlined_call_operand.vmem [shape: bf16[2,288,128], index: 4, kind: output, shape index: {0}]
  %s5 = inlined_call_operand.vmem [shape: f32[2,1,2,128], index: 5, kind: output, shape index: {1}]
  %6 = xla_tuple %s4, %s5
  %s7 = sld [smem:[#allocation0]]
  $region57: #{basic_block_dec.3} parent=0
    _
  %s9 = ssub.s32 1, %s7
  %s10 = scalar_select 0, %s9, %s7
  loop: start=0, step=1, limit=4
  $region2: #{basic_block_dec.3} parent=0 // loop_pre_header
    _
  $region3: #{basic_block_dec.3} parent=0 // loop_header
    %s12 = sphi 0, %s16
    %p13 = scmp.ge.s32.totalorder %s12, 4
    %s19 = sphi 0, %s31
    %s20 = sphi 0, %s27
    %s21 = sphi 0, %s19
    %s22 = sphi 0, %s20
    %s23 = sphi 0, %s21
    %s24 = sphi 0, %s22
    %s34 = sphi 0, %s36
    %s37 = sphi 0, %s34
    %s38 = sphi 0, %s37
    %s54 = sphi 0, %s38
    %s58 = sphi 0, %s58
    %s60 = sphi 0, %s58
    %s61 = sphi 0, %s60
    %s75 = sphi 0, %s61
    %s79 = sphi 0, %s79
    %s81 = sphi 0, %s79
    %s82 = sphi 0, %s81
    %s96 = sphi 0, %s82
    %s102 = sphi 0, %s104
    %s105 = sphi 0, %s102
    %s106 = sphi 0, %s105
    %s122 = sphi 0, %s106
    %s130 = sphi 0, %s132
    %s133 = sphi 0, %s130
    %s134 = sphi 0, %s133
    %s150 = sphi 0, %s134
    %s158 = sphi 0, %s160
    %s161 = sphi 0, %s158
    %s162 = sphi 0, %s161
    %s178 = sphi 0, %s162
  $region4: #{basic_block_dec.3} parent=0 // loop_header_branch
    %15 = sbr.rel (%p13) target = $region8
  $region5: #{basic_block_dec.3} parent=0 // loop_body
    %s17 = ssub.s32 %s12, 1
    %s18 = ssub.s32 %s12, 2
    %s25 = sadd.s32 1, %s20
    %p26 = scmp.ge.s32.totalorder %s25, 1
    %s27 = scalar_select %p26, 0, %s25
    %s28 = sadd.s32 1, %s19
    %s29 = scalar_select %p26, %s28, %s19
    %p30 = scmp.ge.s32.totalorder %s29, 2
    %s31 = scalar_select %p30, 0, %s29
    %s32 = ssub.s32 %s19, %s31
    %p33 = scmp.eq.s32.totalorder %s32, 0
    %s35 = sadd.s32 %s34, 1
    %s36 = scalar_select %p33, %s34, %s35
    %p39 = pneg %p33
    %p40 = scmp.eq.s32.totalorder %s12, 1
    %p41 = por %p39, %p40
    %p42 = scmp.ne.s32.totalorder %s34, %s37
    %p43 = scmp.eq.s32.totalorder %s12, 0
    %p44 = por %p42, %p43
    %p45 = scmp.ne.s32.totalorder %s34, %s37
    %p46 = scmp.eq.s32.totalorder %s17, 1
    %p47 = por %p45, %p46
    %p48 = scmp.ne.s32.totalorder %s37, %s38
    %p49 = scmp.eq.s32.totalorder %s17, 0
    %p50 = por %p48, %p49
    %p51 = scmp.ne.s32.totalorder %s37, %s38
    %p52 = scmp.eq.s32.totalorder %s18, 1
    %p53 = por %p51, %p52
    %p55 = scmp.ne.s32.totalorder %s38, %s54
    %p56 = scmp.eq.s32.totalorder %s18, 0
    %p57 = por %p55, %p56
    %s59 = sadd.s32 %s58, 1
    %p62 = scmp.eq.s32.totalorder %s12, 1
    %p63 = scmp.ne.s32.totalorder %s58, %s60
    %p64 = scmp.eq.s32.totalorder %s12, 0
    %p65 = por %p63, %p64
    %p66 = scmp.ne.s32.totalorder %s58, %s60
    %p67 = scmp.eq.s32.totalorder %s17, 1
    %p68 = por %p66, %p67
    %p69 = scmp.ne.s32.totalorder %s60, %s61
    %p70 = scmp.eq.s32.totalorder %s17, 0
    %p71 = por %p69, %p70
    %p72 = scmp.ne.s32.totalorder %s60, %s61
    %p73 = scmp.eq.s32.totalorder %s18, 1
    %p74 = por %p72, %p73
    %p76 = scmp.ne.s32.totalorder %s61, %s75
    %p77 = scmp.eq.s32.totalorder %s18, 0
    %p78 = por %p76, %p77
    %s80 = sadd.s32 %s79, 1
    %p83 = scmp.eq.s32.totalorder %s12, 1
    %p84 = scmp.ne.s32.totalorder %s79, %s81
    %p85 = scmp.eq.s32.totalorder %s12, 0
    %p86 = por %p84, %p85
    %p87 = scmp.ne.s32.totalorder %s79, %s81
    %p88 = scmp.eq.s32.totalorder %s17, 1
    %p89 = por %p87, %p88
    %p90 = scmp.ne.s32.totalorder %s81, %s82
    %p91 = scmp.eq.s32.totalorder %s17, 0
    %p92 = por %p90, %p91
    %p93 = scmp.ne.s32.totalorder %s81, %s82
    %p94 = scmp.eq.s32.totalorder %s18, 1
    %p95 = por %p93, %p94
    %p97 = scmp.ne.s32.totalorder %s82, %s96
    %p98 = scmp.eq.s32.totalorder %s18, 0
    %p99 = por %p97, %p98
    %s100 = ssub.s32 %s20, %s27
    %p101 = scmp.eq.s32.totalorder %s100, 0
    %s103 = sadd.s32 %s102, 1
    %s104 = scalar_select %p101, %s102, %s103
    %p107 = pneg %p101
    %p108 = scmp.eq.s32.totalorder %s12, 1
    %p109 = por %p107, %p108
    %p110 = scmp.ne.s32.totalorder %s102, %s105
    %p111 = scmp.eq.s32.totalorder %s12, 0
    %p112 = por %p110, %p111
    %p113 = scmp.ne.s32.totalorder %s102, %s105
    %p114 = scmp.eq.s32.totalorder %s17, 1
    %p115 = por %p113, %p114
    %p116 = scmp.ne.s32.totalorder %s105, %s106
    %p117 = scmp.eq.s32.totalorder %s17, 0
    %p118 = por %p116, %p117
    %p119 = scmp.ne.s32.totalorder %s105, %s106
    %p120 = scmp.eq.s32.totalorder %s18, 1
    %p121 = por %p119, %p120
    %p123 = scmp.ne.s32.totalorder %s106, %s122
    %p124 = scmp.eq.s32.totalorder %s18, 0
    %p125 = por %p123, %p124
    %s126 = ssub.s32 %s19, %s31
    %s127 = ssub.s32 %s20, %s27
    %s128 = sor.u32 %s126, %s127
    %p129 = scmp.eq.s32.totalorder %s128, 0
    %s131 = sadd.s32 %s130, 1
    %s132 = scalar_select %p129, %s130, %s131
    %p135 = pneg %p129
    %p136 = scmp.eq.s32.totalorder %s12, 1
    %p137 = por %p135, %p136
    %p138 = scmp.ne.s32.totalorder %s130, %s133
    %p139 = scmp.eq.s32.totalorder %s12, 0
    %p140 = por %p138, %p139
    %p141 = scmp.ne.s32.totalorder %s130, %s133
    %p142 = scmp.eq.s32.totalorder %s17, 1
    %p143 = por %p141, %p142
    %p144 = scmp.ne.s32.totalorder %s133, %s134
    %p145 = scmp.eq.s32.totalorder %s17, 0
    %p146 = por %p144, %p145
    %p147 = scmp.ne.s32.totalorder %s133, %s134
    %p148 = scmp.eq.s32.totalorder %s18, 1
    %p149 = por %p147, %p148
    %p151 = scmp.ne.s32.totalorder %s134, %s150
    %p152 = scmp.eq.s32.totalorder %s18, 0
    %p153 = por %p151, %p152
    %s154 = ssub.s32 %s19, %s31
    %s155 = ssub.s32 %s20, %s27
    %s156 = sor.u32 %s154, %s155
    %p157 = scmp.eq.s32.totalorder %s156, 0
    %s159 = sadd.s32 %s158, 1
    %s160 = scalar_select %p157, %s158, %s159
    %p163 = pneg %p157
    %p164 = scmp.eq.s32.totalorder %s12, 1
    %p165 = por %p163, %p164
    %p166 = scmp.ne.s32.totalorder %s158, %s161
    %p167 = scmp.eq.s32.totalorder %s12, 0
    %p168 = por %p166, %p167
    %p169 = scmp.ne.s32.totalorder %s158, %s161
    %p170 = scmp.eq.s32.totalorder %s17, 1
    %p171 = por %p169, %p170
    %p172 = scmp.ne.s32.totalorder %s161, %s162
    %p173 = scmp.eq.s32.totalorder %s17, 0
    %p174 = por %p172, %p173
    %p175 = scmp.ne.s32.totalorder %s161, %s162
    %p176 = scmp.eq.s32.totalorder %s18, 1
    %p177 = por %p175, %p176
    %p179 = scmp.ne.s32.totalorder %s162, %s178
    %p180 = scmp.eq.s32.totalorder %s18, 0
    %p181 = por %p179, %p180
    %p182 = scmp.le.s32.totalorder 1, %s12
    %p183 = scmp.lt.s32.totalorder %s12, 3
    %p184 = pnand %p182, %p183
    %p185 = pneg %p184
    // Predicated region
    $region9: #{basic_block_dec.3} parent=5 // pred_check
      _
    $region10: #{basic_block_dec.3} parent=5 // pred_check_branch
      %187 = sbr.rel (%p184) target = $region12
    $region11: #{basic_block_dec.3} parent=5 // pred_region
      %s188 = ssub.s32 %s12, 1
      // Predicated region
      $region13: #{basic_block_dec.3} parent=11 // pred_check
        %p189 = pneg %p71
      $region14: #{basic_block_dec.3} parent=11 // pred_check_branch
        %191 = sbr.rel (%p189) target = $region16
      $region15: #{basic_block_dec.3} parent=11 // pred_region
        _
      $region16: #{basic_block_dec.3} parent=11 // pred_fallthru
        _
      // Predicated region
      $region17: #{basic_block_dec.3} parent=11 // pred_check
        %p192 = pneg %p92
      $region18: #{basic_block_dec.3} parent=11 // pred_check_branch
        %194 = sbr.rel (%p192) target = $region20
      $region19: #{basic_block_dec.3} parent=11 // pred_region
        _
      $region20: #{basic_block_dec.3} parent=11 // pred_fallthru
        _
      // Predicated region
      $region21: #{basic_block_dec.3} parent=11 // pred_check
        %p195 = pneg %p118
      $region22: #{basic_block_dec.3} parent=11 // pred_check_branch
        %197 = sbr.rel (%p195) target = $region24
      $region23: #{basic_block_dec.3} parent=11 // pred_region
        %s198 = smul.u32 36, %s22
        %p199 = scmp.lt.s32.totalorder %s198, 35
        %s200 = scalar_select %p199, %s198, 35
        %s201 = smul.addr %s200, 8
        %s202 = scalar_lea.vmem %s3, %s201
        %s203 = smul.u32 36, %s22
      $region24: #{basic_block_dec.3} parent=11 // pred_fallthru
        _
    $region12: #{basic_block_dec.3} parent=5 // pred_fallthru
      _
    %p204 = scmp.lt.s32.totalorder %s12, 2
    // Predicated region
    $region25: #{basic_block_dec.3} parent=5 // pred_check
      %p205 = pneg %p204
    $region26: #{basic_block_dec.3} parent=5 // pred_check_branch
      %207 = sbr.rel (%p205) target = $region28
    $region27: #{basic_block_dec.3} parent=5 // pred_region
      // Predicated region
      $region29: #{basic_block_dec.3} parent=27 // pred_check
        %p208 = pneg %p44
      $region30: #{basic_block_dec.3} parent=27 // pred_check_branch
        %210 = sbr.rel (%p208) target = $region32
      $region31: #{basic_block_dec.3} parent=27 // pred_region
        %p211 = scmp.lt.s32.totalorder %s19, 1
        %s212 = scalar_select %p211, %s19, 1
        %s213 = smul.addr %s212, 41
        %s214 = smul.addr %s213, 8
        %s215 = scalar_lea.vmem %s0, %s214
      $region32: #{basic_block_dec.3} parent=27 // pred_fallthru
        _
    $region28: #{basic_block_dec.3} parent=5 // pred_fallthru
      _
    %p216 = scmp.le.s32.totalorder 1, %s12
    %p217 = scmp.lt.s32.totalorder %s12, 3
    %p218 = pnand %p216, %p217
    %p219 = pneg %p218
    // Predicated region
    $region33: #{basic_block_dec.3} parent=5 // pred_check
      _
    $region34: #{basic_block_dec.3} parent=5 // pred_check_branch
      %221 = sbr.rel (%p218) target = $region36
    $region35: #{basic_block_dec.3} parent=5 // pred_region
      %s222 = ssub.s32 %s12, 1
      %p223 = scmp.lt.s32.totalorder %s21, 1
      %s224 = scalar_select %p223, %s21, 1
      %s225 = smul.addr %s224, 41
      %s226 = smul.addr %s225, 8
      %s227 = scalar_lea.vmem %s0, %s226
      %p228 = pneg %p50
      %p229 = pneg %p47
      %p230 = pneg %p71
      %p231 = pneg %p68
      %p232 = pneg %p92
      %p233 = pneg %p89
      %s234 = smul.u32 36, %s22
      %p235 = scmp.lt.s32.totalorder %s234, 35
      %s236 = scalar_select %p235, %s234, 35
      %s237 = smul.addr %s236, 8
      %s238 = scalar_lea.vmem %s3, %s237
      %p239 = pneg %p118
      %p240 = pneg %p115
      %p241 = pneg %p146
      %p242 = pneg %p143
      %s243 = smul.u32 36, %s22
      %p244 = scmp.lt.s32.totalorder %s21, 1
      %s245 = scalar_select %p244, %s21, 1
      %p246 = scmp.lt.s32.totalorder %s243, 35
      %s247 = scalar_select %p246, %s243, 35
      %s248 = smul.addr %s245, 36
      %s249 = sadd.s32 %s247, %s248
      %s250 = smul.addr %s249, 4
      %s251 = scalar_lea.vmem %s4, %s250
      %p252 = pneg %p174
      %p253 = pneg %p171
      %p254 = scmp.lt.s32.totalorder %s21, 1
      %s255 = scalar_select %p254, %s21, 1
      %p256 = scmp.lt.s32.totalorder %s22, 0
      %s257 = scalar_select %p256, %s22, 0
      %s258 = sadd.s32 %s257, %s255
      %s259 = smul.addr %s258, 2
      %s260 = scalar_lea.vmem %s5, %s259
      %p261 = scmp.lt.s32.totalorder %s21, 1
      %s262 = scalar_select %p261, %s21, 1
      %s263 = smul.addr %s262, 41
      %s264 = smul.addr %s263, 8
      %s265 = scalar_lea.vmem %s0, %s264
      %s266 = smul.u32 36, %s22
      %p267 = scmp.lt.s32.totalorder %s266, 35
      %s268 = scalar_select %p267, %s266, 35
      %s269 = smul.addr %s268, 8
      %s270 = scalar_lea.vmem %s3, %s269
      %s271 = smul.u32 36, %s22
      %s272 = smul.u32 36, %s22
      %p273 = scmp.lt.s32.totalorder %s21, 1
      %s274 = scalar_select %p273, %s21, 1
      %p275 = scmp.lt.s32.totalorder %s272, 35
      %s276 = scalar_select %p275, %s272, 35
      %s277 = smul.addr %s274, 36
      %s278 = sadd.s32 %s276, %s277
      %s279 = smul.addr %s278, 4
      %s280 = scalar_lea.vmem %s4, %s279
      %s281 = smul.u32 36, %s22
      %p282 = scmp.lt.s32.totalorder %s21, 1
      %s283 = scalar_select %p282, %s21, 1
      %p284 = scmp.lt.s32.totalorder %s22, 0
      %s285 = scalar_select %p284, %s22, 0
      %s286 = sadd.s32 %s285, %s283
      %s287 = smul.addr %s286, 2
      %s288 = scalar_lea.vmem %s5, %s287
      %v290 = vld [vmem:[%s2] sm:$0x1]
      %v292 = vlaneseq
      %v293 = vshrl.u32 %v292, 7
      %v294 = vsub.s32 0, %v293
      %v295 = vrot.slane %v290, %v294
      %v297 = vld [vmem:[%s265] sm:$0xff]
      %v298 = vld [vmem:[%s265 + $0x8] sm:$0xff]
      %v299 = vld [vmem:[%s265 + $0x10] sm:$0xff]
      %v300 = vld [vmem:[%s265 + $0x18] sm:$0xff]
      %v301 = vld [vmem:[%s265 + $0x20] sm:$0xff]
      %v302 = vld [vmem:[%s265 + $0x28] sm:$0xff]
      %v303 = vld [vmem:[%s265 + $0x30] sm:$0xff]
      %v304 = vld [vmem:[%s265 + $0x38] sm:$0xff]
      %v305 = vld [vmem:[%s265 + $0x40] sm:$0xff]
      %v306 = vld [vmem:[%s265 + $0x48] sm:$0xff]
      %v307 = vld [vmem:[%s265 + $0x50] sm:$0xff]
      %v308 = vld [vmem:[%s265 + $0x58] sm:$0xff]
      %v309 = vld [vmem:[%s265 + $0x60] sm:$0xff]
      %v310 = vld [vmem:[%s265 + $0x68] sm:$0xff]
      %v311 = vld [vmem:[%s265 + $0x70] sm:$0xff]
      %v312 = vld [vmem:[%s265 + $0x78] sm:$0xff]
      %v313 = vld [vmem:[%s265 + $0x80] sm:$0xff]
      %v314 = vld [vmem:[%s265 + $0x88] sm:$0xff]
      %v315 = vld [vmem:[%s265 + $0x90] sm:$0xff]
      %v316 = vld [vmem:[%s265 + $0x98] sm:$0xff]
      %v317 = vld [vmem:[%s265 + $0xa0] sm:$0xff]
      %v318 = vld [vmem:[%s265 + $0xa8] sm:$0xff]
      %v319 = vld [vmem:[%s265 + $0xb0] sm:$0xff]
      %v320 = vld [vmem:[%s265 + $0xb8] sm:$0xff]
      %v321 = vld [vmem:[%s265 + $0xc0] sm:$0xff]
      %v322 = vld [vmem:[%s265 + $0xc8] sm:$0xff]
      %v323 = vld [vmem:[%s265 + $0xd0] sm:$0xff]
      %v324 = vld [vmem:[%s265 + $0xd8] sm:$0xff]
      %v325 = vld [vmem:[%s265 + $0xe0] sm:$0xff]
      %v326 = vld [vmem:[%s265 + $0xe8] sm:$0xff]
      %v327 = vld [vmem:[%s265 + $0xf0] sm:$0xff]
      %v328 = vld [vmem:[%s265 + $0xf8] sm:$0xff]
      %v329 = vld [vmem:[%s265 + $0x100] sm:$0xff]
      %v330 = vld [vmem:[%s265 + $0x108] sm:$0xff]
      %v331 = vld [vmem:[%s265 + $0x110] sm:$0xff]
      %v332 = vld [vmem:[%s265 + $0x118] sm:$0xff]
      %v333 = vpack.c.bf16 %v298, %v297
      %v334 = vpack.c.bf16 %v300, %v299
      %v335 = vpack.c.bf16 %v302, %v301
      %v336 = vpack.c.bf16 %v304, %v303
      %v337 = vpack.c.bf16 %v306, %v305
      %v338 = vpack.c.bf16 %v308, %v307
      %v339 = vpack.c.bf16 %v310, %v309
      %v340 = vpack.c.bf16 %v312, %v311
      %v341 = vpack.c.bf16 %v314, %v313
      %v342 = vpack.c.bf16 %v316, %v315
      %v343 = vpack.c.bf16 %v318, %v317
      %v344 = vpack.c.bf16 %v320, %v319
      %v345 = vpack.c.bf16 %v322, %v321
      %v346 = vpack.c.bf16 %v324, %v323
      %v347 = vpack.c.bf16 %v326, %v325
      %v348 = vpack.c.bf16 %v328, %v327
      %v349 = vpack.c.bf16 %v330, %v329
      %v350 = vpack.c.bf16 %v332, %v331
      %v351 = vld [vmem:[%s1] sm:$0x3]
      %vm352 = vcmask 31744
      %v354 = vsel %vm352, %v333, 0
      %v357 = vsel %vm352, %v334, 0
      %v360 = vsel %vm352, %v335, 0
      %v363 = vsel %vm352, %v336, 0
      %v366 = vsel %vm352, %v337, 0
      %v369 = vsel %vm352, %v338, 0
      %v372 = vsel %vm352, %v339, 0
      %v375 = vsel %vm352, %v340, 0
      %v378 = vsel %vm352, %v341, 0
      %v381 = vsel %vm352, %v342, 0
      %v384 = vsel %vm352, %v343, 0
      %v387 = vsel %vm352, %v344, 0
      %v390 = vsel %vm352, %v345, 0
      %v393 = vsel %vm352, %v346, 0
      %v396 = vsel %vm352, %v347, 0
      %v399 = vsel %vm352, %v348, 0
      %v402 = vsel %vm352, %v349, 0
      %v405 = vsel %vm352, %v350, 0
      %vm407 = vcmask 1041408
      %v409 = vsel %vm407, %v351, 0
      %411 = vmatprep.subr.bf16.mxu0 0
      %412 = vmatpush1.bf16.msra.mxu0 0
      %413 = vmatprep.subr.bf16.mxu0 0
      %414 = vmatpush1.bf16.msra.mxu0 0
      %415 = vmatprep.subr.bf16.mxu0 0
      %416 = vmatpush1.bf16.msra.mxu0 0
      %417 = vmatprep.subr.bf16.mxu0 0
      %418 = vmatpush1.bf16.msra.mxu0 0
      %419 = vmatprep.subr.bf16.mxu0 0
      %420 = vmatpush1.bf16.msra.mxu0 0
      %421 = vmatprep.subr.bf16.mxu0 0
      %422 = vmatpush1.bf16.msra.mxu0 0
      %423 = vmatprep.subr.bf16.mxu0 0
      %424 = vmatpush1.bf16.msra.mxu0 0
      %425 = vmatprep.subr.bf16.mxu0 0
      %426 = vmatpush1.bf16.msra.mxu0 %v409
      %427 = vmatprep.subr.bf16.mxu0 0
      %428 = vmatpush2.bf16.msra.mxu0 0
      %429 = vmatprep.subr.bf16.mxu0 0
      %430 = vmatpush2.bf16.msra.mxu0 0
      %431 = vmatprep.subr.bf16.mxu0 0
      %432 = vmatpush2.bf16.msra.mxu0 0
      %433 = vmatprep.subr.bf16.mxu0 0
      %434 = vmatpush2.bf16.msra.mxu0 0
      %435 = vmatprep.subr.bf16.mxu0 0
      %436 = vmatpush2.bf16.msra.mxu0 0
      %437 = vmatprep.subr.bf16.mxu0 0
      %438 = vmatpush2.bf16.msra.mxu0 0
      %439 = vmatprep.subr.bf16.mxu0 0
      %440 = vmatpush2.bf16.msra.mxu0 0
      %441 = vmatprep.subr.bf16.mxu0 0
      %442 = vmatpush2.bf16.msra.mxu0 0
      %443 = vmatprep.mubr.bf16.mxu0 0
      %444 = vmatmul.mubr.bf16.gmra.mxu0 %v354
      %v445 = vpop.f32.mrf.mxu0
      %v446 = vadd.f32 0.0, %v445
      %v447 = vpop.f32.mrf.mxu0
      %v448 = vpop.f32.mrf.mxu0
      %v449 = vadd.f32 0.0, %v448
      %v450 = vpop.f32.mrf.mxu0
      %451 = vmatprep.mubr.bf16.mxu0 0
      %452 = vmatmul.mubr.bf16.gmra.mxu0 %v357
      %v453 = vpop.f32.mrf.mxu0
      %v454 = vadd.f32 0.0, %v453
      %v455 = vpop.f32.mrf.mxu0
      %v456 = vpop.f32.mrf.mxu0
      %v457 = vadd.f32 0.0, %v456
      %v458 = vpop.f32.mrf.mxu0
      %459 = vmatprep.mubr.bf16.mxu0 0
      %460 = vmatmul.mubr.bf16.gmra.mxu0 %v360
      %v461 = vpop.f32.mrf.mxu0
      %v462 = vadd.f32 0.0, %v461
      %v463 = vpop.f32.mrf.mxu0
      %v464 = vpop.f32.mrf.mxu0
      %v465 = vadd.f32 0.0, %v464
      %v466 = vpop.f32.mrf.mxu0
      %467 = vmatprep.mubr.bf16.mxu0 0
      %468 = vmatmul.mubr.bf16.gmra.mxu0 %v363
      %v469 = vpop.f32.mrf.mxu0
      %v470 = vadd.f32 0.0, %v469
      %v471 = vpop.f32.mrf.mxu0
      %v472 = vpop.f32.mrf.mxu0
      %v473 = vadd.f32 0.0, %v472
      %v474 = vpop.f32.mrf.mxu0
      %475 = vmatprep.mubr.bf16.mxu0 0
      %476 = vmatmul.mubr.bf16.gmra.mxu0 %v366
      %v477 = vpop.f32.mrf.mxu0
      %v478 = vadd.f32 0.0, %v477
      %v479 = vpop.f32.mrf.mxu0
      %v480 = vpop.f32.mrf.mxu0
      %v481 = vadd.f32 0.0, %v480
      %v482 = vpop.f32.mrf.mxu0
      %483 = vmatprep.mubr.bf16.mxu0 0
      %484 = vmatmul.mubr.bf16.gmra.mxu0 %v369
      %v485 = vpop.f32.mrf.mxu0
      %v486 = vadd.f32 0.0, %v485
      %v487 = vpop.f32.mrf.mxu0
      %v488 = vpop.f32.mrf.mxu0
      %v489 = vadd.f32 0.0, %v488
      %v490 = vpop.f32.mrf.mxu0
      %491 = vmatprep.mubr.bf16.mxu0 0
      %492 = vmatmul.mubr.bf16.gmra.mxu0 %v372
      %v493 = vpop.f32.mrf.mxu0
      %v494 = vadd.f32 0.0, %v493
      %v495 = vpop.f32.mrf.mxu0
      %v496 = vpop.f32.mrf.mxu0
      %v497 = vadd.f32 0.0, %v496
      %v498 = vpop.f32.mrf.mxu0
      %499 = vmatprep.mubr.bf16.mxu0 0
      %500 = vmatmul.mubr.bf16.gmra.mxu0 %v375
      %v501 = vpop.f32.mrf.mxu0
      %v502 = vadd.f32 0.0, %v501
      %v503 = vpop.f32.mrf.mxu0
      %v504 = vpop.f32.mrf.mxu0
      %v505 = vadd.f32 0.0, %v504
      %v506 = vpop.f32.mrf.mxu0
      %507 = vmatprep.mubr.bf16.mxu0 0
      %508 = vmatmul.mubr.bf16.gmra.mxu0 %v378
      %v509 = vpop.f32.mrf.mxu0
      %v510 = vadd.f32 0.0, %v509
      %v511 = vpop.f32.mrf.mxu0
      %v512 = vpop.f32.mrf.mxu0
      %v513 = vadd.f32 0.0, %v512
      %v514 = vpop.f32.mrf.mxu0
      %515 = vmatprep.mubr.bf16.mxu0 0
      %516 = vmatmul.mubr.bf16.gmra.mxu0 %v381
      %v517 = vpop.f32.mrf.mxu0
      %v518 = vadd.f32 0.0, %v517
      %v519 = vpop.f32.mrf.mxu0
      %v520 = vpop.f32.mrf.mxu0
      %v521 = vadd.f32 0.0, %v520
      %v522 = vpop.f32.mrf.mxu0
      %523 = vmatprep.mubr.bf16.mxu0 0
      %524 = vmatmul.mubr.bf16.gmra.mxu0 %v384
      %v525 = vpop.f32.mrf.mxu0
      %v526 = vadd.f32 0.0, %v525
      %v527 = vpop.f32.mrf.mxu0
      %v528 = vpop.f32.mrf.mxu0
      %v529 = vadd.f32 0.0, %v528
      %v530 = vpop.f32.mrf.mxu0
      %531 = vmatprep.mubr.bf16.mxu0 0
      %532 = vmatmul.mubr.bf16.gmra.mxu0 %v387
      %v533 = vpop.f32.mrf.mxu0
      %v534 = vadd.f32 0.0, %v533
      %v535 = vpop.f32.mrf.mxu0
      %v536 = vpop.f32.mrf.mxu0
      %v537 = vadd.f32 0.0, %v536
      %v538 = vpop.f32.mrf.mxu0
      %539 = vmatprep.mubr.bf16.mxu0 0
      %540 = vmatmul.mubr.bf16.gmra.mxu0 %v390
      %v541 = vpop.f32.mrf.mxu0
      %v542 = vadd.f32 0.0, %v541
      %v543 = vpop.f32.mrf.mxu0
      %v544 = vpop.f32.mrf.mxu0
      %v545 = vadd.f32 0.0, %v544
      %v546 = vpop.f32.mrf.mxu0
      %547 = vmatprep.mubr.bf16.mxu0 0
      %548 = vmatmul.mubr.bf16.gmra.mxu0 %v393
      %v549 = vpop.f32.mrf.mxu0
      %v550 = vadd.f32 0.0, %v549
      %v551 = vpop.f32.mrf.mxu0
      %v552 = vpop.f32.mrf.mxu0
      %v553 = vadd.f32 0.0, %v552
      %v554 = vpop.f32.mrf.mxu0
      %555 = vmatprep.mubr.bf16.mxu0 0
      %556 = vmatmul.mubr.bf16.gmra.mxu0 %v396
      %v557 = vpop.f32.mrf.mxu0
      %v558 = vadd.f32 0.0, %v557
      %v559 = vpop.f32.mrf.mxu0
      %v560 = vpop.f32.mrf.mxu0
      %v561 = vadd.f32 0.0, %v560
      %v562 = vpop.f32.mrf.mxu0
      %563 = vmatprep.mubr.bf16.mxu0 0
      %564 = vmatmul.mubr.bf16.gmra.mxu0 %v399
      %v565 = vpop.f32.mrf.mxu0
      %v566 = vadd.f32 0.0, %v565
      %v567 = vpop.f32.mrf.mxu0
      %v568 = vpop.f32.mrf.mxu0
      %v569 = vadd.f32 0.0, %v568
      %v570 = vpop.f32.mrf.mxu0
      %571 = vmatprep.mubr.bf16.mxu0 0
      %572 = vmatmul.mubr.bf16.gmra.mxu0 %v402
      %v573 = vpop.f32.mrf.mxu0
      %v574 = vadd.f32 0.0, %v573
      %v575 = vpop.f32.mrf.mxu0
      %v576 = vpop.f32.mrf.mxu0
      %v577 = vadd.f32 0.0, %v576
      %v578 = vpop.f32.mrf.mxu0
      %579 = vmatprep.mubr.bf16.mxu0 0
      %580 = vmatmul.mubr.bf16.gmra.mxu0 %v405
      %v581 = vpop.f32.mrf.mxu0
      %v582 = vadd.f32 0.0, %v581
      %v583 = vpop.f32.mrf.mxu0
      %v584 = vpop.f32.mrf.mxu0
      %v585 = vadd.f32 0.0, %v584
      %v586 = vpop.f32.mrf.mxu0
      %587 = vdwg.mxu0
      %v588 = vadd.f32 %v295, %v446
      %v589 = vadd.f32 %v295, %v449
      %v590 = vadd.f32 %v295, %v454
      %v591 = vadd.f32 %v295, %v457
      %v592 = vadd.f32 %v295, %v462
      %v593 = vadd.f32 %v295, %v465
      %v594 = vadd.f32 %v295, %v470
      %v595 = vadd.f32 %v295, %v473
      %v596 = vadd.f32 %v295, %v478
      %v597 = vadd.f32 %v295, %v481
      %v598 = vadd.f32 %v295, %v486
      %v599 = vadd.f32 %v295, %v489
      %v600 = vadd.f32 %v295, %v494
      %v601 = vadd.f32 %v295, %v497
      %v602 = vadd.f32 %v295, %v502
      %v603 = vadd.f32 %v295, %v505
      %v604 = vadd.f32 %v295, %v510
      %v605 = vadd.f32 %v295, %v513
      %v606 = vadd.f32 %v295, %v518
      %v607 = vadd.f32 %v295, %v521
      %v608 = vadd.f32 %v295, %v526
      %v609 = vadd.f32 %v295, %v529
      %v610 = vadd.f32 %v295, %v534
      %v611 = vadd.f32 %v295, %v537
      %v612 = vadd.f32 %v295, %v542
      %v613 = vadd.f32 %v295, %v545
      %v614 = vadd.f32 %v295, %v550
      %v615 = vadd.f32 %v295, %v553
      %v616 = vadd.f32 %v295, %v558
      %v617 = vadd.f32 %v295, %v561
      %v618 = vadd.f32 %v295, %v566
      %v619 = vadd.f32 %v295, %v569
      %v620 = vadd.f32 %v295, %v574
      %v621 = vadd.f32 %v295, %v577
      %v622 = vadd.f32 %v295, %v582
      %v623 = vadd.f32 %v295, %v585
      %v624 = vld [vmem:[%s265 + $0x1] sm:$0xff]
      %v625 = vld [vmem:[%s265 + $0x9] sm:$0xff]
      %v626 = vld [vmem:[%s265 + $0x11] sm:$0xff]
      %v627 = vld [vmem:[%s265 + $0x19] sm:$0xff]
      %v628 = vld [vmem:[%s265 + $0x21] sm:$0xff]
      %v629 = vld [vmem:[%s265 + $0x29] sm:$0xff]
      %v630 = vld [vmem:[%s265 + $0x31] sm:$0xff]
      %v631 = vld [vmem:[%s265 + $0x39] sm:$0xff]
      %v632 = vld [vmem:[%s265 + $0x41] sm:$0xff]
      %v633 = vld [vmem:[%s265 + $0x49] sm:$0xff]
      %v634 = vld [vmem:[%s265 + $0x51] sm:$0xff]
      %v635 = vld [vmem:[%s265 + $0x59] sm:$0xff]
      %v636 = vld [vmem:[%s265 + $0x61] sm:$0xff]
      %v637 = vld [vmem:[%s265 + $0x69] sm:$0xff]
      %v638 = vld [vmem:[%s265 + $0x71] sm:$0xff]
      %v639 = vld [vmem:[%s265 + $0x79] sm:$0xff]
      %v640 = vld [vmem:[%s265 + $0x81] sm:$0xff]
      %v641 = vld [vmem:[%s265 + $0x89] sm:$0xff]
      %v642 = vld [vmem:[%s265 + $0x91] sm:$0xff]
      %v643 = vld [vmem:[%s265 + $0x99] sm:$0xff]
      %v644 = vld [vmem:[%s265 + $0xa1] sm:$0xff]
      %v645 = vld [vmem:[%s265 + $0xa9] sm:$0xff]
      %v646 = vld [vmem:[%s265 + $0xb1] sm:$0xff]
      %v647 = vld [vmem:[%s265 + $0xb9] sm:$0xff]
      %v648 = vld [vmem:[%s265 + $0xc1] sm:$0xff]
      %v649 = vld [vmem:[%s265 + $0xc9] sm:$0xff]
      %v650 = vld [vmem:[%s265 + $0xd1] sm:$0xff]
      %v651 = vld [vmem:[%s265 + $0xd9] sm:$0xff]
      %v652 = vld [vmem:[%s265 + $0xe1] sm:$0xff]
      %v653 = vld [vmem:[%s265 + $0xe9] sm:$0xff]
      %v654 = vld [vmem:[%s265 + $0xf1] sm:$0xff]
      %v655 = vld [vmem:[%s265 + $0xf9] sm:$0xff]
      %v656 = vld [vmem:[%s265 + $0x101] sm:$0xff]
      %v657 = vld [vmem:[%s265 + $0x109] sm:$0xff]
      %v658 = vld [vmem:[%s265 + $0x111] sm:$0xff]
      %v659 = vld [vmem:[%s265 + $0x119] sm:$0xff]
      %v660 = vpack.c.bf16 %v625, %v624
      %v661 = vpack.c.bf16 %v627, %v626
      %v662 = vpack.c.bf16 %v629, %v628
      %v663 = vpack.c.bf16 %v631, %v630
      %v664 = vpack.c.bf16 %v633, %v632
      %v665 = vpack.c.bf16 %v635, %v634
      %v666 = vpack.c.bf16 %v637, %v636
      %v667 = vpack.c.bf16 %v639, %v638
      %v668 = vpack.c.bf16 %v641, %v640
      %v669 = vpack.c.bf16 %v643, %v642
      %v670 = vpack.c.bf16 %v645, %v644
      %v671 = vpack.c.bf16 %v647, %v646
      %v672 = vpack.c.bf16 %v649, %v648
      %v673 = vpack.c.bf16 %v651, %v650
      %v674 = vpack.c.bf16 %v653, %v652
      %v675 = vpack.c.bf16 %v655, %v654
      %v676 = vpack.c.bf16 %v657, %v656
      %v677 = vpack.c.bf16 %v659, %v658
      %s678 = scalar_lea.vmem %s1, 2
      %v679 = vld [vmem:[%s678] sm:$0x3]
      %v681 = vsel %vm352, %v660, 0
      %v684 = vsel %vm352, %v661, 0
      %v687 = vsel %vm352, %v662, 0
      %v690 = vsel %vm352, %v663, 0
      %v693 = vsel %vm352, %v664, 0
      %v696 = vsel %vm352, %v665, 0
      %v699 = vsel %vm352, %v666, 0
      %v702 = vsel %vm352, %v667, 0
      %v705 = vsel %vm352, %v668, 0
      %v708 = vsel %vm352, %v669, 0
      %v711 = vsel %vm352, %v670, 0
      %v714 = vsel %vm352, %v671, 0
      %v717 = vsel %vm352, %v672, 0
      %v720 = vsel %vm352, %v673, 0
      %v723 = vsel %vm352, %v674, 0
      %v726 = vsel %vm352, %v675, 0
      %v729 = vsel %vm352, %v676, 0
      %v732 = vsel %vm352, %v677, 0
      %v735 = vsel %vm407, %v679, 0
      %737 = vmatprep.subr.bf16.mxu0 0
      %738 = vmatpush1.bf16.msra.mxu0 0
      %739 = vmatprep.subr.bf16.mxu0 0
      %740 = vmatpush1.bf16.msra.mxu0 0
      %741 = vmatprep.subr.bf16.mxu0 0
      %742 = vmatpush1.bf16.msra.mxu0 0
      %743 = vmatprep.subr.bf16.mxu0 0
      %744 = vmatpush1.bf16.msra.mxu0 0
      %745 = vmatprep.subr.bf16.mxu0 0
      %746 = vmatpush1.bf16.msra.mxu0 0
      %747 = vmatprep.subr.bf16.mxu0 0
      %748 = vmatpush1.bf16.msra.mxu0 0
      %749 = vmatprep.subr.bf16.mxu0 0
      %750 = vmatpush1.bf16.msra.mxu0 0
      %751 = vmatprep.subr.bf16.mxu0 0
      %752 = vmatpush1.bf16.msra.mxu0 %v735
      %753 = vmatprep.subr.bf16.mxu0 0
      %754 = vmatpush2.bf16.msra.mxu0 0
      %755 = vmatprep.subr.bf16.mxu0 0
      %756 = vmatpush2.bf16.msra.mxu0 0
      %757 = vmatprep.subr.bf16.mxu0 0
      %758 = vmatpush2.bf16.msra.mxu0 0
      %759 = vmatprep.subr.bf16.mxu0 0
      %760 = vmatpush2.bf16.msra.mxu0 0
      %761 = vmatprep.subr.bf16.mxu0 0
      %762 = vmatpush2.bf16.msra.mxu0 0
      %763 = vmatprep.subr.bf16.mxu0 0
      %764 = vmatpush2.bf16.msra.mxu0 0
      %765 = vmatprep.subr.bf16.mxu0 0
      %766 = vmatpush2.bf16.msra.mxu0 0
      %767 = vmatprep.subr.bf16.mxu0 0
      %768 = vmatpush2.bf16.msra.mxu0 0
      %769 = vmatprep.mubr.bf16.mxu0 0
      %770 = vmatmul.mubr.bf16.gmra.mxu0 %v681
      %v771 = vpop.f32.mrf.mxu0
      %v772 = vadd.f32 0.0, %v771
      %v773 = vpop.f32.mrf.mxu0
      %v774 = vpop.f32.mrf.mxu0
      %v775 = vadd.f32 0.0, %v774
      %v776 = vpop.f32.mrf.mxu0
      %777 = vmatprep.mubr.bf16.mxu0 0
      %778 = vmatmul.mubr.bf16.gmra.mxu0 %v684
      %v779 = vpop.f32.mrf.mxu0
      %v780 = vadd.f32 0.0, %v779
      %v781 = vpop.f32.mrf.mxu0
      %v782 = vpop.f32.mrf.mxu0
      %v783 = vadd.f32 0.0, %v782
      %v784 = vpop.f32.mrf.mxu0
      %785 = vmatprep.mubr.bf16.mxu0 0
      %786 = vmatmul.mubr.bf16.gmra.mxu0 %v687
      %v787 = vpop.f32.mrf.mxu0
      %v788 = vadd.f32 0.0, %v787
      %v789 = vpop.f32.mrf.mxu0
      %v790 = vpop.f32.mrf.mxu0
      %v791 = vadd.f32 0.0, %v790
      %v792 = vpop.f32.mrf.mxu0
      %793 = vmatprep.mubr.bf16.mxu0 0
      %794 = vmatmul.mubr.bf16.gmra.mxu0 %v690
      %v795 = vpop.f32.mrf.mxu0
      %v796 = vadd.f32 0.0, %v795
      %v797 = vpop.f32.mrf.mxu0
      %v798 = vpop.f32.mrf.mxu0
      %v799 = vadd.f32 0.0, %v798
      %v800 = vpop.f32.mrf.mxu0
      %801 = vmatprep.mubr.bf16.mxu0 0
      %802 = vmatmul.mubr.bf16.gmra.mxu0 %v693
      %v803 = vpop.f32.mrf.mxu0
      %v804 = vadd.f32 0.0, %v803
      %v805 = vpop.f32.mrf.mxu0
      %v806 = vpop.f32.mrf.mxu0
      %v807 = vadd.f32 0.0, %v806
      %v808 = vpop.f32.mrf.mxu0
      %809 = vmatprep.mubr.bf16.mxu0 0
      %810 = vmatmul.mubr.bf16.gmra.mxu0 %v696
      %v811 = vpop.f32.mrf.mxu0
      %v812 = vadd.f32 0.0, %v811
      %v813 = vpop.f32.mrf.mxu0
      %v814 = vpop.f32.mrf.mxu0
      %v815 = vadd.f32 0.0, %v814
      %v816 = vpop.f32.mrf.mxu0
      %817 = vmatprep.mubr.bf16.mxu0 0
      %818 = vmatmul.mubr.bf16.gmra.mxu0 %v699
      %v819 = vpop.f32.mrf.mxu0
      %v820 = vadd.f32 0.0, %v819
      %v821 = vpop.f32.mrf.mxu0
      %v822 = vpop.f32.mrf.mxu0
      %v823 = vadd.f32 0.0, %v822
      %v824 = vpop.f32.mrf.mxu0
      %825 = vmatprep.mubr.bf16.mxu0 0
      %826 = vmatmul.mubr.bf16.gmra.mxu0 %v702
      %v827 = vpop.f32.mrf.mxu0
      %v828 = vadd.f32 0.0, %v827
      %v829 = vpop.f32.mrf.mxu0
      %v830 = vpop.f32.mrf.mxu0
      %v831 = vadd.f32 0.0, %v830
      %v832 = vpop.f32.mrf.mxu0
      %833 = vmatprep.mubr.bf16.mxu0 0
      %834 = vmatmul.mubr.bf16.gmra.mxu0 %v705
      %v835 = vpop.f32.mrf.mxu0
      %v836 = vadd.f32 0.0, %v835
      %v837 = vpop.f32.mrf.mxu0
      %v838 = vpop.f32.mrf.mxu0
      %v839 = vadd.f32 0.0, %v838
      %v840 = vpop.f32.mrf.mxu0
      %841 = vmatprep.mubr.bf16.mxu0 0
      %842 = vmatmul.mubr.bf16.gmra.mxu0 %v708
      %v843 = vpop.f32.mrf.mxu0
      %v844 = vadd.f32 0.0, %v843
      %v845 = vpop.f32.mrf.mxu0
      %v846 = vpop.f32.mrf.mxu0
      %v847 = vadd.f32 0.0, %v846
      %v848 = vpop.f32.mrf.mxu0
      %849 = vmatprep.mubr.bf16.mxu0 0
      %850 = vmatmul.mubr.bf16.gmra.mxu0 %v711
      %v851 = vpop.f32.mrf.mxu0
      %v852 = vadd.f32 0.0, %v851
      %v853 = vpop.f32.mrf.mxu0
      %v854 = vpop.f32.mrf.mxu0
      %v855 = vadd.f32 0.0, %v854
      %v856 = vpop.f32.mrf.mxu0
      %857 = vmatprep.mubr.bf16.mxu0 0
      %858 = vmatmul.mubr.bf16.gmra.mxu0 %v714
      %v859 = vpop.f32.mrf.mxu0
      %v860 = vadd.f32 0.0, %v859
      %v861 = vpop.f32.mrf.mxu0
      %v862 = vpop.f32.mrf.mxu0
      %v863 = vadd.f32 0.0, %v862
      %v864 = vpop.f32.mrf.mxu0
      %865 = vmatprep.mubr.bf16.mxu0 0
      %866 = vmatmul.mubr.bf16.gmra.mxu0 %v717
      %v867 = vpop.f32.mrf.mxu0
      %v868 = vadd.f32 0.0, %v867
      %v869 = vpop.f32.mrf.mxu0
      %v870 = vpop.f32.mrf.mxu0
      %v871 = vadd.f32 0.0, %v870
      %v872 = vpop.f32.mrf.mxu0
      %873 = vmatprep.mubr.bf16.mxu0 0
      %874 = vmatmul.mubr.bf16.gmra.mxu0 %v720
      %v875 = vpop.f32.mrf.mxu0
      %v876 = vadd.f32 0.0, %v875
      %v877 = vpop.f32.mrf.mxu0
      %v878 = vpop.f32.mrf.mxu0
      %v879 = vadd.f32 0.0, %v878
      %v880 = vpop.f32.mrf.mxu0
      %881 = vmatprep.mubr.bf16.mxu0 0
      %882 = vmatmul.mubr.bf16.gmra.mxu0 %v723
      %v883 = vpop.f32.mrf.mxu0
      %v884 = vadd.f32 0.0, %v883
      %v885 = vpop.f32.mrf.mxu0
      %v886 = vpop.f32.mrf.mxu0
      %v887 = vadd.f32 0.0, %v886
      %v888 = vpop.f32.mrf.mxu0
      %889 = vmatprep.mubr.bf16.mxu0 0
      %890 = vmatmul.mubr.bf16.gmra.mxu0 %v726
      %v891 = vpop.f32.mrf.mxu0
      %v892 = vadd.f32 0.0, %v891
      %v893 = vpop.f32.mrf.mxu0
      %v894 = vpop.f32.mrf.mxu0
      %v895 = vadd.f32 0.0, %v894
      %v896 = vpop.f32.mrf.mxu0
      %897 = vmatprep.mubr.bf16.mxu0 0
      %898 = vmatmul.mubr.bf16.gmra.mxu0 %v729
      %v899 = vpop.f32.mrf.mxu0
      %v900 = vadd.f32 0.0, %v899
      %v901 = vpop.f32.mrf.mxu0
      %v902 = vpop.f32.mrf.mxu0
      %v903 = vadd.f32 0.0, %v902
      %v904 = vpop.f32.mrf.mxu0
      %905 = vmatprep.mubr.bf16.mxu0 0
      %906 = vmatmul.mubr.bf16.gmra.mxu0 %v732
      %v907 = vpop.f32.mrf.mxu0
      %v908 = vadd.f32 0.0, %v907
      %v909 = vpop.f32.mrf.mxu0
      %v910 = vpop.f32.mrf.mxu0
      %v911 = vadd.f32 0.0, %v910
      %v912 = vpop.f32.mrf.mxu0
      %913 = vdwg.mxu0
      %v914 = vadd.f32 %v588, %v772
      %v915 = vadd.f32 %v589, %v775
      %v916 = vadd.f32 %v590, %v780
      %v917 = vadd.f32 %v591, %v783
      %v918 = vadd.f32 %v592, %v788
      %v919 = vadd.f32 %v593, %v791
      %v920 = vadd.f32 %v594, %v796
      %v921 = vadd.f32 %v595, %v799
      %v922 = vadd.f32 %v596, %v804
      %v923 = vadd.f32 %v597, %v807
      %v924 = vadd.f32 %v598, %v812
      %v925 = vadd.f32 %v599, %v815
      %v926 = vadd.f32 %v600, %v820
      %v927 = vadd.f32 %v601, %v823
      %v928 = vadd.f32 %v602, %v828
      %v929 = vadd.f32 %v603, %v831
      %v930 = vadd.f32 %v604, %v836
      %v931 = vadd.f32 %v605, %v839
      %v932 = vadd.f32 %v606, %v844
      %v933 = vadd.f32 %v607, %v847
      %v934 = vadd.f32 %v608, %v852
      %v935 = vadd.f32 %v609, %v855
      %v936 = vadd.f32 %v610, %v860
      %v937 = vadd.f32 %v611, %v863
      %v938 = vadd.f32 %v612, %v868
      %v939 = vadd.f32 %v613, %v871
      %v940 = vadd.f32 %v614, %v876
      %v941 = vadd.f32 %v615, %v879
      %v942 = vadd.f32 %v616, %v884
      %v943 = vadd.f32 %v617, %v887
      %v944 = vadd.f32 %v618, %v892
      %v945 = vadd.f32 %v619, %v895
      %v946 = vadd.f32 %v620, %v900
      %v947 = vadd.f32 %v621, %v903
      %v948 = vadd.f32 %v622, %v908
      %v949 = vadd.f32 %v623, %v911
      %v950 = vld [vmem:[%s265 + $0x2] sm:$0xff]
      %v951 = vld [vmem:[%s265 + $0xa] sm:$0xff]
      %v952 = vld [vmem:[%s265 + $0x12] sm:$0xff]
      %v953 = vld [vmem:[%s265 + $0x1a] sm:$0xff]
      %v954 = vld [vmem:[%s265 + $0x22] sm:$0xff]
      %v955 = vld [vmem:[%s265 + $0x2a] sm:$0xff]
      %v956 = vld [vmem:[%s265 + $0x32] sm:$0xff]
      %v957 = vld [vmem:[%s265 + $0x3a] sm:$0xff]
      %v958 = vld [vmem:[%s265 + $0x42] sm:$0xff]
      %v959 = vld [vmem:[%s265 + $0x4a] sm:$0xff]
      %v960 = vld [vmem:[%s265 + $0x52] sm:$0xff]
      %v961 = vld [vmem:[%s265 + $0x5a] sm:$0xff]
      %v962 = vld [vmem:[%s265 + $0x62] sm:$0xff]
      %v963 = vld [vmem:[%s265 + $0x6a] sm:$0xff]
      %v964 = vld [vmem:[%s265 + $0x72] sm:$0xff]
      %v965 = vld [vmem:[%s265 + $0x7a] sm:$0xff]
      %v966 = vld [vmem:[%s265 + $0x82] sm:$0xff]
      %v967 = vld [vmem:[%s265 + $0x8a] sm:$0xff]
      %v968 = vld [vmem:[%s265 + $0x92] sm:$0xff]
      %v969 = vld [vmem:[%s265 + $0x9a] sm:$0xff]
      %v970 = vld [vmem:[%s265 + $0xa2] sm:$0xff]
      %v971 = vld [vmem:[%s265 + $0xaa] sm:$0xff]
      %v972 = vld [vmem:[%s265 + $0xb2] sm:$0xff]
      %v973 = vld [vmem:[%s265 + $0xba] sm:$0xff]
      %v974 = vld [vmem:[%s265 + $0xc2] sm:$0xff]
      %v975 = vld [vmem:[%s265 + $0xca] sm:$0xff]
      %v976 = vld [vmem:[%s265 + $0xd2] sm:$0xff]
      %v977 = vld [vmem:[%s265 + $0xda] sm:$0xff]
      %v978 = vld [vmem:[%s265 + $0xe2] sm:$0xff]
      %v979 = vld [vmem:[%s265 + $0xea] sm:$0xff]
      %v980 = vld [vmem:[%s265 + $0xf2] sm:$0xff]
      %v981 = vld [vmem:[%s265 + $0xfa] sm:$0xff]
      %v982 = vld [vmem:[%s265 + $0x102] sm:$0xff]
      %v983 = vld [vmem:[%s265 + $0x10a] sm:$0xff]
      %v984 = vld [vmem:[%s265 + $0x112] sm:$0xff]
      %v985 = vld [vmem:[%s265 + $0x11a] sm:$0xff]
      %v986 = vpack.c.bf16 %v951, %v950
      %v987 = vpack.c.bf16 %v953, %v952
      %v988 = vpack.c.bf16 %v955, %v954
      %v989 = vpack.c.bf16 %v957, %v956
      %v990 = vpack.c.bf16 %v959, %v958
      %v991 = vpack.c.bf16 %v961, %v960
      %v992 = vpack.c.bf16 %v963, %v962
      %v993 = vpack.c.bf16 %v965, %v964
      %v994 = vpack.c.bf16 %v967, %v966
      %v995 = vpack.c.bf16 %v969, %v968
      %v996 = vpack.c.bf16 %v971, %v970
      %v997 = vpack.c.bf16 %v973, %v972
      %v998 = vpack.c.bf16 %v975, %v974
      %v999 = vpack.c.bf16 %v977, %v976
      %v1000 = vpack.c.bf16 %v979, %v978
      %v1001 = vpack.c.bf16 %v981, %v980
      %v1002 = vpack.c.bf16 %v983, %v982
      %v1003 = vpack.c.bf16 %v985, %v984
      %s1004 = scalar_lea.vmem %s1, 4
      %v1005 = vld [vmem:[%s1004] sm:$0x3]
      %v1007 = vsel %vm352, %v986, 0
      %v1010 = vsel %vm352, %v987, 0
      %v1013 = vsel %vm352, %v988, 0
      %v1016 = vsel %vm352, %v989, 0
      %v1019 = vsel %vm352, %v990, 0
      %v1022 = vsel %vm352, %v991, 0
      %v1025 = vsel %vm352, %v992, 0
      %v1028 = vsel %vm352, %v993, 0
      %v1031 = vsel %vm352, %v994, 0
      %v1034 = vsel %vm352, %v995, 0
      %v1037 = vsel %vm352, %v996, 0
      %v1040 = vsel %vm352, %v997, 0
      %v1043 = vsel %vm352, %v998, 0
      %v1046 = vsel %vm352, %v999, 0
      %v1049 = vsel %vm352, %v1000, 0
      %v1052 = vsel %vm352, %v1001, 0
      %v1055 = vsel %vm352, %v1002, 0
      %v1058 = vsel %vm352, %v1003, 0
      %v1061 = vsel %vm407, %v1005, 0
      %1063 = vmatprep.subr.bf16.mxu0 0
      %1064 = vmatpush1.bf16.msra.mxu0 0
      %1065 = vmatprep.subr.bf16.mxu0 0
      %1066 = vmatpush1.bf16.msra.mxu0 0
      %1067 = vmatprep.subr.bf16.mxu0 0
      %1068 = vmatpush1.bf16.msra.mxu0 0
      %1069 = vmatprep.subr.bf16.mxu0 0
      %1070 = vmatpush1.bf16.msra.mxu0 0
      %1071 = vmatprep.subr.bf16.mxu0 0
      %1072 = vmatpush1.bf16.msra.mxu0 0
      %1073 = vmatprep.subr.bf16.mxu0 0
      %1074 = vmatpush1.bf16.msra.mxu0 0
      %1075 = vmatprep.subr.bf16.mxu0 0
      %1076 = vmatpush1.bf16.msra.mxu0 0
      %1077 = vmatprep.subr.bf16.mxu0 0
      %1078 = vmatpush1.bf16.msra.mxu0 %v1061
      %1079 = vmatprep.subr.bf16.mxu0 0
      %1080 = vmatpush2.bf16.msra.mxu0 0
      %1081 = vmatprep.subr.bf16.mxu0 0
      %1082 = vmatpush2.bf16.msra.mxu0 0
      %1083 = vmatprep.subr.bf16.mxu0 0
      %1084 = vmatpush2.bf16.msra.mxu0 0
      %1085 = vmatprep.subr.bf16.mxu0 0
      %1086 = vmatpush2.bf16.msra.mxu0 0
      %1087 = vmatprep.subr.bf16.mxu0 0
      %1088 = vmatpush2.bf16.msra.mxu0 0
      %1089 = vmatprep.subr.bf16.mxu0 0
      %1090 = vmatpush2.bf16.msra.mxu0 0
      %1091 = vmatprep.subr.bf16.mxu0 0
      %1092 = vmatpush2.bf16.msra.mxu0 0
      %1093 = vmatprep.subr.bf16.mxu0 0
      %1094 = vmatpush2.bf16.msra.mxu0 0
      %1095 = vmatprep.mubr.bf16.mxu0 0
      %1096 = vmatmul.mubr.bf16.gmra.mxu0 %v1007
      %v1097 = vpop.f32.mrf.mxu0
      %v1098 = vadd.f32 0.0, %v1097
      %v1099 = vpop.f32.mrf.mxu0
      %v1100 = vpop.f32.mrf.mxu0
      %v1101 = vadd.f32 0.0, %v1100
      %v1102 = vpop.f32.mrf.mxu0
      %1103 = vmatprep.mubr.bf16.mxu0 0
      %1104 = vmatmul.mubr.bf16.gmra.mxu0 %v1010
      %v1105 = vpop.f32.mrf.mxu0
      %v1106 = vadd.f32 0.0, %v1105
      %v1107 = vpop.f32.mrf.mxu0
      %v1108 = vpop.f32.mrf.mxu0
      %v1109 = vadd.f32 0.0, %v1108
      %v1110 = vpop.f32.mrf.mxu0
      %1111 = vmatprep.mubr.bf16.mxu0 0
      %1112 = vmatmul.mubr.bf16.gmra.mxu0 %v1013
      %v1113 = vpop.f32.mrf.mxu0
      %v1114 = vadd.f32 0.0, %v1113
      %v1115 = vpop.f32.mrf.mxu0
      %v1116 = vpop.f32.mrf.mxu0
      %v1117 = vadd.f32 0.0, %v1116
      %v1118 = vpop.f32.mrf.mxu0
      %1119 = vmatprep.mubr.bf16.mxu0 0
      %1120 = vmatmul.mubr.bf16.gmra.mxu0 %v1016
      %v1121 = vpop.f32.mrf.mxu0
      %v1122 = vadd.f32 0.0, %v1121
      %v1123 = vpop.f32.mrf.mxu0
      %v1124 = vpop.f32.mrf.mxu0
      %v1125 = vadd.f32 0.0, %v1124
      %v1126 = vpop.f32.mrf.mxu0
      %1127 = vmatprep.mubr.bf16.mxu0 0
      %1128 = vmatmul.mubr.bf16.gmra.mxu0 %v1019
      %v1129 = vpop.f32.mrf.mxu0
      %v1130 = vadd.f32 0.0, %v1129
      %v1131 = vpop.f32.mrf.mxu0
      %v1132 = vpop.f32.mrf.mxu0
      %v1133 = vadd.f32 0.0, %v1132
      %v1134 = vpop.f32.mrf.mxu0
      %1135 = vmatprep.mubr.bf16.mxu0 0
      %1136 = vmatmul.mubr.bf16.gmra.mxu0 %v1022
      %v1137 = vpop.f32.mrf.mxu0
      %v1138 = vadd.f32 0.0, %v1137
      %v1139 = vpop.f32.mrf.mxu0
      %v1140 = vpop.f32.mrf.mxu0
      %v1141 = vadd.f32 0.0, %v1140
      %v1142 = vpop.f32.mrf.mxu0
      %1143 = vmatprep.mubr.bf16.mxu0 0
      %1144 = vmatmul.mubr.bf16.gmra.mxu0 %v1025
      %v1145 = vpop.f32.mrf.mxu0
      %v1146 = vadd.f32 0.0, %v1145
      %v1147 = vpop.f32.mrf.mxu0
      %v1148 = vpop.f32.mrf.mxu0
      %v1149 = vadd.f32 0.0, %v1148
      %v1150 = vpop.f32.mrf.mxu0
      %1151 = vmatprep.mubr.bf16.mxu0 0
      %1152 = vmatmul.mubr.bf16.gmra.mxu0 %v1028
      %v1153 = vpop.f32.mrf.mxu0
      %v1154 = vadd.f32 0.0, %v1153
      %v1155 = vpop.f32.mrf.mxu0
      %v1156 = vpop.f32.mrf.mxu0
      %v1157 = vadd.f32 0.0, %v1156
      %v1158 = vpop.f32.mrf.mxu0
      %1159 = vmatprep.mubr.bf16.mxu0 0
      %1160 = vmatmul.mubr.bf16.gmra.mxu0 %v1031
      %v1161 = vpop.f32.mrf.mxu0
      %v1162 = vadd.f32 0.0, %v1161
      %v1163 = vpop.f32.mrf.mxu0
      %v1164 = vpop.f32.mrf.mxu0
      %v1165 = vadd.f32 0.0, %v1164
      %v1166 = vpop.f32.mrf.mxu0
      %1167 = vmatprep.mubr.bf16.mxu0 0
      %1168 = vmatmul.mubr.bf16.gmra.mxu0 %v1034
      %v1169 = vpop.f32.mrf.mxu0
      %v1170 = vadd.f32 0.0, %v1169
      %v1171 = vpop.f32.mrf.mxu0
      %v1172 = vpop.f32.mrf.mxu0
      %v1173 = vadd.f32 0.0, %v1172
      %v1174 = vpop.f32.mrf.mxu0
      %1175 = vmatprep.mubr.bf16.mxu0 0
      %1176 = vmatmul.mubr.bf16.gmra.mxu0 %v1037
      %v1177 = vpop.f32.mrf.mxu0
      %v1178 = vadd.f32 0.0, %v1177
      %v1179 = vpop.f32.mrf.mxu0
      %v1180 = vpop.f32.mrf.mxu0
      %v1181 = vadd.f32 0.0, %v1180
      %v1182 = vpop.f32.mrf.mxu0
      %1183 = vmatprep.mubr.bf16.mxu0 0
      %1184 = vmatmul.mubr.bf16.gmra.mxu0 %v1040
      %v1185 = vpop.f32.mrf.mxu0
      %v1186 = vadd.f32 0.0, %v1185
      %v1187 = vpop.f32.mrf.mxu0
      %v1188 = vpop.f32.mrf.mxu0
      %v1189 = vadd.f32 0.0, %v1188
      %v1190 = vpop.f32.mrf.mxu0
      %1191 = vmatprep.mubr.bf16.mxu0 0
      %1192 = vmatmul.mubr.bf16.gmra.mxu0 %v1043
      %v1193 = vpop.f32.mrf.mxu0
      %v1194 = vadd.f32 0.0, %v1193
      %v1195 = vpop.f32.mrf.mxu0
      %v1196 = vpop.f32.mrf.mxu0
      %v1197 = vadd.f32 0.0, %v1196
      %v1198 = vpop.f32.mrf.mxu0
      %1199 = vmatprep.mubr.bf16.mxu0 0
      %1200 = vmatmul.mubr.bf16.gmra.mxu0 %v1046
      %v1201 = vpop.f32.mrf.mxu0
      %v1202 = vadd.f32 0.0, %v1201
      %v1203 = vpop.f32.mrf.mxu0
      %v1204 = vpop.f32.mrf.mxu0
      %v1205 = vadd.f32 0.0, %v1204
      %v1206 = vpop.f32.mrf.mxu0
      %1207 = vmatprep.mubr.bf16.mxu0 0
      %1208 = vmatmul.mubr.bf16.gmra.mxu0 %v1049
      %v1209 = vpop.f32.mrf.mxu0
      %v1210 = vadd.f32 0.0, %v1209
      %v1211 = vpop.f32.mrf.mxu0
      %v1212 = vpop.f32.mrf.mxu0
      %v1213 = vadd.f32 0.0, %v1212
      %v1214 = vpop.f32.mrf.mxu0
      %1215 = vmatprep.mubr.bf16.mxu0 0
      %1216 = vmatmul.mubr.bf16.gmra.mxu0 %v1052
      %v1217 = vpop.f32.mrf.mxu0
      %v1218 = vadd.f32 0.0, %v1217
      %v1219 = vpop.f32.mrf.mxu0
      %v1220 = vpop.f32.mrf.mxu0
      %v1221 = vadd.f32 0.0, %v1220
      %v1222 = vpop.f32.mrf.mxu0
      %1223 = vmatprep.mubr.bf16.mxu0 0
      %1224 = vmatmul.mubr.bf16.gmra.mxu0 %v1055
      %v1225 = vpop.f32.mrf.mxu0
      %v1226 = vadd.f32 0.0, %v1225
      %v1227 = vpop.f32.mrf.mxu0
      %v1228 = vpop.f32.mrf.mxu0
      %v1229 = vadd.f32 0.0, %v1228
      %v1230 = vpop.f32.mrf.mxu0
      %1231 = vmatprep.mubr.bf16.mxu0 0
      %1232 = vmatmul.mubr.bf16.gmra.mxu0 %v1058
      %v1233 = vpop.f32.mrf.mxu0
      %v1234 = vadd.f32 0.0, %v1233
      %v1235 = vpop.f32.mrf.mxu0
      %v1236 = vpop.f32.mrf.mxu0
      %v1237 = vadd.f32 0.0, %v1236
      %v1238 = vpop.f32.mrf.mxu0
      %1239 = vdwg.mxu0
      %v1240 = vadd.f32 %v914, %v1098
      %v1241 = vadd.f32 %v915, %v1101
      %v1242 = vadd.f32 %v916, %v1106
      %v1243 = vadd.f32 %v917, %v1109
      %v1244 = vadd.f32 %v918, %v1114
      %v1245 = vadd.f32 %v919, %v1117
      %v1246 = vadd.f32 %v920, %v1122
      %v1247 = vadd.f32 %v921, %v1125
      %v1248 = vadd.f32 %v922, %v1130
      %v1249 = vadd.f32 %v923, %v1133
      %v1250 = vadd.f32 %v924, %v1138
      %v1251 = vadd.f32 %v925, %v1141
      %v1252 = vadd.f32 %v926, %v1146
      %v1253 = vadd.f32 %v927, %v1149
      %v1254 = vadd.f32 %v928, %v1154
      %v1255 = vadd.f32 %v929, %v1157
      %v1256 = vadd.f32 %v930, %v1162
      %v1257 = vadd.f32 %v931, %v1165
      %v1258 = vadd.f32 %v932, %v1170
      %v1259 = vadd.f32 %v933, %v1173
      %v1260 = vadd.f32 %v934, %v1178
      %v1261 = vadd.f32 %v935, %v1181
      %v1262 = vadd.f32 %v936, %v1186
      %v1263 = vadd.f32 %v937, %v1189
      %v1264 = vadd.f32 %v938, %v1194
      %v1265 = vadd.f32 %v939, %v1197
      %v1266 = vadd.f32 %v940, %v1202
      %v1267 = vadd.f32 %v941, %v1205
      %v1268 = vadd.f32 %v942, %v1210
      %v1269 = vadd.f32 %v943, %v1213
      %v1270 = vadd.f32 %v944, %v1218
      %v1271 = vadd.f32 %v945, %v1221
      %v1272 = vadd.f32 %v946, %v1226
      %v1273 = vadd.f32 %v947, %v1229
      %v1274 = vadd.f32 %v948, %v1234
      %v1275 = vadd.f32 %v949, %v1237
      %v1276 = vld [vmem:[%s265 + $0x12] sm:$0xff]
      %v1277 = vld [vmem:[%s265 + $0x1a] sm:$0xff]
      %v1278 = vld [vmem:[%s265 + $0x22] sm:$0xff]
      %v1279 = vld [vmem:[%s265 + $0x2a] sm:$0xff]
      %v1280 = vld [vmem:[%s265 + $0x32] sm:$0xff]
      %v1281 = vld [vmem:[%s265 + $0x3a] sm:$0xff]
      %v1282 = vld [vmem:[%s265 + $0x42] sm:$0xff]
      %v1283 = vld [vmem:[%s265 + $0x4a] sm:$0xff]
      %v1284 = vld [vmem:[%s265 + $0x52] sm:$0xff]
      %v1285 = vld [vmem:[%s265 + $0x5a] sm:$0xff]
      %v1286 = vld [vmem:[%s265 + $0x62] sm:$0xff]
      %v1287 = vld [vmem:[%s265 + $0x6a] sm:$0xff]
      %v1288 = vld [vmem:[%s265 + $0x72] sm:$0xff]
      %v1289 = vld [vmem:[%s265 + $0x7a] sm:$0xff]
      %v1290 = vld [vmem:[%s265 + $0x82] sm:$0xff]
      %v1291 = vld [vmem:[%s265 + $0x8a] sm:$0xff]
      %v1292 = vld [vmem:[%s265 + $0x92] sm:$0xff]
      %v1293 = vld [vmem:[%s265 + $0x9a] sm:$0xff]
      %v1294 = vld [vmem:[%s265 + $0xa2] sm:$0xff]
      %v1295 = vld [vmem:[%s265 + $0xaa] sm:$0xff]
      %v1296 = vld [vmem:[%s265 + $0xb2] sm:$0xff]
      %v1297 = vld [vmem:[%s265 + $0xba] sm:$0xff]
      %v1298 = vld [vmem:[%s265 + $0xc2] sm:$0xff]
      %v1299 = vld [vmem:[%s265 + $0xca] sm:$0xff]
      %v1300 = vld [vmem:[%s265 + $0xd2] sm:$0xff]
      %v1301 = vld [vmem:[%s265 + $0xda] sm:$0xff]
      %v1302 = vld [vmem:[%s265 + $0xe2] sm:$0xff]
      %v1303 = vld [vmem:[%s265 + $0xea] sm:$0xff]
      %v1304 = vld [vmem:[%s265 + $0xf2] sm:$0xff]
      %v1305 = vld [vmem:[%s265 + $0xfa] sm:$0xff]
      %v1306 = vld [vmem:[%s265 + $0x102] sm:$0xff]
      %v1307 = vld [vmem:[%s265 + $0x10a] sm:$0xff]
      %v1308 = vld [vmem:[%s265 + $0x112] sm:$0xff]
      %v1309 = vld [vmem:[%s265 + $0x11a] sm:$0xff]
      %v1310 = vld [vmem:[%s265 + $0x122] sm:$0xff]
      %v1311 = vld [vmem:[%s265 + $0x12a] sm:$0xff]
      %v1312 = vpack.c.bf16 %v1277, %v1276
      %v1313 = vpack.c.bf16 %v1279, %v1278
      %v1314 = vpack.c.bf16 %v1281, %v1280
      %v1315 = vpack.c.bf16 %v1283, %v1282
      %v1316 = vpack.c.bf16 %v1285, %v1284
      %v1317 = vpack.c.bf16 %v1287, %v1286
      %v1318 = vpack.c.bf16 %v1289, %v1288
      %v1319 = vpack.c.bf16 %v1291, %v1290
      %v1320 = vpack.c.bf16 %v1293, %v1292
      %v1321 = vpack.c.bf16 %v1295, %v1294
      %v1322 = vpack.c.bf16 %v1297, %v1296
      %v1323 = vpack.c.bf16 %v1299, %v1298
      %v1324 = vpack.c.bf16 %v1301, %v1300
      %v1325 = vpack.c.bf16 %v1303, %v1302
      %v1326 = vpack.c.bf16 %v1305, %v1304
      %v1327 = vpack.c.bf16 %v1307, %v1306
      %v1328 = vpack.c.bf16 %v1309, %v1308
      %v1329 = vpack.c.bf16 %v1311, %v1310
      %s1330 = scalar_lea.vmem %s1, 6
      %v1331 = vld [vmem:[%s1330] sm:$0x3]
      %v1333 = vsel %vm352, %v1312, 0
      %v1336 = vsel %vm352, %v1313, 0
      %v1339 = vsel %vm352, %v1314, 0
      %v1342 = vsel %vm352, %v1315, 0
      %v1345 = vsel %vm352, %v1316, 0
      %v1348 = vsel %vm352, %v1317, 0
      %v1351 = vsel %vm352, %v1318, 0
      %v1354 = vsel %vm352, %v1319, 0
      %v1357 = vsel %vm352, %v1320, 0
      %v1360 = vsel %vm352, %v1321, 0
      %v1363 = vsel %vm352, %v1322, 0
      %v1366 = vsel %vm352, %v1323, 0
      %v1369 = vsel %vm352, %v1324, 0
      %v1372 = vsel %vm352, %v1325, 0
      %v1375 = vsel %vm352, %v1326, 0
      %v1378 = vsel %vm352, %v1327, 0
      %v1381 = vsel %vm352, %v1328, 0
      %v1384 = vsel %vm352, %v1329, 0
      %v1387 = vsel %vm407, %v1331, 0
      %1389 = vmatprep.subr.bf16.mxu0 0
      %1390 = vmatpush1.bf16.msra.mxu0 0
      %1391 = vmatprep.subr.bf16.mxu0 0
      %1392 = vmatpush1.bf16.msra.mxu0 0
      %1393 = vmatprep.subr.bf16.mxu0 0
      %1394 = vmatpush1.bf16.msra.mxu0 0
      %1395 = vmatprep.subr.bf16.mxu0 0
      %1396 = vmatpush1.bf16.msra.mxu0 0
      %1397 = vmatprep.subr.bf16.mxu0 0
      %1398 = vmatpush1.bf16.msra.mxu0 0
      %1399 = vmatprep.subr.bf16.mxu0 0
      %1400 = vmatpush1.bf16.msra.mxu0 0
      %1401 = vmatprep.subr.bf16.mxu0 0
      %1402 = vmatpush1.bf16.msra.mxu0 0
      %1403 = vmatprep.subr.bf16.mxu0 0
      %1404 = vmatpush1.bf16.msra.mxu0 %v1387
      %1405 = vmatprep.subr.bf16.mxu0 0
      %1406 = vmatpush2.bf16.msra.mxu0 0
      %1407 = vmatprep.subr.bf16.mxu0 0
      %1408 = vmatpush2.bf16.msra.mxu0 0
      %1409 = vmatprep.subr.bf16.mxu0 0
      %1410 = vmatpush2.bf16.msra.mxu0 0
      %1411 = vmatprep.subr.bf16.mxu0 0
      %1412 = vmatpush2.bf16.msra.mxu0 0
      %1413 = vmatprep.subr.bf16.mxu0 0
      %1414 = vmatpush2.bf16.msra.mxu0 0
      %1415 = vmatprep.subr.bf16.mxu0 0
      %1416 = vmatpush2.bf16.msra.mxu0 0
      %1417 = vmatprep.subr.bf16.mxu0 0
      %1418 = vmatpush2.bf16.msra.mxu0 0
      %1419 = vmatprep.subr.bf16.mxu0 0
      %1420 = vmatpush2.bf16.msra.mxu0 0
      %1421 = vmatprep.mubr.bf16.mxu0 0
      %1422 = vmatmul.mubr.bf16.gmra.mxu0 %v1333
      %v1423 = vpop.f32.mrf.mxu0
      %v1424 = vadd.f32 0.0, %v1423
      %v1425 = vpop.f32.mrf.mxu0
      %v1426 = vpop.f32.mrf.mxu0
      %v1427 = vadd.f32 0.0, %v1426
      %v1428 = vpop.f32.mrf.mxu0
      %1429 = vmatprep.mubr.bf16.mxu0 0
      %1430 = vmatmul.mubr.bf16.gmra.mxu0 %v1336
      %v1431 = vpop.f32.mrf.mxu0
      %v1432 = vadd.f32 0.0, %v1431
      %v1433 = vpop.f32.mrf.mxu0
      %v1434 = vpop.f32.mrf.mxu0
      %v1435 = vadd.f32 0.0, %v1434
      %v1436 = vpop.f32.mrf.mxu0
      %1437 = vmatprep.mubr.bf16.mxu0 0
      %1438 = vmatmul.mubr.bf16.gmra.mxu0 %v1339
      %v1439 = vpop.f32.mrf.mxu0
      %v1440 = vadd.f32 0.0, %v1439
      %v1441 = vpop.f32.mrf.mxu0
      %v1442 = vpop.f32.mrf.mxu0
      %v1443 = vadd.f32 0.0, %v1442
      %v1444 = vpop.f32.mrf.mxu0
      %1445 = vmatprep.mubr.bf16.mxu0 0
      %1446 = vmatmul.mubr.bf16.gmra.mxu0 %v1342
      %v1447 = vpop.f32.mrf.mxu0
      %v1448 = vadd.f32 0.0, %v1447
      %v1449 = vpop.f32.mrf.mxu0
      %v1450 = vpop.f32.mrf.mxu0
      %v1451 = vadd.f32 0.0, %v1450
      %v1452 = vpop.f32.mrf.mxu0
      %1453 = vmatprep.mubr.bf16.mxu0 0
      %1454 = vmatmul.mubr.bf16.gmra.mxu0 %v1345
      %v1455 = vpop.f32.mrf.mxu0
      %v1456 = vadd.f32 0.0, %v1455
      %v1457 = vpop.f32.mrf.mxu0
      %v1458 = vpop.f32.mrf.mxu0
      %v1459 = vadd.f32 0.0, %v1458
      %v1460 = vpop.f32.mrf.mxu0
      %1461 = vmatprep.mubr.bf16.mxu0 0
      %1462 = vmatmul.mubr.bf16.gmra.mxu0 %v1348
      %v1463 = vpop.f32.mrf.mxu0
      %v1464 = vadd.f32 0.0, %v1463
      %v1465 = vpop.f32.mrf.mxu0
      %v1466 = vpop.f32.mrf.mxu0
      %v1467 = vadd.f32 0.0, %v1466
      %v1468 = vpop.f32.mrf.mxu0
      %1469 = vmatprep.mubr.bf16.mxu0 0
      %1470 = vmatmul.mubr.bf16.gmra.mxu0 %v1351
      %v1471 = vpop.f32.mrf.mxu0
      %v1472 = vadd.f32 0.0, %v1471
      %v1473 = vpop.f32.mrf.mxu0
      %v1474 = vpop.f32.mrf.mxu0
      %v1475 = vadd.f32 0.0, %v1474
      %v1476 = vpop.f32.mrf.mxu0
      %1477 = vmatprep.mubr.bf16.mxu0 0
      %1478 = vmatmul.mubr.bf16.gmra.mxu0 %v1354
      %v1479 = vpop.f32.mrf.mxu0
      %v1480 = vadd.f32 0.0, %v1479
      %v1481 = vpop.f32.mrf.mxu0
      %v1482 = vpop.f32.mrf.mxu0
      %v1483 = vadd.f32 0.0, %v1482
      %v1484 = vpop.f32.mrf.mxu0
      %1485 = vmatprep.mubr.bf16.mxu0 0
      %1486 = vmatmul.mubr.bf16.gmra.mxu0 %v1357
      %v1487 = vpop.f32.mrf.mxu0
      %v1488 = vadd.f32 0.0, %v1487
      %v1489 = vpop.f32.mrf.mxu0
      %v1490 = vpop.f32.mrf.mxu0
      %v1491 = vadd.f32 0.0, %v1490
      %v1492 = vpop.f32.mrf.mxu0
      %1493 = vmatprep.mubr.bf16.mxu0 0
      %1494 = vmatmul.mubr.bf16.gmra.mxu0 %v1360
      %v1495 = vpop.f32.mrf.mxu0
      %v1496 = vadd.f32 0.0, %v1495
      %v1497 = vpop.f32.mrf.mxu0
      %v1498 = vpop.f32.mrf.mxu0
      %v1499 = vadd.f32 0.0, %v1498
      %v1500 = vpop.f32.mrf.mxu0
      %1501 = vmatprep.mubr.bf16.mxu0 0
      %1502 = vmatmul.mubr.bf16.gmra.mxu0 %v1363
      %v1503 = vpop.f32.mrf.mxu0
      %v1504 = vadd.f32 0.0, %v1503
      %v1505 = vpop.f32.mrf.mxu0
      %v1506 = vpop.f32.mrf.mxu0
      %v1507 = vadd.f32 0.0, %v1506
      %v1508 = vpop.f32.mrf.mxu0
      %1509 = vmatprep.mubr.bf16.mxu0 0
      %1510 = vmatmul.mubr.bf16.gmra.mxu0 %v1366
      %v1511 = vpop.f32.mrf.mxu0
      %v1512 = vadd.f32 0.0, %v1511
      %v1513 = vpop.f32.mrf.mxu0
      %v1514 = vpop.f32.mrf.mxu0
      %v1515 = vadd.f32 0.0, %v1514
      %v1516 = vpop.f32.mrf.mxu0
      %1517 = vmatprep.mubr.bf16.mxu0 0
      %1518 = vmatmul.mubr.bf16.gmra.mxu0 %v1369
      %v1519 = vpop.f32.mrf.mxu0
      %v1520 = vadd.f32 0.0, %v1519
      %v1521 = vpop.f32.mrf.mxu0
      %v1522 = vpop.f32.mrf.mxu0
      %v1523 = vadd.f32 0.0, %v1522
      %v1524 = vpop.f32.mrf.mxu0
      %1525 = vmatprep.mubr.bf16.mxu0 0
      %1526 = vmatmul.mubr.bf16.gmra.mxu0 %v1372
      %v1527 = vpop.f32.mrf.mxu0
      %v1528 = vadd.f32 0.0, %v1527
      %v1529 = vpop.f32.mrf.mxu0
      %v1530 = vpop.f32.mrf.mxu0
      %v1531 = vadd.f32 0.0, %v1530
      %v1532 = vpop.f32.mrf.mxu0
      %1533 = vmatprep.mubr.bf16.mxu0 0
      %1534 = vmatmul.mubr.bf16.gmra.mxu0 %v1375
      %v1535 = vpop.f32.mrf.mxu0
      %v1536 = vadd.f32 0.0, %v1535
      %v1537 = vpop.f32.mrf.mxu0
      %v1538 = vpop.f32.mrf.mxu0
      %v1539 = vadd.f32 0.0, %v1538
      %v1540 = vpop.f32.mrf.mxu0
      %1541 = vmatprep.mubr.bf16.mxu0 0
      %1542 = vmatmul.mubr.bf16.gmra.mxu0 %v1378
      %v1543 = vpop.f32.mrf.mxu0
      %v1544 = vadd.f32 0.0, %v1543
      %v1545 = vpop.f32.mrf.mxu0
      %v1546 = vpop.f32.mrf.mxu0
      %v1547 = vadd.f32 0.0, %v1546
      %v1548 = vpop.f32.mrf.mxu0
      %1549 = vmatprep.mubr.bf16.mxu0 0
      %1550 = vmatmul.mubr.bf16.gmra.mxu0 %v1381
      %v1551 = vpop.f32.mrf.mxu0
      %v1552 = vadd.f32 0.0, %v1551
      %v1553 = vpop.f32.mrf.mxu0
      %v1554 = vpop.f32.mrf.mxu0
      %v1555 = vadd.f32 0.0, %v1554
      %v1556 = vpop.f32.mrf.mxu0
      %1557 = vmatprep.mubr.bf16.mxu0 0
      %1558 = vmatmul.mubr.bf16.gmra.mxu0 %v1384
      %v1559 = vpop.f32.mrf.mxu0
      %v1560 = vadd.f32 0.0, %v1559
      %v1561 = vpop.f32.mrf.mxu0
      %v1562 = vpop.f32.mrf.mxu0
      %v1563 = vadd.f32 0.0, %v1562
      %v1564 = vpop.f32.mrf.mxu0
      %1565 = vdwg.mxu0
      %v1566 = vadd.f32 %v1240, %v1424
      %v1567 = vadd.f32 %v1241, %v1427
      %v1568 = vadd.f32 %v1242, %v1432
      %v1569 = vadd.f32 %v1243, %v1435
      %v1570 = vadd.f32 %v1244, %v1440
      %v1571 = vadd.f32 %v1245, %v1443
      %v1572 = vadd.f32 %v1246, %v1448
      %v1573 = vadd.f32 %v1247, %v1451
      %v1574 = vadd.f32 %v1248, %v1456
      %v1575 = vadd.f32 %v1249, %v1459
      %v1576 = vadd.f32 %v1250, %v1464
      %v1577 = vadd.f32 %v1251, %v1467
      %v1578 = vadd.f32 %v1252, %v1472
      %v1579 = vadd.f32 %v1253, %v1475
      %v1580 = vadd.f32 %v1254, %v1480
      %v1581 = vadd.f32 %v1255, %v1483
      %v1582 = vadd.f32 %v1256, %v1488
      %v1583 = vadd.f32 %v1257, %v1491
      %v1584 = vadd.f32 %v1258, %v1496
      %v1585 = vadd.f32 %v1259, %v1499
      %v1586 = vadd.f32 %v1260, %v1504
      %v1587 = vadd.f32 %v1261, %v1507
      %v1588 = vadd.f32 %v1262, %v1512
      %v1589 = vadd.f32 %v1263, %v1515
      %v1590 = vadd.f32 %v1264, %v1520
      %v1591 = vadd.f32 %v1265, %v1523
      %v1592 = vadd.f32 %v1266, %v1528
      %v1593 = vadd.f32 %v1267, %v1531
      %v1594 = vadd.f32 %v1268, %v1536
      %v1595 = vadd.f32 %v1269, %v1539
      %v1596 = vadd.f32 %v1270, %v1544
      %v1597 = vadd.f32 %v1271, %v1547
      %v1598 = vadd.f32 %v1272, %v1552
      %v1599 = vadd.f32 %v1273, %v1555
      %v1600 = vadd.f32 %v1274, %v1560
      %v1601 = vadd.f32 %v1275, %v1563
      %v1602 = vld [vmem:[%s265 + $0x13] sm:$0xff]
      %v1603 = vld [vmem:[%s265 + $0x1b] sm:$0xff]
      %v1604 = vld [vmem:[%s265 + $0x23] sm:$0xff]
      %v1605 = vld [vmem:[%s265 + $0x2b] sm:$0xff]
      %v1606 = vld [vmem:[%s265 + $0x33] sm:$0xff]
      %v1607 = vld [vmem:[%s265 + $0x3b] sm:$0xff]
      %v1608 = vld [vmem:[%s265 + $0x43] sm:$0xff]
      %v1609 = vld [vmem:[%s265 + $0x4b] sm:$0xff]
      %v1610 = vld [vmem:[%s265 + $0x53] sm:$0xff]
      %v1611 = vld [vmem:[%s265 + $0x5b] sm:$0xff]
      %v1612 = vld [vmem:[%s265 + $0x63] sm:$0xff]
      %v1613 = vld [vmem:[%s265 + $0x6b] sm:$0xff]
      %v1614 = vld [vmem:[%s265 + $0x73] sm:$0xff]
      %v1615 = vld [vmem:[%s265 + $0x7b] sm:$0xff]
      %v1616 = vld [vmem:[%s265 + $0x83] sm:$0xff]
      %v1617 = vld [vmem:[%s265 + $0x8b] sm:$0xff]
      %v1618 = vld [vmem:[%s265 + $0x93] sm:$0xff]
      %v1619 = vld [vmem:[%s265 + $0x9b] sm:$0xff]
      %v1620 = vld [vmem:[%s265 + $0xa3] sm:$0xff]
      %v1621 = vld [vmem:[%s265 + $0xab] sm:$0xff]
      %v1622 = vld [vmem:[%s265 + $0xb3] sm:$0xff]
      %v1623 = vld [vmem:[%s265 + $0xbb] sm:$0xff]
      %v1624 = vld [vmem:[%s265 + $0xc3] sm:$0xff]
      %v1625 = vld [vmem:[%s265 + $0xcb] sm:$0xff]
      %v1626 = vld [vmem:[%s265 + $0xd3] sm:$0xff]
      %v1627 = vld [vmem:[%s265 + $0xdb] sm:$0xff]
      %v1628 = vld [vmem:[%s265 + $0xe3] sm:$0xff]
      %v1629 = vld [vmem:[%s265 + $0xeb] sm:$0xff]
      %v1630 = vld [vmem:[%s265 + $0xf3] sm:$0xff]
      %v1631 = vld [vmem:[%s265 + $0xfb] sm:$0xff]
      %v1632 = vld [vmem:[%s265 + $0x103] sm:$0xff]
      %v1633 = vld [vmem:[%s265 + $0x10b] sm:$0xff]
      %v1634 = vld [vmem:[%s265 + $0x113] sm:$0xff]
      %v1635 = vld [vmem:[%s265 + $0x11b] sm:$0xff]
      %v1636 = vld [vmem:[%s265 + $0x123] sm:$0xff]
      %v1637 = vld [vmem:[%s265 + $0x12b] sm:$0xff]
      %v1638 = vpack.c.bf16 %v1603, %v1602
      %v1639 = vpack.c.bf16 %v1605, %v1604
      %v1640 = vpack.c.bf16 %v1607, %v1606
      %v1641 = vpack.c.bf16 %v1609, %v1608
      %v1642 = vpack.c.bf16 %v1611, %v1610
      %v1643 = vpack.c.bf16 %v1613, %v1612
      %v1644 = vpack.c.bf16 %v1615, %v1614
      %v1645 = vpack.c.bf16 %v1617, %v1616
      %v1646 = vpack.c.bf16 %v1619, %v1618
      %v1647 = vpack.c.bf16 %v1621, %v1620
      %v1648 = vpack.c.bf16 %v1623, %v1622
      %v1649 = vpack.c.bf16 %v1625, %v1624
      %v1650 = vpack.c.bf16 %v1627, %v1626
      %v1651 = vpack.c.bf16 %v1629, %v1628
      %v1652 = vpack.c.bf16 %v1631, %v1630
      %v1653 = vpack.c.bf16 %v1633, %v1632
      %v1654 = vpack.c.bf16 %v1635, %v1634
      %v1655 = vpack.c.bf16 %v1637, %v1636
      %s1656 = scalar_lea.vmem %s1, 8
      %v1657 = vld [vmem:[%s1656] sm:$0x3]
      %v1659 = vsel %vm352, %v1638, 0
      %v1662 = vsel %vm352, %v1639, 0
      %v1665 = vsel %vm352, %v1640, 0
      %v1668 = vsel %vm352, %v1641, 0
      %v1671 = vsel %vm352, %v1642, 0
      %v1674 = vsel %vm352, %v1643, 0
      %v1677 = vsel %vm352, %v1644, 0
      %v1680 = vsel %vm352, %v1645, 0
      %v1683 = vsel %vm352, %v1646, 0
      %v1686 = vsel %vm352, %v1647, 0
      %v1689 = vsel %vm352, %v1648, 0
      %v1692 = vsel %vm352, %v1649, 0
      %v1695 = vsel %vm352, %v1650, 0
      %v1698 = vsel %vm352, %v1651, 0
      %v1701 = vsel %vm352, %v1652, 0
      %v1704 = vsel %vm352, %v1653, 0
      %v1707 = vsel %vm352, %v1654, 0
      %v1710 = vsel %vm352, %v1655, 0
      %v1713 = vsel %vm407, %v1657, 0
      %1715 = vmatprep.subr.bf16.mxu0 0
      %1716 = vmatpush1.bf16.msra.mxu0 0
      %1717 = vmatprep.subr.bf16.mxu0 0
      %1718 = vmatpush1.bf16.msra.mxu0 0
      %1719 = vmatprep.subr.bf16.mxu0 0
      %1720 = vmatpush1.bf16.msra.mxu0 0
      %1721 = vmatprep.subr.bf16.mxu0 0
      %1722 = vmatpush1.bf16.msra.mxu0 0
      %1723 = vmatprep.subr.bf16.mxu0 0
      %1724 = vmatpush1.bf16.msra.mxu0 0
      %1725 = vmatprep.subr.bf16.mxu0 0
      %1726 = vmatpush1.bf16.msra.mxu0 0
      %1727 = vmatprep.subr.bf16.mxu0 0
      %1728 = vmatpush1.bf16.msra.mxu0 0
      %1729 = vmatprep.subr.bf16.mxu0 0
      %1730 = vmatpush1.bf16.msra.mxu0 %v1713
      %1731 = vmatprep.subr.bf16.mxu0 0
      %1732 = vmatpush2.bf16.msra.mxu0 0
      %1733 = vmatprep.subr.bf16.mxu0 0
      %1734 = vmatpush2.bf16.msra.mxu0 0
      %1735 = vmatprep.subr.bf16.mxu0 0
      %1736 = vmatpush2.bf16.msra.mxu0 0
      %1737 = vmatprep.subr.bf16.mxu0 0
      %1738 = vmatpush2.bf16.msra.mxu0 0
      %1739 = vmatprep.subr.bf16.mxu0 0
      %1740 = vmatpush2.bf16.msra.mxu0 0
      %1741 = vmatprep.subr.bf16.mxu0 0
      %1742 = vmatpush2.bf16.msra.mxu0 0
      %1743 = vmatprep.subr.bf16.mxu0 0
      %1744 = vmatpush2.bf16.msra.mxu0 0
      %1745 = vmatprep.subr.bf16.mxu0 0
      %1746 = vmatpush2.bf16.msra.mxu0 0
      %1747 = vmatprep.mubr.bf16.mxu0 0
      %1748 = vmatmul.mubr.bf16.gmra.mxu0 %v1659
      %v1749 = vpop.f32.mrf.mxu0
      %v1750 = vadd.f32 0.0, %v1749
      %v1751 = vpop.f32.mrf.mxu0
      %v1752 = vpop.f32.mrf.mxu0
      %v1753 = vadd.f32 0.0, %v1752
      %v1754 = vpop.f32.mrf.mxu0
      %1755 = vmatprep.mubr.bf16.mxu0 0
      %1756 = vmatmul.mubr.bf16.gmra.mxu0 %v1662
      %v1757 = vpop.f32.mrf.mxu0
      %v1758 = vadd.f32 0.0, %v1757
      %v1759 = vpop.f32.mrf.mxu0
      %v1760 = vpop.f32.mrf.mxu0
      %v1761 = vadd.f32 0.0, %v1760
      %v1762 = vpop.f32.mrf.mxu0
      %1763 = vmatprep.mubr.bf16.mxu0 0
      %1764 = vmatmul.mubr.bf16.gmra.mxu0 %v1665
      %v1765 = vpop.f32.mrf.mxu0
      %v1766 = vadd.f32 0.0, %v1765
      %v1767 = vpop.f32.mrf.mxu0
      %v1768 = vpop.f32.mrf.mxu0
      %v1769 = vadd.f32 0.0, %v1768
      %v1770 = vpop.f32.mrf.mxu0
      %1771 = vmatprep.mubr.bf16.mxu0 0
      %1772 = vmatmul.mubr.bf16.gmra.mxu0 %v1668
      %v1773 = vpop.f32.mrf.mxu0
      %v1774 = vadd.f32 0.0, %v1773
      %v1775 = vpop.f32.mrf.mxu0
      %v1776 = vpop.f32.mrf.mxu0
      %v1777 = vadd.f32 0.0, %v1776
      %v1778 = vpop.f32.mrf.mxu0
      %1779 = vmatprep.mubr.bf16.mxu0 0
      %1780 = vmatmul.mubr.bf16.gmra.mxu0 %v1671
      %v1781 = vpop.f32.mrf.mxu0
      %v1782 = vadd.f32 0.0, %v1781
      %v1783 = vpop.f32.mrf.mxu0
      %v1784 = vpop.f32.mrf.mxu0
      %v1785 = vadd.f32 0.0, %v1784
      %v1786 = vpop.f32.mrf.mxu0
      %1787 = vmatprep.mubr.bf16.mxu0 0
      %1788 = vmatmul.mubr.bf16.gmra.mxu0 %v1674
      %v1789 = vpop.f32.mrf.mxu0
      %v1790 = vadd.f32 0.0, %v1789
      %v1791 = vpop.f32.mrf.mxu0
      %v1792 = vpop.f32.mrf.mxu0
      %v1793 = vadd.f32 0.0, %v1792
      %v1794 = vpop.f32.mrf.mxu0
      %1795 = vmatprep.mubr.bf16.mxu0 0
      %1796 = vmatmul.mubr.bf16.gmra.mxu0 %v1677
      %v1797 = vpop.f32.mrf.mxu0
      %v1798 = vadd.f32 0.0, %v1797
      %v1799 = vpop.f32.mrf.mxu0
      %v1800 = vpop.f32.mrf.mxu0
      %v1801 = vadd.f32 0.0, %v1800
      %v1802 = vpop.f32.mrf.mxu0
      %1803 = vmatprep.mubr.bf16.mxu0 0
      %1804 = vmatmul.mubr.bf16.gmra.mxu0 %v1680
      %v1805 = vpop.f32.mrf.mxu0
      %v1806 = vadd.f32 0.0, %v1805
      %v1807 = vpop.f32.mrf.mxu0
      %v1808 = vpop.f32.mrf.mxu0
      %v1809 = vadd.f32 0.0, %v1808
      %v1810 = vpop.f32.mrf.mxu0
      %1811 = vmatprep.mubr.bf16.mxu0 0
      %1812 = vmatmul.mubr.bf16.gmra.mxu0 %v1683
      %v1813 = vpop.f32.mrf.mxu0
      %v1814 = vadd.f32 0.0, %v1813
      %v1815 = vpop.f32.mrf.mxu0
      %v1816 = vpop.f32.mrf.mxu0
      %v1817 = vadd.f32 0.0, %v1816
      %v1818 = vpop.f32.mrf.mxu0
      %1819 = vmatprep.mubr.bf16.mxu0 0
      %1820 = vmatmul.mubr.bf16.gmra.mxu0 %v1686
      %v1821 = vpop.f32.mrf.mxu0
      %v1822 = vadd.f32 0.0, %v1821
      %v1823 = vpop.f32.mrf.mxu0
      %v1824 = vpop.f32.mrf.mxu0
      %v1825 = vadd.f32 0.0, %v1824
      %v1826 = vpop.f32.mrf.mxu0
      %1827 = vmatprep.mubr.bf16.mxu0 0
      %1828 = vmatmul.mubr.bf16.gmra.mxu0 %v1689
      %v1829 = vpop.f32.mrf.mxu0
      %v1830 = vadd.f32 0.0, %v1829
      %v1831 = vpop.f32.mrf.mxu0
      %v1832 = vpop.f32.mrf.mxu0
      %v1833 = vadd.f32 0.0, %v1832
      %v1834 = vpop.f32.mrf.mxu0
      %1835 = vmatprep.mubr.bf16.mxu0 0
      %1836 = vmatmul.mubr.bf16.gmra.mxu0 %v1692
      %v1837 = vpop.f32.mrf.mxu0
      %v1838 = vadd.f32 0.0, %v1837
      %v1839 = vpop.f32.mrf.mxu0
      %v1840 = vpop.f32.mrf.mxu0
      %v1841 = vadd.f32 0.0, %v1840
      %v1842 = vpop.f32.mrf.mxu0
      %1843 = vmatprep.mubr.bf16.mxu0 0
      %1844 = vmatmul.mubr.bf16.gmra.mxu0 %v1695
      %v1845 = vpop.f32.mrf.mxu0
      %v1846 = vadd.f32 0.0, %v1845
      %v1847 = vpop.f32.mrf.mxu0
      %v1848 = vpop.f32.mrf.mxu0
      %v1849 = vadd.f32 0.0, %v1848
      %v1850 = vpop.f32.mrf.mxu0
      %1851 = vmatprep.mubr.bf16.mxu0 0
      %1852 = vmatmul.mubr.bf16.gmra.mxu0 %v1698
      %v1853 = vpop.f32.mrf.mxu0
      %v1854 = vadd.f32 0.0, %v1853
      %v1855 = vpop.f32.mrf.mxu0
      %v1856 = vpop.f32.mrf.mxu0
      %v1857 = vadd.f32 0.0, %v1856
      %v1858 = vpop.f32.mrf.mxu0
      %1859 = vmatprep.mubr.bf16.mxu0 0
      %1860 = vmatmul.mubr.bf16.gmra.mxu0 %v1701
      %v1861 = vpop.f32.mrf.mxu0
      %v1862 = vadd.f32 0.0, %v1861
      %v1863 = vpop.f32.mrf.mxu0
      %v1864 = vpop.f32.mrf.mxu0
      %v1865 = vadd.f32 0.0, %v1864
      %v1866 = vpop.f32.mrf.mxu0
      %1867 = vmatprep.mubr.bf16.mxu0 0
      %1868 = vmatmul.mubr.bf16.gmra.mxu0 %v1704
      %v1869 = vpop.f32.mrf.mxu0
      %v1870 = vadd.f32 0.0, %v1869
      %v1871 = vpop.f32.mrf.mxu0
      %v1872 = vpop.f32.mrf.mxu0
      %v1873 = vadd.f32 0.0, %v1872
      %v1874 = vpop.f32.mrf.mxu0
      %1875 = vmatprep.mubr.bf16.mxu0 0
      %1876 = vmatmul.mubr.bf16.gmra.mxu0 %v1707
      %v1877 = vpop.f32.mrf.mxu0
      %v1878 = vadd.f32 0.0, %v1877
      %v1879 = vpop.f32.mrf.mxu0
      %v1880 = vpop.f32.mrf.mxu0
      %v1881 = vadd.f32 0.0, %v1880
      %v1882 = vpop.f32.mrf.mxu0
      %1883 = vmatprep.mubr.bf16.mxu0 0
      %1884 = vmatmul.mubr.bf16.gmra.mxu0 %v1710
      %v1885 = vpop.f32.mrf.mxu0
      %v1886 = vadd.f32 0.0, %v1885
      %v1887 = vpop.f32.mrf.mxu0
      %v1888 = vpop.f32.mrf.mxu0
      %v1889 = vadd.f32 0.0, %v1888
      %v1890 = vpop.f32.mrf.mxu0
      %1891 = vdwg.mxu0
      %v1892 = vadd.f32 %v1566, %v1750
      %v1893 = vadd.f32 %v1567, %v1753
      %v1894 = vadd.f32 %v1568, %v1758
      %v1895 = vadd.f32 %v1569, %v1761
      %v1896 = vadd.f32 %v1570, %v1766
      %v1897 = vadd.f32 %v1571, %v1769
      %v1898 = vadd.f32 %v1572, %v1774
      %v1899 = vadd.f32 %v1573, %v1777
      %v1900 = vadd.f32 %v1574, %v1782
      %v1901 = vadd.f32 %v1575, %v1785
      %v1902 = vadd.f32 %v1576, %v1790
      %v1903 = vadd.f32 %v1577, %v1793
      %v1904 = vadd.f32 %v1578, %v1798
      %v1905 = vadd.f32 %v1579, %v1801
      %v1906 = vadd.f32 %v1580, %v1806
      %v1907 = vadd.f32 %v1581, %v1809
      %v1908 = vadd.f32 %v1582, %v1814
      %v1909 = vadd.f32 %v1583, %v1817
      %v1910 = vadd.f32 %v1584, %v1822
      %v1911 = vadd.f32 %v1585, %v1825
      %v1912 = vadd.f32 %v1586, %v1830
      %v1913 = vadd.f32 %v1587, %v1833
      %v1914 = vadd.f32 %v1588, %v1838
      %v1915 = vadd.f32 %v1589, %v1841
      %v1916 = vadd.f32 %v1590, %v1846
      %v1917 = vadd.f32 %v1591, %v1849
      %v1918 = vadd.f32 %v1592, %v1854
      %v1919 = vadd.f32 %v1593, %v1857
      %v1920 = vadd.f32 %v1594, %v1862
      %v1921 = vadd.f32 %v1595, %v1865
      %v1922 = vadd.f32 %v1596, %v1870
      %v1923 = vadd.f32 %v1597, %v1873
      %v1924 = vadd.f32 %v1598, %v1878
      %v1925 = vadd.f32 %v1599, %v1881
      %v1926 = vadd.f32 %v1600, %v1886
      %v1927 = vadd.f32 %v1601, %v1889
      %v1928 = vld [vmem:[%s265 + $0x14] sm:$0xff]
      %v1929 = vld [vmem:[%s265 + $0x1c] sm:$0xff]
      %v1930 = vld [vmem:[%s265 + $0x24] sm:$0xff]
      %v1931 = vld [vmem:[%s265 + $0x2c] sm:$0xff]
      %v1932 = vld [vmem:[%s265 + $0x34] sm:$0xff]
      %v1933 = vld [vmem:[%s265 + $0x3c] sm:$0xff]
      %v1934 = vld [vmem:[%s265 + $0x44] sm:$0xff]
      %v1935 = vld [vmem:[%s265 + $0x4c] sm:$0xff]
      %v1936 = vld [vmem:[%s265 + $0x54] sm:$0xff]
      %v1937 = vld [vmem:[%s265 + $0x5c] sm:$0xff]
      %v1938 = vld [vmem:[%s265 + $0x64] sm:$0xff]
      %v1939 = vld [vmem:[%s265 + $0x6c] sm:$0xff]
      %v1940 = vld [vmem:[%s265 + $0x74] sm:$0xff]
      %v1941 = vld [vmem:[%s265 + $0x7c] sm:$0xff]
      %v1942 = vld [vmem:[%s265 + $0x84] sm:$0xff]
      %v1943 = vld [vmem:[%s265 + $0x8c] sm:$0xff]
      %v1944 = vld [vmem:[%s265 + $0x94] sm:$0xff]
      %v1945 = vld [vmem:[%s265 + $0x9c] sm:$0xff]
      %v1946 = vld [vmem:[%s265 + $0xa4] sm:$0xff]
      %v1947 = vld [vmem:[%s265 + $0xac] sm:$0xff]
      %v1948 = vld [vmem:[%s265 + $0xb4] sm:$0xff]
      %v1949 = vld [vmem:[%s265 + $0xbc] sm:$0xff]
      %v1950 = vld [vmem:[%s265 + $0xc4] sm:$0xff]
      %v1951 = vld [vmem:[%s265 + $0xcc] sm:$0xff]
      %v1952 = vld [vmem:[%s265 + $0xd4] sm:$0xff]
      %v1953 = vld [vmem:[%s265 + $0xdc] sm:$0xff]
      %v1954 = vld [vmem:[%s265 + $0xe4] sm:$0xff]
      %v1955 = vld [vmem:[%s265 + $0xec] sm:$0xff]
      %v1956 = vld [vmem:[%s265 + $0xf4] sm:$0xff]
      %v1957 = vld [vmem:[%s265 + $0xfc] sm:$0xff]
      %v1958 = vld [vmem:[%s265 + $0x104] sm:$0xff]
      %v1959 = vld [vmem:[%s265 + $0x10c] sm:$0xff]
      %v1960 = vld [vmem:[%s265 + $0x114] sm:$0xff]
      %v1961 = vld [vmem:[%s265 + $0x11c] sm:$0xff]
      %v1962 = vld [vmem:[%s265 + $0x124] sm:$0xff]
      %v1963 = vld [vmem:[%s265 + $0x12c] sm:$0xff]
      %v1964 = vpack.c.bf16 %v1929, %v1928
      %v1965 = vpack.c.bf16 %v1931, %v1930
      %v1966 = vpack.c.bf16 %v1933, %v1932
      %v1967 = vpack.c.bf16 %v1935, %v1934
      %v1968 = vpack.c.bf16 %v1937, %v1936
      %v1969 = vpack.c.bf16 %v1939, %v1938
      %v1970 = vpack.c.bf16 %v1941, %v1940
      %v1971 = vpack.c.bf16 %v1943, %v1942
      %v1972 = vpack.c.bf16 %v1945, %v1944
      %v1973 = vpack.c.bf16 %v1947, %v1946
      %v1974 = vpack.c.bf16 %v1949, %v1948
      %v1975 = vpack.c.bf16 %v1951, %v1950
      %v1976 = vpack.c.bf16 %v1953, %v1952
      %v1977 = vpack.c.bf16 %v1955, %v1954
      %v1978 = vpack.c.bf16 %v1957, %v1956
      %v1979 = vpack.c.bf16 %v1959, %v1958
      %v1980 = vpack.c.bf16 %v1961, %v1960
      %v1981 = vpack.c.bf16 %v1963, %v1962
      %s1982 = scalar_lea.vmem %s1, 10
      %v1983 = vld [vmem:[%s1982] sm:$0x3]
      %v1985 = vsel %vm352, %v1964, 0
      %v1988 = vsel %vm352, %v1965, 0
      %v1991 = vsel %vm352, %v1966, 0
      %v1994 = vsel %vm352, %v1967, 0
      %v1997 = vsel %vm352, %v1968, 0
      %v2000 = vsel %vm352, %v1969, 0
      %v2003 = vsel %vm352, %v1970, 0
      %v2006 = vsel %vm352, %v1971, 0
      %v2009 = vsel %vm352, %v1972, 0
      %v2012 = vsel %vm352, %v1973, 0
      %v2015 = vsel %vm352, %v1974, 0
      %v2018 = vsel %vm352, %v1975, 0
      %v2021 = vsel %vm352, %v1976, 0
      %v2024 = vsel %vm352, %v1977, 0
      %v2027 = vsel %vm352, %v1978, 0
      %v2030 = vsel %vm352, %v1979, 0
      %v2033 = vsel %vm352, %v1980, 0
      %v2036 = vsel %vm352, %v1981, 0
      %v2039 = vsel %vm407, %v1983, 0
      %2041 = vmatprep.subr.bf16.mxu0 0
      %2042 = vmatpush1.bf16.msra.mxu0 0
      %2043 = vmatprep.subr.bf16.mxu0 0
      %2044 = vmatpush1.bf16.msra.mxu0 0
      %2045 = vmatprep.subr.bf16.mxu0 0
      %2046 = vmatpush1.bf16.msra.mxu0 0
      %2047 = vmatprep.subr.bf16.mxu0 0
      %2048 = vmatpush1.bf16.msra.mxu0 0
      %2049 = vmatprep.subr.bf16.mxu0 0
      %2050 = vmatpush1.bf16.msra.mxu0 0
      %2051 = vmatprep.subr.bf16.mxu0 0
      %2052 = vmatpush1.bf16.msra.mxu0 0
      %2053 = vmatprep.subr.bf16.mxu0 0
      %2054 = vmatpush1.bf16.msra.mxu0 0
      %2055 = vmatprep.subr.bf16.mxu0 0
      %2056 = vmatpush1.bf16.msra.mxu0 %v2039
      %2057 = vmatprep.subr.bf16.mxu0 0
      %2058 = vmatpush2.bf16.msra.mxu0 0
      %2059 = vmatprep.subr.bf16.mxu0 0
      %2060 = vmatpush2.bf16.msra.mxu0 0
      %2061 = vmatprep.subr.bf16.mxu0 0
      %2062 = vmatpush2.bf16.msra.mxu0 0
      %2063 = vmatprep.subr.bf16.mxu0 0
      %2064 = vmatpush2.bf16.msra.mxu0 0
      %2065 = vmatprep.subr.bf16.mxu0 0
      %2066 = vmatpush2.bf16.msra.mxu0 0
      %2067 = vmatprep.subr.bf16.mxu0 0
      %2068 = vmatpush2.bf16.msra.mxu0 0
      %2069 = vmatprep.subr.bf16.mxu0 0
      %2070 = vmatpush2.bf16.msra.mxu0 0
      %2071 = vmatprep.subr.bf16.mxu0 0
      %2072 = vmatpush2.bf16.msra.mxu0 0
      %2073 = vmatprep.mubr.bf16.mxu0 0
      %2074 = vmatmul.mubr.bf16.gmra.mxu0 %v1985
      %v2075 = vpop.f32.mrf.mxu0
      %v2076 = vadd.f32 0.0, %v2075
      %v2077 = vpop.f32.mrf.mxu0
      %v2078 = vpop.f32.mrf.mxu0
      %v2079 = vadd.f32 0.0, %v2078
      %v2080 = vpop.f32.mrf.mxu0
      %2081 = vmatprep.mubr.bf16.mxu0 0
      %2082 = vmatmul.mubr.bf16.gmra.mxu0 %v1988
      %v2083 = vpop.f32.mrf.mxu0
      %v2084 = vadd.f32 0.0, %v2083
      %v2085 = vpop.f32.mrf.mxu0
      %v2086 = vpop.f32.mrf.mxu0
      %v2087 = vadd.f32 0.0, %v2086
      %v2088 = vpop.f32.mrf.mxu0
      %2089 = vmatprep.mubr.bf16.mxu0 0
      %2090 = vmatmul.mubr.bf16.gmra.mxu0 %v1991
      %v2091 = vpop.f32.mrf.mxu0
      %v2092 = vadd.f32 0.0, %v2091
      %v2093 = vpop.f32.mrf.mxu0
      %v2094 = vpop.f32.mrf.mxu0
      %v2095 = vadd.f32 0.0, %v2094
      %v2096 = vpop.f32.mrf.mxu0
      %2097 = vmatprep.mubr.bf16.mxu0 0
      %2098 = vmatmul.mubr.bf16.gmra.mxu0 %v1994
      %v2099 = vpop.f32.mrf.mxu0
      %v2100 = vadd.f32 0.0, %v2099
      %v2101 = vpop.f32.mrf.mxu0
      %v2102 = vpop.f32.mrf.mxu0
      %v2103 = vadd.f32 0.0, %v2102
      %v2104 = vpop.f32.mrf.mxu0
      %2105 = vmatprep.mubr.bf16.mxu0 0
      %2106 = vmatmul.mubr.bf16.gmra.mxu0 %v1997
      %v2107 = vpop.f32.mrf.mxu0
      %v2108 = vadd.f32 0.0, %v2107
      %v2109 = vpop.f32.mrf.mxu0
      %v2110 = vpop.f32.mrf.mxu0
      %v2111 = vadd.f32 0.0, %v2110
      %v2112 = vpop.f32.mrf.mxu0
      %2113 = vmatprep.mubr.bf16.mxu0 0
      %2114 = vmatmul.mubr.bf16.gmra.mxu0 %v2000
      %v2115 = vpop.f32.mrf.mxu0
      %v2116 = vadd.f32 0.0, %v2115
      %v2117 = vpop.f32.mrf.mxu0
      %v2118 = vpop.f32.mrf.mxu0
      %v2119 = vadd.f32 0.0, %v2118
      %v2120 = vpop.f32.mrf.mxu0
      %2121 = vmatprep.mubr.bf16.mxu0 0
      %2122 = vmatmul.mubr.bf16.gmra.mxu0 %v2003
      %v2123 = vpop.f32.mrf.mxu0
      %v2124 = vadd.f32 0.0, %v2123
      %v2125 = vpop.f32.mrf.mxu0
      %v2126 = vpop.f32.mrf.mxu0
      %v2127 = vadd.f32 0.0, %v2126
      %v2128 = vpop.f32.mrf.mxu0
      %2129 = vmatprep.mubr.bf16.mxu0 0
      %2130 = vmatmul.mubr.bf16.gmra.mxu0 %v2006
      %v2131 = vpop.f32.mrf.mxu0
      %v2132 = vadd.f32 0.0, %v2131
      %v2133 = vpop.f32.mrf.mxu0
      %v2134 = vpop.f32.mrf.mxu0
      %v2135 = vadd.f32 0.0, %v2134
      %v2136 = vpop.f32.mrf.mxu0
      %2137 = vmatprep.mubr.bf16.mxu0 0
      %2138 = vmatmul.mubr.bf16.gmra.mxu0 %v2009
      %v2139 = vpop.f32.mrf.mxu0
      %v2140 = vadd.f32 0.0, %v2139
      %v2141 = vpop.f32.mrf.mxu0
      %v2142 = vpop.f32.mrf.mxu0
      %v2143 = vadd.f32 0.0, %v2142
      %v2144 = vpop.f32.mrf.mxu0
      %2145 = vmatprep.mubr.bf16.mxu0 0
      %2146 = vmatmul.mubr.bf16.gmra.mxu0 %v2012
      %v2147 = vpop.f32.mrf.mxu0
      %v2148 = vadd.f32 0.0, %v2147
      %v2149 = vpop.f32.mrf.mxu0
      %v2150 = vpop.f32.mrf.mxu0
      %v2151 = vadd.f32 0.0, %v2150
      %v2152 = vpop.f32.mrf.mxu0
      %2153 = vmatprep.mubr.bf16.mxu0 0
      %2154 = vmatmul.mubr.bf16.gmra.mxu0 %v2015
      %v2155 = vpop.f32.mrf.mxu0
      %v2156 = vadd.f32 0.0, %v2155
      %v2157 = vpop.f32.mrf.mxu0
      %v2158 = vpop.f32.mrf.mxu0
      %v2159 = vadd.f32 0.0, %v2158
      %v2160 = vpop.f32.mrf.mxu0
      %2161 = vmatprep.mubr.bf16.mxu0 0
      %2162 = vmatmul.mubr.bf16.gmra.mxu0 %v2018
      %v2163 = vpop.f32.mrf.mxu0
      %v2164 = vadd.f32 0.0, %v2163
      %v2165 = vpop.f32.mrf.mxu0
      %v2166 = vpop.f32.mrf.mxu0
      %v2167 = vadd.f32 0.0, %v2166
      %v2168 = vpop.f32.mrf.mxu0
      %2169 = vmatprep.mubr.bf16.mxu0 0
      %2170 = vmatmul.mubr.bf16.gmra.mxu0 %v2021
      %v2171 = vpop.f32.mrf.mxu0
      %v2172 = vadd.f32 0.0, %v2171
      %v2173 = vpop.f32.mrf.mxu0
      %v2174 = vpop.f32.mrf.mxu0
      %v2175 = vadd.f32 0.0, %v2174
      %v2176 = vpop.f32.mrf.mxu0
      %2177 = vmatprep.mubr.bf16.mxu0 0
      %2178 = vmatmul.mubr.bf16.gmra.mxu0 %v2024
      %v2179 = vpop.f32.mrf.mxu0
      %v2180 = vadd.f32 0.0, %v2179
      %v2181 = vpop.f32.mrf.mxu0
      %v2182 = vpop.f32.mrf.mxu0
      %v2183 = vadd.f32 0.0, %v2182
      %v2184 = vpop.f32.mrf.mxu0
      %2185 = vmatprep.mubr.bf16.mxu0 0
      %2186 = vmatmul.mubr.bf16.gmra.mxu0 %v2027
      %v2187 = vpop.f32.mrf.mxu0
      %v2188 = vadd.f32 0.0, %v2187
      %v2189 = vpop.f32.mrf.mxu0
      %v2190 = vpop.f32.mrf.mxu0
      %v2191 = vadd.f32 0.0, %v2190
      %v2192 = vpop.f32.mrf.mxu0
      %2193 = vmatprep.mubr.bf16.mxu0 0
      %2194 = vmatmul.mubr.bf16.gmra.mxu0 %v2030
      %v2195 = vpop.f32.mrf.mxu0
      %v2196 = vadd.f32 0.0, %v2195
      %v2197 = vpop.f32.mrf.mxu0
      %v2198 = vpop.f32.mrf.mxu0
      %v2199 = vadd.f32 0.0, %v2198
      %v2200 = vpop.f32.mrf.mxu0
      %2201 = vmatprep.mubr.bf16.mxu0 0
      %2202 = vmatmul.mubr.bf16.gmra.mxu0 %v2033
      %v2203 = vpop.f32.mrf.mxu0
      %v2204 = vadd.f32 0.0, %v2203
      %v2205 = vpop.f32.mrf.mxu0
      %v2206 = vpop.f32.mrf.mxu0
      %v2207 = vadd.f32 0.0, %v2206
      %v2208 = vpop.f32.mrf.mxu0
      %2209 = vmatprep.mubr.bf16.mxu0 0
      %2210 = vmatmul.mubr.bf16.gmra.mxu0 %v2036
      %v2211 = vpop.f32.mrf.mxu0
      %v2212 = vadd.f32 0.0, %v2211
      %v2213 = vpop.f32.mrf.mxu0
      %v2214 = vpop.f32.mrf.mxu0
      %v2215 = vadd.f32 0.0, %v2214
      %v2216 = vpop.f32.mrf.mxu0
      %2217 = vdwg.mxu0
      %v2218 = vadd.f32 %v1892, %v2076
      %v2219 = vadd.f32 %v1893, %v2079
      %v2220 = vadd.f32 %v1894, %v2084
      %v2221 = vadd.f32 %v1895, %v2087
      %v2222 = vadd.f32 %v1896, %v2092
      %v2223 = vadd.f32 %v1897, %v2095
      %v2224 = vadd.f32 %v1898, %v2100
      %v2225 = vadd.f32 %v1899, %v2103
      %v2226 = vadd.f32 %v1900, %v2108
      %v2227 = vadd.f32 %v1901, %v2111
      %v2228 = vadd.f32 %v1902, %v2116
      %v2229 = vadd.f32 %v1903, %v2119
      %v2230 = vadd.f32 %v1904, %v2124
      %v2231 = vadd.f32 %v1905, %v2127
      %v2232 = vadd.f32 %v1906, %v2132
      %v2233 = vadd.f32 %v1907, %v2135
      %v2234 = vadd.f32 %v1908, %v2140
      %v2235 = vadd.f32 %v1909, %v2143
      %v2236 = vadd.f32 %v1910, %v2148
      %v2237 = vadd.f32 %v1911, %v2151
      %v2238 = vadd.f32 %v1912, %v2156
      %v2239 = vadd.f32 %v1913, %v2159
      %v2240 = vadd.f32 %v1914, %v2164
      %v2241 = vadd.f32 %v1915, %v2167
      %v2242 = vadd.f32 %v1916, %v2172
      %v2243 = vadd.f32 %v1917, %v2175
      %v2244 = vadd.f32 %v1918, %v2180
      %v2245 = vadd.f32 %v1919, %v2183
      %v2246 = vadd.f32 %v1920, %v2188
      %v2247 = vadd.f32 %v1921, %v2191
      %v2248 = vadd.f32 %v1922, %v2196
      %v2249 = vadd.f32 %v1923, %v2199
      %v2250 = vadd.f32 %v1924, %v2204
      %v2251 = vadd.f32 %v1925, %v2207
      %v2252 = vadd.f32 %v1926, %v2212
      %v2253 = vadd.f32 %v1927, %v2215
      %v2254 = vld [vmem:[%s265 + $0x24] sm:$0xff]
      %v2255 = vld [vmem:[%s265 + $0x2c] sm:$0xff]
      %v2256 = vld [vmem:[%s265 + $0x34] sm:$0xff]
      %v2257 = vld [vmem:[%s265 + $0x3c] sm:$0xff]
      %v2258 = vld [vmem:[%s265 + $0x44] sm:$0xff]
      %v2259 = vld [vmem:[%s265 + $0x4c] sm:$0xff]
      %v2260 = vld [vmem:[%s265 + $0x54] sm:$0xff]
      %v2261 = vld [vmem:[%s265 + $0x5c] sm:$0xff]
      %v2262 = vld [vmem:[%s265 + $0x64] sm:$0xff]
      %v2263 = vld [vmem:[%s265 + $0x6c] sm:$0xff]
      %v2264 = vld [vmem:[%s265 + $0x74] sm:$0xff]
      %v2265 = vld [vmem:[%s265 + $0x7c] sm:$0xff]
      %v2266 = vld [vmem:[%s265 + $0x84] sm:$0xff]
      %v2267 = vld [vmem:[%s265 + $0x8c] sm:$0xff]
      %v2268 = vld [vmem:[%s265 + $0x94] sm:$0xff]
      %v2269 = vld [vmem:[%s265 + $0x9c] sm:$0xff]
      %v2270 = vld [vmem:[%s265 + $0xa4] sm:$0xff]
      %v2271 = vld [vmem:[%s265 + $0xac] sm:$0xff]
      %v2272 = vld [vmem:[%s265 + $0xb4] sm:$0xff]
      %v2273 = vld [vmem:[%s265 + $0xbc] sm:$0xff]
      %v2274 = vld [vmem:[%s265 + $0xc4] sm:$0xff]
      %v2275 = vld [vmem:[%s265 + $0xcc] sm:$0xff]
      %v2276 = vld [vmem:[%s265 + $0xd4] sm:$0xff]
      %v2277 = vld [vmem:[%s265 + $0xdc] sm:$0xff]
      %v2278 = vld [vmem:[%s265 + $0xe4] sm:$0xff]
      %v2279 = vld [vmem:[%s265 + $0xec] sm:$0xff]
      %v2280 = vld [vmem:[%s265 + $0xf4] sm:$0xff]
      %v2281 = vld [vmem:[%s265 + $0xfc] sm:$0xff]
      %v2282 = vld [vmem:[%s265 + $0x104] sm:$0xff]
      %v2283 = vld [vmem:[%s265 + $0x10c] sm:$0xff]
      %v2284 = vld [vmem:[%s265 + $0x114] sm:$0xff]
      %v2285 = vld [vmem:[%s265 + $0x11c] sm:$0xff]
      %v2286 = vld [vmem:[%s265 + $0x124] sm:$0xff]
      %v2287 = vld [vmem:[%s265 + $0x12c] sm:$0xff]
      %v2288 = vld [vmem:[%s265 + $0x134] sm:$0xff]
      %v2289 = vld [vmem:[%s265 + $0x13c] sm:$0xff]
      %v2290 = vpack.c.bf16 %v2255, %v2254
      %v2291 = vpack.c.bf16 %v2257, %v2256
      %v2292 = vpack.c.bf16 %v2259, %v2258
      %v2293 = vpack.c.bf16 %v2261, %v2260
      %v2294 = vpack.c.bf16 %v2263, %v2262
      %v2295 = vpack.c.bf16 %v2265, %v2264
      %v2296 = vpack.c.bf16 %v2267, %v2266
      %v2297 = vpack.c.bf16 %v2269, %v2268
      %v2298 = vpack.c.bf16 %v2271, %v2270
      %v2299 = vpack.c.bf16 %v2273, %v2272
      %v2300 = vpack.c.bf16 %v2275, %v2274
      %v2301 = vpack.c.bf16 %v2277, %v2276
      %v2302 = vpack.c.bf16 %v2279, %v2278
      %v2303 = vpack.c.bf16 %v2281, %v2280
      %v2304 = vpack.c.bf16 %v2283, %v2282
      %v2305 = vpack.c.bf16 %v2285, %v2284
      %v2306 = vpack.c.bf16 %v2287, %v2286
      %v2307 = vpack.c.bf16 %v2289, %v2288
      %s2308 = scalar_lea.vmem %s1, 12
      %v2309 = vld [vmem:[%s2308] sm:$0x3]
      %v2311 = vsel %vm352, %v2290, 0
      %v2314 = vsel %vm352, %v2291, 0
      %v2317 = vsel %vm352, %v2292, 0
      %v2320 = vsel %vm352, %v2293, 0
      %v2323 = vsel %vm352, %v2294, 0
      %v2326 = vsel %vm352, %v2295, 0
      %v2329 = vsel %vm352, %v2296, 0
      %v2332 = vsel %vm352, %v2297, 0
      %v2335 = vsel %vm352, %v2298, 0
      %v2338 = vsel %vm352, %v2299, 0
      %v2341 = vsel %vm352, %v2300, 0
      %v2344 = vsel %vm352, %v2301, 0
      %v2347 = vsel %vm352, %v2302, 0
      %v2350 = vsel %vm352, %v2303, 0
      %v2353 = vsel %vm352, %v2304, 0
      %v2356 = vsel %vm352, %v2305, 0
      %v2359 = vsel %vm352, %v2306, 0
      %v2362 = vsel %vm352, %v2307, 0
      %v2365 = vsel %vm407, %v2309, 0
      %2367 = vmatprep.subr.bf16.mxu0 0
      %2368 = vmatpush1.bf16.msra.mxu0 0
      %2369 = vmatprep.subr.bf16.mxu0 0
      %2370 = vmatpush1.bf16.msra.mxu0 0
      %2371 = vmatprep.subr.bf16.mxu0 0
      %2372 = vmatpush1.bf16.msra.mxu0 0
      %2373 = vmatprep.subr.bf16.mxu0 0
      %2374 = vmatpush1.bf16.msra.mxu0 0
      %2375 = vmatprep.subr.bf16.mxu0 0
      %2376 = vmatpush1.bf16.msra.mxu0 0
      %2377 = vmatprep.subr.bf16.mxu0 0
      %2378 = vmatpush1.bf16.msra.mxu0 0
      %2379 = vmatprep.subr.bf16.mxu0 0
      %2380 = vmatpush1.bf16.msra.mxu0 0
      %2381 = vmatprep.subr.bf16.mxu0 0
      %2382 = vmatpush1.bf16.msra.mxu0 %v2365
      %2383 = vmatprep.subr.bf16.mxu0 0
      %2384 = vmatpush2.bf16.msra.mxu0 0
      %2385 = vmatprep.subr.bf16.mxu0 0
      %2386 = vmatpush2.bf16.msra.mxu0 0
      %2387 = vmatprep.subr.bf16.mxu0 0
      %2388 = vmatpush2.bf16.msra.mxu0 0
      %2389 = vmatprep.subr.bf16.mxu0 0
      %2390 = vmatpush2.bf16.msra.mxu0 0
      %2391 = vmatprep.subr.bf16.mxu0 0
      %2392 = vmatpush2.bf16.msra.mxu0 0
      %2393 = vmatprep.subr.bf16.mxu0 0
      %2394 = vmatpush2.bf16.msra.mxu0 0
      %2395 = vmatprep.subr.bf16.mxu0 0
      %2396 = vmatpush2.bf16.msra.mxu0 0
      %2397 = vmatprep.subr.bf16.mxu0 0
      %2398 = vmatpush2.bf16.msra.mxu0 0
      %2399 = vmatprep.mubr.bf16.mxu0 0
      %2400 = vmatmul.mubr.bf16.gmra.mxu0 %v2311
      %v2401 = vpop.f32.mrf.mxu0
      %v2402 = vadd.f32 0.0, %v2401
      %v2403 = vpop.f32.mrf.mxu0
      %v2404 = vpop.f32.mrf.mxu0
      %v2405 = vadd.f32 0.0, %v2404
      %v2406 = vpop.f32.mrf.mxu0
      %2407 = vmatprep.mubr.bf16.mxu0 0
      %2408 = vmatmul.mubr.bf16.gmra.mxu0 %v2314
      %v2409 = vpop.f32.mrf.mxu0
      %v2410 = vadd.f32 0.0, %v2409
      %v2411 = vpop.f32.mrf.mxu0
      %v2412 = vpop.f32.mrf.mxu0
      %v2413 = vadd.f32 0.0, %v2412
      %v2414 = vpop.f32.mrf.mxu0
      %2415 = vmatprep.mubr.bf16.mxu0 0
      %2416 = vmatmul.mubr.bf16.gmra.mxu0 %v2317
      %v2417 = vpop.f32.mrf.mxu0
      %v2418 = vadd.f32 0.0, %v2417
      %v2419 = vpop.f32.mrf.mxu0
      %v2420 = vpop.f32.mrf.mxu0
      %v2421 = vadd.f32 0.0, %v2420
      %v2422 = vpop.f32.mrf.mxu0
      %2423 = vmatprep.mubr.bf16.mxu0 0
      %2424 = vmatmul.mubr.bf16.gmra.mxu0 %v2320
      %v2425 = vpop.f32.mrf.mxu0
      %v2426 = vadd.f32 0.0, %v2425
      %v2427 = vpop.f32.mrf.mxu0
      %v2428 = vpop.f32.mrf.mxu0
      %v2429 = vadd.f32 0.0, %v2428
      %v2430 = vpop.f32.mrf.mxu0
      %2431 = vmatprep.mubr.bf16.mxu0 0
      %2432 = vmatmul.mubr.bf16.gmra.mxu0 %v2323
      %v2433 = vpop.f32.mrf.mxu0
      %v2434 = vadd.f32 0.0, %v2433
      %v2435 = vpop.f32.mrf.mxu0
      %v2436 = vpop.f32.mrf.mxu0
      %v2437 = vadd.f32 0.0, %v2436
      %v2438 = vpop.f32.mrf.mxu0
      %2439 = vmatprep.mubr.bf16.mxu0 0
      %2440 = vmatmul.mubr.bf16.gmra.mxu0 %v2326
      %v2441 = vpop.f32.mrf.mxu0
      %v2442 = vadd.f32 0.0, %v2441
      %v2443 = vpop.f32.mrf.mxu0
      %v2444 = vpop.f32.mrf.mxu0
      %v2445 = vadd.f32 0.0, %v2444
      %v2446 = vpop.f32.mrf.mxu0
      %2447 = vmatprep.mubr.bf16.mxu0 0
      %2448 = vmatmul.mubr.bf16.gmra.mxu0 %v2329
      %v2449 = vpop.f32.mrf.mxu0
      %v2450 = vadd.f32 0.0, %v2449
      %v2451 = vpop.f32.mrf.mxu0
      %v2452 = vpop.f32.mrf.mxu0
      %v2453 = vadd.f32 0.0, %v2452
      %v2454 = vpop.f32.mrf.mxu0
      %2455 = vmatprep.mubr.bf16.mxu0 0
      %2456 = vmatmul.mubr.bf16.gmra.mxu0 %v2332
      %v2457 = vpop.f32.mrf.mxu0
      %v2458 = vadd.f32 0.0, %v2457
      %v2459 = vpop.f32.mrf.mxu0
      %v2460 = vpop.f32.mrf.mxu0
      %v2461 = vadd.f32 0.0, %v2460
      %v2462 = vpop.f32.mrf.mxu0
      %2463 = vmatprep.mubr.bf16.mxu0 0
      %2464 = vmatmul.mubr.bf16.gmra.mxu0 %v2335
      %v2465 = vpop.f32.mrf.mxu0
      %v2466 = vadd.f32 0.0, %v2465
      %v2467 = vpop.f32.mrf.mxu0
      %v2468 = vpop.f32.mrf.mxu0
      %v2469 = vadd.f32 0.0, %v2468
      %v2470 = vpop.f32.mrf.mxu0
      %2471 = vmatprep.mubr.bf16.mxu0 0
      %2472 = vmatmul.mubr.bf16.gmra.mxu0 %v2338
      %v2473 = vpop.f32.mrf.mxu0
      %v2474 = vadd.f32 0.0, %v2473
      %v2475 = vpop.f32.mrf.mxu0
      %v2476 = vpop.f32.mrf.mxu0
      %v2477 = vadd.f32 0.0, %v2476
      %v2478 = vpop.f32.mrf.mxu0
      %2479 = vmatprep.mubr.bf16.mxu0 0
      %2480 = vmatmul.mubr.bf16.gmra.mxu0 %v2341
      %v2481 = vpop.f32.mrf.mxu0
      %v2482 = vadd.f32 0.0, %v2481
      %v2483 = vpop.f32.mrf.mxu0
      %v2484 = vpop.f32.mrf.mxu0
      %v2485 = vadd.f32 0.0, %v2484
      %v2486 = vpop.f32.mrf.mxu0
      %2487 = vmatprep.mubr.bf16.mxu0 0
      %2488 = vmatmul.mubr.bf16.gmra.mxu0 %v2344
      %v2489 = vpop.f32.mrf.mxu0
      %v2490 = vadd.f32 0.0, %v2489
      %v2491 = vpop.f32.mrf.mxu0
      %v2492 = vpop.f32.mrf.mxu0
      %v2493 = vadd.f32 0.0, %v2492
      %v2494 = vpop.f32.mrf.mxu0
      %2495 = vmatprep.mubr.bf16.mxu0 0
      %2496 = vmatmul.mubr.bf16.gmra.mxu0 %v2347
      %v2497 = vpop.f32.mrf.mxu0
      %v2498 = vadd.f32 0.0, %v2497
      %v2499 = vpop.f32.mrf.mxu0
      %v2500 = vpop.f32.mrf.mxu0
      %v2501 = vadd.f32 0.0, %v2500
      %v2502 = vpop.f32.mrf.mxu0
      %2503 = vmatprep.mubr.bf16.mxu0 0
      %2504 = vmatmul.mubr.bf16.gmra.mxu0 %v2350
      %v2505 = vpop.f32.mrf.mxu0
      %v2506 = vadd.f32 0.0, %v2505
      %v2507 = vpop.f32.mrf.mxu0
      %v2508 = vpop.f32.mrf.mxu0
      %v2509 = vadd.f32 0.0, %v2508
      %v2510 = vpop.f32.mrf.mxu0
      %2511 = vmatprep.mubr.bf16.mxu0 0
      %2512 = vmatmul.mubr.bf16.gmra.mxu0 %v2353
      %v2513 = vpop.f32.mrf.mxu0
      %v2514 = vadd.f32 0.0, %v2513
      %v2515 = vpop.f32.mrf.mxu0
      %v2516 = vpop.f32.mrf.mxu0
      %v2517 = vadd.f32 0.0, %v2516
      %v2518 = vpop.f32.mrf.mxu0
      %2519 = vmatprep.mubr.bf16.mxu0 0
      %2520 = vmatmul.mubr.bf16.gmra.mxu0 %v2356
      %v2521 = vpop.f32.mrf.mxu0
      %v2522 = vadd.f32 0.0, %v2521
      %v2523 = vpop.f32.mrf.mxu0
      %v2524 = vpop.f32.mrf.mxu0
      %v2525 = vadd.f32 0.0, %v2524
      %v2526 = vpop.f32.mrf.mxu0
      %2527 = vmatprep.mubr.bf16.mxu0 0
      %2528 = vmatmul.mubr.bf16.gmra.mxu0 %v2359
      %v2529 = vpop.f32.mrf.mxu0
      %v2530 = vadd.f32 0.0, %v2529
      %v2531 = vpop.f32.mrf.mxu0
      %v2532 = vpop.f32.mrf.mxu0
      %v2533 = vadd.f32 0.0, %v2532
      %v2534 = vpop.f32.mrf.mxu0
      %2535 = vmatprep.mubr.bf16.mxu0 0
      %2536 = vmatmul.mubr.bf16.gmra.mxu0 %v2362
      %v2537 = vpop.f32.mrf.mxu0
      %v2538 = vadd.f32 0.0, %v2537
      %v2539 = vpop.f32.mrf.mxu0
      %v2540 = vpop.f32.mrf.mxu0
      %v2541 = vadd.f32 0.0, %v2540
      %v2542 = vpop.f32.mrf.mxu0
      %2543 = vdwg.mxu0
      %v2544 = vadd.f32 %v2218, %v2402
      %v2545 = vadd.f32 %v2219, %v2405
      %v2546 = vadd.f32 %v2220, %v2410
      %v2547 = vadd.f32 %v2221, %v2413
      %v2548 = vadd.f32 %v2222, %v2418
      %v2549 = vadd.f32 %v2223, %v2421
      %v2550 = vadd.f32 %v2224, %v2426
      %v2551 = vadd.f32 %v2225, %v2429
      %v2552 = vadd.f32 %v2226, %v2434
      %v2553 = vadd.f32 %v2227, %v2437
      %v2554 = vadd.f32 %v2228, %v2442
      %v2555 = vadd.f32 %v2229, %v2445
      %v2556 = vadd.f32 %v2230, %v2450
      %v2557 = vadd.f32 %v2231, %v2453
      %v2558 = vadd.f32 %v2232, %v2458
      %v2559 = vadd.f32 %v2233, %v2461
      %v2560 = vadd.f32 %v2234, %v2466
      %v2561 = vadd.f32 %v2235, %v2469
      %v2562 = vadd.f32 %v2236, %v2474
      %v2563 = vadd.f32 %v2237, %v2477
      %v2564 = vadd.f32 %v2238, %v2482
      %v2565 = vadd.f32 %v2239, %v2485
      %v2566 = vadd.f32 %v2240, %v2490
      %v2567 = vadd.f32 %v2241, %v2493
      %v2568 = vadd.f32 %v2242, %v2498
      %v2569 = vadd.f32 %v2243, %v2501
      %v2570 = vadd.f32 %v2244, %v2506
      %v2571 = vadd.f32 %v2245, %v2509
      %v2572 = vadd.f32 %v2246, %v2514
      %v2573 = vadd.f32 %v2247, %v2517
      %v2574 = vadd.f32 %v2248, %v2522
      %v2575 = vadd.f32 %v2249, %v2525
      %v2576 = vadd.f32 %v2250, %v2530
      %v2577 = vadd.f32 %v2251, %v2533
      %v2578 = vadd.f32 %v2252, %v2538
      %v2579 = vadd.f32 %v2253, %v2541
      %v2580 = vld [vmem:[%s265 + $0x25] sm:$0xff]
      %v2581 = vld [vmem:[%s265 + $0x2d] sm:$0xff]
      %v2582 = vld [vmem:[%s265 + $0x35] sm:$0xff]
      %v2583 = vld [vmem:[%s265 + $0x3d] sm:$0xff]
      %v2584 = vld [vmem:[%s265 + $0x45] sm:$0xff]
      %v2585 = vld [vmem:[%s265 + $0x4d] sm:$0xff]
      %v2586 = vld [vmem:[%s265 + $0x55] sm:$0xff]
      %v2587 = vld [vmem:[%s265 + $0x5d] sm:$0xff]
      %v2588 = vld [vmem:[%s265 + $0x65] sm:$0xff]
      %v2589 = vld [vmem:[%s265 + $0x6d] sm:$0xff]
      %v2590 = vld [vmem:[%s265 + $0x75] sm:$0xff]
      %v2591 = vld [vmem:[%s265 + $0x7d] sm:$0xff]
      %v2592 = vld [vmem:[%s265 + $0x85] sm:$0xff]
      %v2593 = vld [vmem:[%s265 + $0x8d] sm:$0xff]
      %v2594 = vld [vmem:[%s265 + $0x95] sm:$0xff]
      %v2595 = vld [vmem:[%s265 + $0x9d] sm:$0xff]
      %v2596 = vld [vmem:[%s265 + $0xa5] sm:$0xff]
      %v2597 = vld [vmem:[%s265 + $0xad] sm:$0xff]
      %v2598 = vld [vmem:[%s265 + $0xb5] sm:$0xff]
      %v2599 = vld [vmem:[%s265 + $0xbd] sm:$0xff]
      %v2600 = vld [vmem:[%s265 + $0xc5] sm:$0xff]
      %v2601 = vld [vmem:[%s265 + $0xcd] sm:$0xff]
      %v2602 = vld [vmem:[%s265 + $0xd5] sm:$0xff]
      %v2603 = vld [vmem:[%s265 + $0xdd] sm:$0xff]
      %v2604 = vld [vmem:[%s265 + $0xe5] sm:$0xff]
      %v2605 = vld [vmem:[%s265 + $0xed] sm:$0xff]
      %v2606 = vld [vmem:[%s265 + $0xf5] sm:$0xff]
      %v2607 = vld [vmem:[%s265 + $0xfd] sm:$0xff]
      %v2608 = vld [vmem:[%s265 + $0x105] sm:$0xff]
      %v2609 = vld [vmem:[%s265 + $0x10d] sm:$0xff]
      %v2610 = vld [vmem:[%s265 + $0x115] sm:$0xff]
      %v2611 = vld [vmem:[%s265 + $0x11d] sm:$0xff]
      %v2612 = vld [vmem:[%s265 + $0x125] sm:$0xff]
      %v2613 = vld [vmem:[%s265 + $0x12d] sm:$0xff]
      %v2614 = vld [vmem:[%s265 + $0x135] sm:$0xff]
      %v2615 = vld [vmem:[%s265 + $0x13d] sm:$0xff]
      %v2616 = vpack.c.bf16 %v2581, %v2580
      %v2617 = vpack.c.bf16 %v2583, %v2582
      %v2618 = vpack.c.bf16 %v2585, %v2584
      %v2619 = vpack.c.bf16 %v2587, %v2586
      %v2620 = vpack.c.bf16 %v2589, %v2588
      %v2621 = vpack.c.bf16 %v2591, %v2590
      %v2622 = vpack.c.bf16 %v2593, %v2592
      %v2623 = vpack.c.bf16 %v2595, %v2594
      %v2624 = vpack.c.bf16 %v2597, %v2596
      %v2625 = vpack.c.bf16 %v2599, %v2598
      %v2626 = vpack.c.bf16 %v2601, %v2600
      %v2627 = vpack.c.bf16 %v2603, %v2602
      %v2628 = vpack.c.bf16 %v2605, %v2604
      %v2629 = vpack.c.bf16 %v2607, %v2606
      %v2630 = vpack.c.bf16 %v2609, %v2608
      %v2631 = vpack.c.bf16 %v2611, %v2610
      %v2632 = vpack.c.bf16 %v2613, %v2612
      %v2633 = vpack.c.bf16 %v2615, %v2614
      %s2634 = scalar_lea.vmem %s1, 14
      %v2635 = vld [vmem:[%s2634] sm:$0x3]
      %v2637 = vsel %vm352, %v2616, 0
      %v2640 = vsel %vm352, %v2617, 0
      %v2643 = vsel %vm352, %v2618, 0
      %v2646 = vsel %vm352, %v2619, 0
      %v2649 = vsel %vm352, %v2620, 0
      %v2652 = vsel %vm352, %v2621, 0
      %v2655 = vsel %vm352, %v2622, 0
      %v2658 = vsel %vm352, %v2623, 0
      %v2661 = vsel %vm352, %v2624, 0
      %v2664 = vsel %vm352, %v2625, 0
      %v2667 = vsel %vm352, %v2626, 0
      %v2670 = vsel %vm352, %v2627, 0
      %v2673 = vsel %vm352, %v2628, 0
      %v2676 = vsel %vm352, %v2629, 0
      %v2679 = vsel %vm352, %v2630, 0
      %v2682 = vsel %vm352, %v2631, 0
      %v2685 = vsel %vm352, %v2632, 0
      %v2688 = vsel %vm352, %v2633, 0
      %v2691 = vsel %vm407, %v2635, 0
      %2693 = vmatprep.subr.bf16.mxu0 0
      %2694 = vmatpush1.bf16.msra.mxu0 0
      %2695 = vmatprep.subr.bf16.mxu0 0
      %2696 = vmatpush1.bf16.msra.mxu0 0
      %2697 = vmatprep.subr.bf16.mxu0 0
      %2698 = vmatpush1.bf16.msra.mxu0 0
      %2699 = vmatprep.subr.bf16.mxu0 0
      %2700 = vmatpush1.bf16.msra.mxu0 0
      %2701 = vmatprep.subr.bf16.mxu0 0
      %2702 = vmatpush1.bf16.msra.mxu0 0
      %2703 = vmatprep.subr.bf16.mxu0 0
      %2704 = vmatpush1.bf16.msra.mxu0 0
      %2705 = vmatprep.subr.bf16.mxu0 0
      %2706 = vmatpush1.bf16.msra.mxu0 0
      %2707 = vmatprep.subr.bf16.mxu0 0
      %2708 = vmatpush1.bf16.msra.mxu0 %v2691
      %2709 = vmatprep.subr.bf16.mxu0 0
      %2710 = vmatpush2.bf16.msra.mxu0 0
      %2711 = vmatprep.subr.bf16.mxu0 0
      %2712 = vmatpush2.bf16.msra.mxu0 0
      %2713 = vmatprep.subr.bf16.mxu0 0
      %2714 = vmatpush2.bf16.msra.mxu0 0
      %2715 = vmatprep.subr.bf16.mxu0 0
      %2716 = vmatpush2.bf16.msra.mxu0 0
      %2717 = vmatprep.subr.bf16.mxu0 0
      %2718 = vmatpush2.bf16.msra.mxu0 0
      %2719 = vmatprep.subr.bf16.mxu0 0
      %2720 = vmatpush2.bf16.msra.mxu0 0
      %2721 = vmatprep.subr.bf16.mxu0 0
      %2722 = vmatpush2.bf16.msra.mxu0 0
      %2723 = vmatprep.subr.bf16.mxu0 0
      %2724 = vmatpush2.bf16.msra.mxu0 0
      %2725 = vmatprep.mubr.bf16.mxu0 0
      %2726 = vmatmul.mubr.bf16.gmra.mxu0 %v2637
      %v2727 = vpop.f32.mrf.mxu0
      %v2728 = vadd.f32 0.0, %v2727
      %v2729 = vpop.f32.mrf.mxu0
      %v2730 = vpop.f32.mrf.mxu0
      %v2731 = vadd.f32 0.0, %v2730
      %v2732 = vpop.f32.mrf.mxu0
      %2733 = vmatprep.mubr.bf16.mxu0 0
      %2734 = vmatmul.mubr.bf16.gmra.mxu0 %v2640
      %v2735 = vpop.f32.mrf.mxu0
      %v2736 = vadd.f32 0.0, %v2735
      %v2737 = vpop.f32.mrf.mxu0
      %v2738 = vpop.f32.mrf.mxu0
      %v2739 = vadd.f32 0.0, %v2738
      %v2740 = vpop.f32.mrf.mxu0
      %2741 = vmatprep.mubr.bf16.mxu0 0
      %2742 = vmatmul.mubr.bf16.gmra.mxu0 %v2643
      %v2743 = vpop.f32.mrf.mxu0
      %v2744 = vadd.f32 0.0, %v2743
      %v2745 = vpop.f32.mrf.mxu0
      %v2746 = vpop.f32.mrf.mxu0
      %v2747 = vadd.f32 0.0, %v2746
      %v2748 = vpop.f32.mrf.mxu0
      %2749 = vmatprep.mubr.bf16.mxu0 0
      %2750 = vmatmul.mubr.bf16.gmra.mxu0 %v2646
      %v2751 = vpop.f32.mrf.mxu0
      %v2752 = vadd.f32 0.0, %v2751
      %v2753 = vpop.f32.mrf.mxu0
      %v2754 = vpop.f32.mrf.mxu0
      %v2755 = vadd.f32 0.0, %v2754
      %v2756 = vpop.f32.mrf.mxu0
      %2757 = vmatprep.mubr.bf16.mxu0 0
      %2758 = vmatmul.mubr.bf16.gmra.mxu0 %v2649
      %v2759 = vpop.f32.mrf.mxu0
      %v2760 = vadd.f32 0.0, %v2759
      %v2761 = vpop.f32.mrf.mxu0
      %v2762 = vpop.f32.mrf.mxu0
      %v2763 = vadd.f32 0.0, %v2762
      %v2764 = vpop.f32.mrf.mxu0
      %2765 = vmatprep.mubr.bf16.mxu0 0
      %2766 = vmatmul.mubr.bf16.gmra.mxu0 %v2652
      %v2767 = vpop.f32.mrf.mxu0
      %v2768 = vadd.f32 0.0, %v2767
      %v2769 = vpop.f32.mrf.mxu0
      %v2770 = vpop.f32.mrf.mxu0
      %v2771 = vadd.f32 0.0, %v2770
      %v2772 = vpop.f32.mrf.mxu0
      %2773 = vmatprep.mubr.bf16.mxu0 0
      %2774 = vmatmul.mubr.bf16.gmra.mxu0 %v2655
      %v2775 = vpop.f32.mrf.mxu0
      %v2776 = vadd.f32 0.0, %v2775
      %v2777 = vpop.f32.mrf.mxu0
      %v2778 = vpop.f32.mrf.mxu0
      %v2779 = vadd.f32 0.0, %v2778
      %v2780 = vpop.f32.mrf.mxu0
      %2781 = vmatprep.mubr.bf16.mxu0 0
      %2782 = vmatmul.mubr.bf16.gmra.mxu0 %v2658
      %v2783 = vpop.f32.mrf.mxu0
      %v2784 = vadd.f32 0.0, %v2783
      %v2785 = vpop.f32.mrf.mxu0
      %v2786 = vpop.f32.mrf.mxu0
      %v2787 = vadd.f32 0.0, %v2786
      %v2788 = vpop.f32.mrf.mxu0
      %2789 = vmatprep.mubr.bf16.mxu0 0
      %2790 = vmatmul.mubr.bf16.gmra.mxu0 %v2661
      %v2791 = vpop.f32.mrf.mxu0
      %v2792 = vadd.f32 0.0, %v2791
      %v2793 = vpop.f32.mrf.mxu0
      %v2794 = vpop.f32.mrf.mxu0
      %v2795 = vadd.f32 0.0, %v2794
      %v2796 = vpop.f32.mrf.mxu0
      %2797 = vmatprep.mubr.bf16.mxu0 0
      %2798 = vmatmul.mubr.bf16.gmra.mxu0 %v2664
      %v2799 = vpop.f32.mrf.mxu0
      %v2800 = vadd.f32 0.0, %v2799
      %v2801 = vpop.f32.mrf.mxu0
      %v2802 = vpop.f32.mrf.mxu0
      %v2803 = vadd.f32 0.0, %v2802
      %v2804 = vpop.f32.mrf.mxu0
      %2805 = vmatprep.mubr.bf16.mxu0 0
      %2806 = vmatmul.mubr.bf16.gmra.mxu0 %v2667
      %v2807 = vpop.f32.mrf.mxu0
      %v2808 = vadd.f32 0.0, %v2807
      %v2809 = vpop.f32.mrf.mxu0
      %v2810 = vpop.f32.mrf.mxu0
      %v2811 = vadd.f32 0.0, %v2810
      %v2812 = vpop.f32.mrf.mxu0
      %2813 = vmatprep.mubr.bf16.mxu0 0
      %2814 = vmatmul.mubr.bf16.gmra.mxu0 %v2670
      %v2815 = vpop.f32.mrf.mxu0
      %v2816 = vadd.f32 0.0, %v2815
      %v2817 = vpop.f32.mrf.mxu0
      %v2818 = vpop.f32.mrf.mxu0
      %v2819 = vadd.f32 0.0, %v2818
      %v2820 = vpop.f32.mrf.mxu0
      %2821 = vmatprep.mubr.bf16.mxu0 0
      %2822 = vmatmul.mubr.bf16.gmra.mxu0 %v2673
      %v2823 = vpop.f32.mrf.mxu0
      %v2824 = vadd.f32 0.0, %v2823
      %v2825 = vpop.f32.mrf.mxu0
      %v2826 = vpop.f32.mrf.mxu0
      %v2827 = vadd.f32 0.0, %v2826
      %v2828 = vpop.f32.mrf.mxu0
      %2829 = vmatprep.mubr.bf16.mxu0 0
      %2830 = vmatmul.mubr.bf16.gmra.mxu0 %v2676
      %v2831 = vpop.f32.mrf.mxu0
      %v2832 = vadd.f32 0.0, %v2831
      %v2833 = vpop.f32.mrf.mxu0
      %v2834 = vpop.f32.mrf.mxu0
      %v2835 = vadd.f32 0.0, %v2834
      %v2836 = vpop.f32.mrf.mxu0
      %2837 = vmatprep.mubr.bf16.mxu0 0
      %2838 = vmatmul.mubr.bf16.gmra.mxu0 %v2679
      %v2839 = vpop.f32.mrf.mxu0
      %v2840 = vadd.f32 0.0, %v2839
      %v2841 = vpop.f32.mrf.mxu0
      %v2842 = vpop.f32.mrf.mxu0
      %v2843 = vadd.f32 0.0, %v2842
      %v2844 = vpop.f32.mrf.mxu0
      %2845 = vmatprep.mubr.bf16.mxu0 0
      %2846 = vmatmul.mubr.bf16.gmra.mxu0 %v2682
      %v2847 = vpop.f32.mrf.mxu0
      %v2848 = vadd.f32 0.0, %v2847
      %v2849 = vpop.f32.mrf.mxu0
      %v2850 = vpop.f32.mrf.mxu0
      %v2851 = vadd.f32 0.0, %v2850
      %v2852 = vpop.f32.mrf.mxu0
      %2853 = vmatprep.mubr.bf16.mxu0 0
      %2854 = vmatmul.mubr.bf16.gmra.mxu0 %v2685
      %v2855 = vpop.f32.mrf.mxu0
      %v2856 = vadd.f32 0.0, %v2855
      %v2857 = vpop.f32.mrf.mxu0
      %v2858 = vpop.f32.mrf.mxu0
      %v2859 = vadd.f32 0.0, %v2858
      %v2860 = vpop.f32.mrf.mxu0
      %2861 = vmatprep.mubr.bf16.mxu0 0
      %2862 = vmatmul.mubr.bf16.gmra.mxu0 %v2688
      %v2863 = vpop.f32.mrf.mxu0
      %v2864 = vadd.f32 0.0, %v2863
      %v2865 = vpop.f32.mrf.mxu0
      %v2866 = vpop.f32.mrf.mxu0
      %v2867 = vadd.f32 0.0, %v2866
      %v2868 = vpop.f32.mrf.mxu0
      %2869 = vdwg.mxu0
      %v2870 = vadd.f32 %v2544, %v2728
      %v2871 = vadd.f32 %v2545, %v2731
      %v2872 = vadd.f32 %v2546, %v2736
      %v2873 = vadd.f32 %v2547, %v2739
      %v2874 = vadd.f32 %v2548, %v2744
      %v2875 = vadd.f32 %v2549, %v2747
      %v2876 = vadd.f32 %v2550, %v2752
      %v2877 = vadd.f32 %v2551, %v2755
      %v2878 = vadd.f32 %v2552, %v2760
      %v2879 = vadd.f32 %v2553, %v2763
      %v2880 = vadd.f32 %v2554, %v2768
      %v2881 = vadd.f32 %v2555, %v2771
      %v2882 = vadd.f32 %v2556, %v2776
      %v2883 = vadd.f32 %v2557, %v2779
      %v2884 = vadd.f32 %v2558, %v2784
      %v2885 = vadd.f32 %v2559, %v2787
      %v2886 = vadd.f32 %v2560, %v2792
      %v2887 = vadd.f32 %v2561, %v2795
      %v2888 = vadd.f32 %v2562, %v2800
      %v2889 = vadd.f32 %v2563, %v2803
      %v2890 = vadd.f32 %v2564, %v2808
      %v2891 = vadd.f32 %v2565, %v2811
      %v2892 = vadd.f32 %v2566, %v2816
      %v2893 = vadd.f32 %v2567, %v2819
      %v2894 = vadd.f32 %v2568, %v2824
      %v2895 = vadd.f32 %v2569, %v2827
      %v2896 = vadd.f32 %v2570, %v2832
      %v2897 = vadd.f32 %v2571, %v2835
      %v2898 = vadd.f32 %v2572, %v2840
      %v2899 = vadd.f32 %v2573, %v2843
      %v2900 = vadd.f32 %v2574, %v2848
      %v2901 = vadd.f32 %v2575, %v2851
      %v2902 = vadd.f32 %v2576, %v2856
      %v2903 = vadd.f32 %v2577, %v2859
      %v2904 = vadd.f32 %v2578, %v2864
      %v2905 = vadd.f32 %v2579, %v2867
      %v2906 = vld [vmem:[%s265 + $0x26] sm:$0xff]
      %v2907 = vld [vmem:[%s265 + $0x2e] sm:$0xff]
      %v2908 = vld [vmem:[%s265 + $0x36] sm:$0xff]
      %v2909 = vld [vmem:[%s265 + $0x3e] sm:$0xff]
      %v2910 = vld [vmem:[%s265 + $0x46] sm:$0xff]
      %v2911 = vld [vmem:[%s265 + $0x4e] sm:$0xff]
      %v2912 = vld [vmem:[%s265 + $0x56] sm:$0xff]
      %v2913 = vld [vmem:[%s265 + $0x5e] sm:$0xff]
      %v2914 = vld [vmem:[%s265 + $0x66] sm:$0xff]
      %v2915 = vld [vmem:[%s265 + $0x6e] sm:$0xff]
      %v2916 = vld [vmem:[%s265 + $0x76] sm:$0xff]
      %v2917 = vld [vmem:[%s265 + $0x7e] sm:$0xff]
      %v2918 = vld [vmem:[%s265 + $0x86] sm:$0xff]
      %v2919 = vld [vmem:[%s265 + $0x8e] sm:$0xff]
      %v2920 = vld [vmem:[%s265 + $0x96] sm:$0xff]
      %v2921 = vld [vmem:[%s265 + $0x9e] sm:$0xff]
      %v2922 = vld [vmem:[%s265 + $0xa6] sm:$0xff]
      %v2923 = vld [vmem:[%s265 + $0xae] sm:$0xff]
      %v2924 = vld [vmem:[%s265 + $0xb6] sm:$0xff]
      %v2925 = vld [vmem:[%s265 + $0xbe] sm:$0xff]
      %v2926 = vld [vmem:[%s265 + $0xc6] sm:$0xff]
      %v2927 = vld [vmem:[%s265 + $0xce] sm:$0xff]
      %v2928 = vld [vmem:[%s265 + $0xd6] sm:$0xff]
      %v2929 = vld [vmem:[%s265 + $0xde] sm:$0xff]
      %v2930 = vld [vmem:[%s265 + $0xe6] sm:$0xff]
      %v2931 = vld [vmem:[%s265 + $0xee] sm:$0xff]
      %v2932 = vld [vmem:[%s265 + $0xf6] sm:$0xff]
      %v2933 = vld [vmem:[%s265 + $0xfe] sm:$0xff]
      %v2934 = vld [vmem:[%s265 + $0x106] sm:$0xff]
      %v2935 = vld [vmem:[%s265 + $0x10e] sm:$0xff]
      %v2936 = vld [vmem:[%s265 + $0x116] sm:$0xff]
      %v2937 = vld [vmem:[%s265 + $0x11e] sm:$0xff]
      %v2938 = vld [vmem:[%s265 + $0x126] sm:$0xff]
      %v2939 = vld [vmem:[%s265 + $0x12e] sm:$0xff]
      %v2940 = vld [vmem:[%s265 + $0x136] sm:$0xff]
      %v2941 = vld [vmem:[%s265 + $0x13e] sm:$0xff]
      %v2942 = vpack.c.bf16 %v2907, %v2906
      %v2943 = vpack.c.bf16 %v2909, %v2908
      %v2944 = vpack.c.bf16 %v2911, %v2910
      %v2945 = vpack.c.bf16 %v2913, %v2912
      %v2946 = vpack.c.bf16 %v2915, %v2914
      %v2947 = vpack.c.bf16 %v2917, %v2916
      %v2948 = vpack.c.bf16 %v2919, %v2918
      %v2949 = vpack.c.bf16 %v2921, %v2920
      %v2950 = vpack.c.bf16 %v2923, %v2922
      %v2951 = vpack.c.bf16 %v2925, %v2924
      %v2952 = vpack.c.bf16 %v2927, %v2926
      %v2953 = vpack.c.bf16 %v2929, %v2928
      %v2954 = vpack.c.bf16 %v2931, %v2930
      %v2955 = vpack.c.bf16 %v2933, %v2932
      %v2956 = vpack.c.bf16 %v2935, %v2934
      %v2957 = vpack.c.bf16 %v2937, %v2936
      %v2958 = vpack.c.bf16 %v2939, %v2938
      %v2959 = vpack.c.bf16 %v2941, %v2940
      %s2960 = scalar_lea.vmem %s1, 16
      %v2961 = vld [vmem:[%s2960] sm:$0x3]
      %v2963 = vsel %vm352, %v2942, 0
      %v2966 = vsel %vm352, %v2943, 0
      %v2969 = vsel %vm352, %v2944, 0
      %v2972 = vsel %vm352, %v2945, 0
      %v2975 = vsel %vm352, %v2946, 0
      %v2978 = vsel %vm352, %v2947, 0
      %v2981 = vsel %vm352, %v2948, 0
      %v2984 = vsel %vm352, %v2949, 0
      %v2987 = vsel %vm352, %v2950, 0
      %v2990 = vsel %vm352, %v2951, 0
      %v2993 = vsel %vm352, %v2952, 0
      %v2996 = vsel %vm352, %v2953, 0
      %v2999 = vsel %vm352, %v2954, 0
      %v3002 = vsel %vm352, %v2955, 0
      %v3005 = vsel %vm352, %v2956, 0
      %v3008 = vsel %vm352, %v2957, 0
      %v3011 = vsel %vm352, %v2958, 0
      %v3014 = vsel %vm352, %v2959, 0
      %v3017 = vsel %vm407, %v2961, 0
      %3019 = vmatprep.subr.bf16.mxu0 0
      %3020 = vmatpush1.bf16.msra.mxu0 0
      %3021 = vmatprep.subr.bf16.mxu0 0
      %3022 = vmatpush1.bf16.msra.mxu0 0
      %3023 = vmatprep.subr.bf16.mxu0 0
      %3024 = vmatpush1.bf16.msra.mxu0 0
      %3025 = vmatprep.subr.bf16.mxu0 0
      %3026 = vmatpush1.bf16.msra.mxu0 0
      %3027 = vmatprep.subr.bf16.mxu0 0
      %3028 = vmatpush1.bf16.msra.mxu0 0
      %3029 = vmatprep.subr.bf16.mxu0 0
      %3030 = vmatpush1.bf16.msra.mxu0 0
      %3031 = vmatprep.subr.bf16.mxu0 0
      %3032 = vmatpush1.bf16.msra.mxu0 0
      %3033 = vmatprep.subr.bf16.mxu0 0
      %3034 = vmatpush1.bf16.msra.mxu0 %v3017
      %3035 = vmatprep.subr.bf16.mxu0 0
      %3036 = vmatpush2.bf16.msra.mxu0 0
      %3037 = vmatprep.subr.bf16.mxu0 0
      %3038 = vmatpush2.bf16.msra.mxu0 0
      %3039 = vmatprep.subr.bf16.mxu0 0
      %3040 = vmatpush2.bf16.msra.mxu0 0
      %3041 = vmatprep.subr.bf16.mxu0 0
      %3042 = vmatpush2.bf16.msra.mxu0 0
      %3043 = vmatprep.subr.bf16.mxu0 0
      %3044 = vmatpush2.bf16.msra.mxu0 0
      %3045 = vmatprep.subr.bf16.mxu0 0
      %3046 = vmatpush2.bf16.msra.mxu0 0
      %3047 = vmatprep.subr.bf16.mxu0 0
      %3048 = vmatpush2.bf16.msra.mxu0 0
      %3049 = vmatprep.subr.bf16.mxu0 0
      %3050 = vmatpush2.bf16.msra.mxu0 0
      %3051 = vmatprep.mubr.bf16.mxu0 0
      %3052 = vmatmul.mubr.bf16.gmra.mxu0 %v2963
      %v3053 = vpop.f32.mrf.mxu0
      %v3054 = vadd.f32 0.0, %v3053
      %v3055 = vpop.f32.mrf.mxu0
      %v3056 = vpop.f32.mrf.mxu0
      %v3057 = vadd.f32 0.0, %v3056
      %v3058 = vpop.f32.mrf.mxu0
      %3059 = vmatprep.mubr.bf16.mxu0 0
      %3060 = vmatmul.mubr.bf16.gmra.mxu0 %v2966
      %v3061 = vpop.f32.mrf.mxu0
      %v3062 = vadd.f32 0.0, %v3061
      %v3063 = vpop.f32.mrf.mxu0
      %v3064 = vpop.f32.mrf.mxu0
      %v3065 = vadd.f32 0.0, %v3064
      %v3066 = vpop.f32.mrf.mxu0
      %3067 = vmatprep.mubr.bf16.mxu0 0
      %3068 = vmatmul.mubr.bf16.gmra.mxu0 %v2969
      %v3069 = vpop.f32.mrf.mxu0
      %v3070 = vadd.f32 0.0, %v3069
      %v3071 = vpop.f32.mrf.mxu0
      %v3072 = vpop.f32.mrf.mxu0
      %v3073 = vadd.f32 0.0, %v3072
      %v3074 = vpop.f32.mrf.mxu0
      %3075 = vmatprep.mubr.bf16.mxu0 0
      %3076 = vmatmul.mubr.bf16.gmra.mxu0 %v2972
      %v3077 = vpop.f32.mrf.mxu0
      %v3078 = vadd.f32 0.0, %v3077
      %v3079 = vpop.f32.mrf.mxu0
      %v3080 = vpop.f32.mrf.mxu0
      %v3081 = vadd.f32 0.0, %v3080
      %v3082 = vpop.f32.mrf.mxu0
      %3083 = vmatprep.mubr.bf16.mxu0 0
      %3084 = vmatmul.mubr.bf16.gmra.mxu0 %v2975
      %v3085 = vpop.f32.mrf.mxu0
      %v3086 = vadd.f32 0.0, %v3085
      %v3087 = vpop.f32.mrf.mxu0
      %v3088 = vpop.f32.mrf.mxu0
      %v3089 = vadd.f32 0.0, %v3088
      %v3090 = vpop.f32.mrf.mxu0
      %3091 = vmatprep.mubr.bf16.mxu0 0
      %3092 = vmatmul.mubr.bf16.gmra.mxu0 %v2978
      %v3093 = vpop.f32.mrf.mxu0
      %v3094 = vadd.f32 0.0, %v3093
      %v3095 = vpop.f32.mrf.mxu0
      %v3096 = vpop.f32.mrf.mxu0
      %v3097 = vadd.f32 0.0, %v3096
      %v3098 = vpop.f32.mrf.mxu0
      %3099 = vmatprep.mubr.bf16.mxu0 0
      %3100 = vmatmul.mubr.bf16.gmra.mxu0 %v2981
      %v3101 = vpop.f32.mrf.mxu0
      %v3102 = vadd.f32 0.0, %v3101
      %v3103 = vpop.f32.mrf.mxu0
      %v3104 = vpop.f32.mrf.mxu0
      %v3105 = vadd.f32 0.0, %v3104
      %v3106 = vpop.f32.mrf.mxu0
      %3107 = vmatprep.mubr.bf16.mxu0 0
      %3108 = vmatmul.mubr.bf16.gmra.mxu0 %v2984
      %v3109 = vpop.f32.mrf.mxu0
      %v3110 = vadd.f32 0.0, %v3109
      %v3111 = vpop.f32.mrf.mxu0
      %v3112 = vpop.f32.mrf.mxu0
      %v3113 = vadd.f32 0.0, %v3112
      %v3114 = vpop.f32.mrf.mxu0
      %3115 = vmatprep.mubr.bf16.mxu0 0
      %3116 = vmatmul.mubr.bf16.gmra.mxu0 %v2987
      %v3117 = vpop.f32.mrf.mxu0
      %v3118 = vadd.f32 0.0, %v3117
      %v3119 = vpop.f32.mrf.mxu0
      %v3120 = vpop.f32.mrf.mxu0
      %v3121 = vadd.f32 0.0, %v3120
      %v3122 = vpop.f32.mrf.mxu0
      %3123 = vmatprep.mubr.bf16.mxu0 0
      %3124 = vmatmul.mubr.bf16.gmra.mxu0 %v2990
      %v3125 = vpop.f32.mrf.mxu0
      %v3126 = vadd.f32 0.0, %v3125
      %v3127 = vpop.f32.mrf.mxu0
      %v3128 = vpop.f32.mrf.mxu0
      %v3129 = vadd.f32 0.0, %v3128
      %v3130 = vpop.f32.mrf.mxu0
      %3131 = vmatprep.mubr.bf16.mxu0 0
      %3132 = vmatmul.mubr.bf16.gmra.mxu0 %v2993
      %v3133 = vpop.f32.mrf.mxu0
      %v3134 = vadd.f32 0.0, %v3133
      %v3135 = vpop.f32.mrf.mxu0
      %v3136 = vpop.f32.mrf.mxu0
      %v3137 = vadd.f32 0.0, %v3136
      %v3138 = vpop.f32.mrf.mxu0
      %3139 = vmatprep.mubr.bf16.mxu0 0
      %3140 = vmatmul.mubr.bf16.gmra.mxu0 %v2996
      %v3141 = vpop.f32.mrf.mxu0
      %v3142 = vadd.f32 0.0, %v3141
      %v3143 = vpop.f32.mrf.mxu0
      %v3144 = vpop.f32.mrf.mxu0
      %v3145 = vadd.f32 0.0, %v3144
      %v3146 = vpop.f32.mrf.mxu0
      %3147 = vmatprep.mubr.bf16.mxu0 0
      %3148 = vmatmul.mubr.bf16.gmra.mxu0 %v2999
      %v3149 = vpop.f32.mrf.mxu0
      %v3150 = vadd.f32 0.0, %v3149
      %v3151 = vpop.f32.mrf.mxu0
      %v3152 = vpop.f32.mrf.mxu0
      %v3153 = vadd.f32 0.0, %v3152
      %v3154 = vpop.f32.mrf.mxu0
      %3155 = vmatprep.mubr.bf16.mxu0 0
      %3156 = vmatmul.mubr.bf16.gmra.mxu0 %v3002
      %v3157 = vpop.f32.mrf.mxu0
      %v3158 = vadd.f32 0.0, %v3157
      %v3159 = vpop.f32.mrf.mxu0
      %v3160 = vpop.f32.mrf.mxu0
      %v3161 = vadd.f32 0.0, %v3160
      %v3162 = vpop.f32.mrf.mxu0
      %3163 = vmatprep.mubr.bf16.mxu0 0
      %3164 = vmatmul.mubr.bf16.gmra.mxu0 %v3005
      %v3165 = vpop.f32.mrf.mxu0
      %v3166 = vadd.f32 0.0, %v3165
      %v3167 = vpop.f32.mrf.mxu0
      %v3168 = vpop.f32.mrf.mxu0
      %v3169 = vadd.f32 0.0, %v3168
      %v3170 = vpop.f32.mrf.mxu0
      %3171 = vmatprep.mubr.bf16.mxu0 0
      %3172 = vmatmul.mubr.bf16.gmra.mxu0 %v3008
      %v3173 = vpop.f32.mrf.mxu0
      %v3174 = vadd.f32 0.0, %v3173
      %v3175 = vpop.f32.mrf.mxu0
      %v3176 = vpop.f32.mrf.mxu0
      %v3177 = vadd.f32 0.0, %v3176
      %v3178 = vpop.f32.mrf.mxu0
      %3179 = vmatprep.mubr.bf16.mxu0 0
      %3180 = vmatmul.mubr.bf16.gmra.mxu0 %v3011
      %v3181 = vpop.f32.mrf.mxu0
      %v3182 = vadd.f32 0.0, %v3181
      %v3183 = vpop.f32.mrf.mxu0
      %v3184 = vpop.f32.mrf.mxu0
      %v3185 = vadd.f32 0.0, %v3184
      %v3186 = vpop.f32.mrf.mxu0
      %3187 = vmatprep.mubr.bf16.mxu0 0
      %3188 = vmatmul.mubr.bf16.gmra.mxu0 %v3014
      %v3189 = vpop.f32.mrf.mxu0
      %v3190 = vadd.f32 0.0, %v3189
      %v3191 = vpop.f32.mrf.mxu0
      %v3192 = vpop.f32.mrf.mxu0
      %v3193 = vadd.f32 0.0, %v3192
      %v3194 = vpop.f32.mrf.mxu0
      %3195 = vdwg.mxu0
      %v3196 = vadd.f32 %v2870, %v3054
      %v3197 = vadd.f32 %v2871, %v3057
      %v3198 = vadd.f32 %v2872, %v3062
      %v3199 = vadd.f32 %v2873, %v3065
      %v3200 = vadd.f32 %v2874, %v3070
      %v3201 = vadd.f32 %v2875, %v3073
      %v3202 = vadd.f32 %v2876, %v3078
      %v3203 = vadd.f32 %v2877, %v3081
      %v3204 = vadd.f32 %v2878, %v3086
      %v3205 = vadd.f32 %v2879, %v3089
      %v3206 = vadd.f32 %v2880, %v3094
      %v3207 = vadd.f32 %v2881, %v3097
      %v3208 = vadd.f32 %v2882, %v3102
      %v3209 = vadd.f32 %v2883, %v3105
      %v3210 = vadd.f32 %v2884, %v3110
      %v3211 = vadd.f32 %v2885, %v3113
      %v3212 = vadd.f32 %v2886, %v3118
      %v3213 = vadd.f32 %v2887, %v3121
      %v3214 = vadd.f32 %v2888, %v3126
      %v3215 = vadd.f32 %v2889, %v3129
      %v3216 = vadd.f32 %v2890, %v3134
      %v3217 = vadd.f32 %v2891, %v3137
      %v3218 = vadd.f32 %v2892, %v3142
      %v3219 = vadd.f32 %v2893, %v3145
      %v3220 = vadd.f32 %v2894, %v3150
      %v3221 = vadd.f32 %v2895, %v3153
      %v3222 = vadd.f32 %v2896, %v3158
      %v3223 = vadd.f32 %v2897, %v3161
      %v3224 = vadd.f32 %v2898, %v3166
      %v3225 = vadd.f32 %v2899, %v3169
      %v3226 = vadd.f32 %v2900, %v3174
      %v3227 = vadd.f32 %v2901, %v3177
      %v3228 = vadd.f32 %v2902, %v3182
      %v3229 = vadd.f32 %v2903, %v3185
      %v3230 = vadd.f32 %v2904, %v3190
      %v3231 = vadd.f32 %v2905, %v3193
      %v3232 = vpack.c.bf16 %v3197, %v3196
      %v3233 = vpack.c.bf16 %v3199, %v3198
      %v3234 = vpack.c.bf16 %v3201, %v3200
      %v3235 = vpack.c.bf16 %v3203, %v3202
      %v3236 = vpack.c.bf16 %v3205, %v3204
      %v3237 = vpack.c.bf16 %v3207, %v3206
      %v3238 = vpack.c.bf16 %v3209, %v3208
      %v3239 = vpack.c.bf16 %v3211, %v3210
      %v3240 = vpack.c.bf16 %v3213, %v3212
      %v3241 = vpack.c.bf16 %v3215, %v3214
      %v3242 = vpack.c.bf16 %v3217, %v3216
      %v3243 = vpack.c.bf16 %v3219, %v3218
      %v3244 = vpack.c.bf16 %v3221, %v3220
      %v3245 = vpack.c.bf16 %v3223, %v3222
      %v3246 = vpack.c.bf16 %v3225, %v3224
      %v3247 = vpack.c.bf16 %v3227, %v3226
      %v3248 = vpack.c.bf16 %v3229, %v3228
      %v3249 = vpack.c.bf16 %v3231, %v3230
      %v3268 = vunpack.c.l.b16 %v3232
      %v3269 = vunpack.c.h.b16 %v3232
      %v3270 = vunpack.c.l.b16 %v3233
      %v3271 = vunpack.c.h.b16 %v3233
      %v3272 = vunpack.c.l.b16 %v3234
      %v3273 = vunpack.c.h.b16 %v3234
      %v3274 = vunpack.c.l.b16 %v3235
      %v3275 = vunpack.c.h.b16 %v3235
      %v3276 = vunpack.c.l.b16 %v3236
      %v3277 = vunpack.c.h.b16 %v3236
      %v3278 = vunpack.c.l.b16 %v3237
      %v3279 = vunpack.c.h.b16 %v3237
      %v3280 = vunpack.c.l.b16 %v3238
      %v3281 = vunpack.c.h.b16 %v3238
      %v3282 = vunpack.c.l.b16 %v3239
      %v3283 = vunpack.c.h.b16 %v3239
      %v3284 = vunpack.c.l.b16 %v3240
      %v3285 = vunpack.c.h.b16 %v3240
      %v3286 = vunpack.c.l.b16 %v3241
      %v3287 = vunpack.c.h.b16 %v3241
      %v3288 = vunpack.c.l.b16 %v3242
      %v3289 = vunpack.c.h.b16 %v3242
      %v3290 = vunpack.c.l.b16 %v3243
      %v3291 = vunpack.c.h.b16 %v3243
      %v3292 = vunpack.c.l.b16 %v3244
      %v3293 = vunpack.c.h.b16 %v3244
      %v3294 = vunpack.c.l.b16 %v3245
      %v3295 = vunpack.c.h.b16 %v3245
      %v3296 = vunpack.c.l.b16 %v3246
      %v3297 = vunpack.c.h.b16 %v3246
      %v3298 = vunpack.c.l.b16 %v3247
      %v3299 = vunpack.c.h.b16 %v3247
      %v3300 = vunpack.c.l.b16 %v3248
      %v3301 = vunpack.c.h.b16 %v3248
      %v3302 = vunpack.c.l.b16 %v3249
      %v3303 = vunpack.c.h.b16 %v3249
      %v3304 = vpack.c.b16 %v3268, %v3268
      %v3305 = vpack.c.b16 %v3269, %v3269
      %v3306 = vpack.c.b16 %v3270, %v3270
      %v3307 = vpack.c.b16 %v3271, %v3271
      %v3308 = vpack.c.b16 %v3272, %v3272
      %v3309 = vpack.c.b16 %v3273, %v3273
      %v3310 = vpack.c.b16 %v3274, %v3274
      %v3311 = vpack.c.b16 %v3275, %v3275
      %v3312 = vpack.c.b16 %v3276, %v3276
      %v3313 = vpack.c.b16 %v3277, %v3277
      %v3314 = vpack.c.b16 %v3278, %v3278
      %v3315 = vpack.c.b16 %v3279, %v3279
      %v3316 = vpack.c.b16 %v3280, %v3280
      %v3317 = vpack.c.b16 %v3281, %v3281
      %v3318 = vpack.c.b16 %v3282, %v3282
      %v3319 = vpack.c.b16 %v3283, %v3283
      %v3320 = vpack.c.b16 %v3284, %v3284
      %v3321 = vpack.c.b16 %v3285, %v3285
      %v3322 = vpack.c.b16 %v3286, %v3286
      %v3323 = vpack.c.b16 %v3287, %v3287
      %v3324 = vpack.c.b16 %v3288, %v3288
      %v3325 = vpack.c.b16 %v3289, %v3289
      %v3326 = vpack.c.b16 %v3290, %v3290
      %v3327 = vpack.c.b16 %v3291, %v3291
      %v3328 = vpack.c.b16 %v3292, %v3292
      %v3329 = vpack.c.b16 %v3293, %v3293
      %v3330 = vpack.c.b16 %v3294, %v3294
      %v3331 = vpack.c.b16 %v3295, %v3295
      %v3332 = vpack.c.b16 %v3296, %v3296
      %v3333 = vpack.c.b16 %v3297, %v3297
      %v3334 = vpack.c.b16 %v3298, %v3298
      %v3335 = vpack.c.b16 %v3299, %v3299
      %v3336 = vpack.c.b16 %v3300, %v3300
      %v3337 = vpack.c.b16 %v3301, %v3301
      %v3338 = vpack.c.b16 %v3302, %v3302
      %v3339 = vpack.c.b16 %v3303, %v3303
      %3376 = vst [vmem:[%s280] sm:$0xf] %v3304
      %3377 = vst [vmem:[%s280 + $0x4] sm:$0xf] %v3305
      %3378 = vst [vmem:[%s280 + $0x8] sm:$0xf] %v3306
      %3379 = vst [vmem:[%s280 + $0xc] sm:$0xf] %v3307
      %3380 = vst [vmem:[%s280 + $0x10] sm:$0xf] %v3308
      %3381 = vst [vmem:[%s280 + $0x14] sm:$0xf] %v3309
      %3382 = vst [vmem:[%s280 + $0x18] sm:$0xf] %v3310
      %3383 = vst [vmem:[%s280 + $0x1c] sm:$0xf] %v3311
      %3384 = vst [vmem:[%s280 + $0x20] sm:$0xf] %v3312
      %3385 = vst [vmem:[%s280 + $0x24] sm:$0xf] %v3313
      %3386 = vst [vmem:[%s280 + $0x28] sm:$0xf] %v3314
      %3387 = vst [vmem:[%s280 + $0x2c] sm:$0xf] %v3315
      %3388 = vst [vmem:[%s280 + $0x30] sm:$0xf] %v3316
      %3389 = vst [vmem:[%s280 + $0x34] sm:$0xf] %v3317
      %3390 = vst [vmem:[%s280 + $0x38] sm:$0xf] %v3318
      %3391 = vst [vmem:[%s280 + $0x3c] sm:$0xf] %v3319
      %3392 = vst [vmem:[%s280 + $0x40] sm:$0xf] %v3320
      %3393 = vst [vmem:[%s280 + $0x44] sm:$0xf] %v3321
      %3394 = vst [vmem:[%s280 + $0x48] sm:$0xf] %v3322
      %3395 = vst [vmem:[%s280 + $0x4c] sm:$0xf] %v3323
      %3396 = vst [vmem:[%s280 + $0x50] sm:$0xf] %v3324
      %3397 = vst [vmem:[%s280 + $0x54] sm:$0xf] %v3325
      %3398 = vst [vmem:[%s280 + $0x58] sm:$0xf] %v3326
      %3399 = vst [vmem:[%s280 + $0x5c] sm:$0xf] %v3327
      %3400 = vst [vmem:[%s280 + $0x60] sm:$0xf] %v3328
      %3401 = vst [vmem:[%s280 + $0x64] sm:$0xf] %v3329
      %3402 = vst [vmem:[%s280 + $0x68] sm:$0xf] %v3330
      %3403 = vst [vmem:[%s280 + $0x6c] sm:$0xf] %v3331
      %3404 = vst [vmem:[%s280 + $0x70] sm:$0xf] %v3332
      %3405 = vst [vmem:[%s280 + $0x74] sm:$0xf] %v3333
      %3406 = vst [vmem:[%s280 + $0x78] sm:$0xf] %v3334
      %3407 = vst [vmem:[%s280 + $0x7c] sm:$0xf] %v3335
      %3408 = vst [vmem:[%s280 + $0x80] sm:$0xf] %v3336
      %3409 = vst [vmem:[%s280 + $0x84] sm:$0xf] %v3337
      %3410 = vst [vmem:[%s280 + $0x88] sm:$0xf] %v3338
      %3411 = vst [vmem:[%s280 + $0x8c] sm:$0xf] %v3339
      %v3412 = vld [vmem:[%s270] sm:$0xff]
      %v3413 = vld [vmem:[%s270 + $0x8] sm:$0xff]
      %v3414 = vld [vmem:[%s270 + $0x10] sm:$0xff]
      %v3415 = vld [vmem:[%s270 + $0x18] sm:$0xff]
      %v3416 = vld [vmem:[%s270 + $0x20] sm:$0xff]
      %v3417 = vld [vmem:[%s270 + $0x28] sm:$0xff]
      %v3418 = vld [vmem:[%s270 + $0x30] sm:$0xff]
      %v3419 = vld [vmem:[%s270 + $0x38] sm:$0xff]
      %v3420 = vld [vmem:[%s270 + $0x40] sm:$0xff]
      %v3421 = vld [vmem:[%s270 + $0x48] sm:$0xff]
      %v3422 = vld [vmem:[%s270 + $0x50] sm:$0xff]
      %v3423 = vld [vmem:[%s270 + $0x58] sm:$0xff]
      %v3424 = vld [vmem:[%s270 + $0x60] sm:$0xff]
      %v3425 = vld [vmem:[%s270 + $0x68] sm:$0xff]
      %v3426 = vld [vmem:[%s270 + $0x70] sm:$0xff]
      %v3427 = vld [vmem:[%s270 + $0x78] sm:$0xff]
      %v3428 = vld [vmem:[%s270 + $0x80] sm:$0xff]
      %v3429 = vld [vmem:[%s270 + $0x88] sm:$0xff]
      %v3430 = vld [vmem:[%s270 + $0x90] sm:$0xff]
      %v3431 = vld [vmem:[%s270 + $0x98] sm:$0xff]
      %v3432 = vld [vmem:[%s270 + $0xa0] sm:$0xff]
      %v3433 = vld [vmem:[%s270 + $0xa8] sm:$0xff]
      %v3434 = vld [vmem:[%s270 + $0xb0] sm:$0xff]
      %v3435 = vld [vmem:[%s270 + $0xb8] sm:$0xff]
      %v3436 = vld [vmem:[%s270 + $0xc0] sm:$0xff]
      %v3437 = vld [vmem:[%s270 + $0xc8] sm:$0xff]
      %v3438 = vld [vmem:[%s270 + $0xd0] sm:$0xff]
      %v3439 = vld [vmem:[%s270 + $0xd8] sm:$0xff]
      %v3440 = vld [vmem:[%s270 + $0xe0] sm:$0xff]
      %v3441 = vld [vmem:[%s270 + $0xe8] sm:$0xff]
      %v3442 = vld [vmem:[%s270 + $0xf0] sm:$0xff]
      %v3443 = vld [vmem:[%s270 + $0xf8] sm:$0xff]
      %v3444 = vld [vmem:[%s270 + $0x100] sm:$0xff]
      %v3445 = vld [vmem:[%s270 + $0x108] sm:$0xff]
      %v3446 = vld [vmem:[%s270 + $0x110] sm:$0xff]
      %v3447 = vld [vmem:[%s270 + $0x118] sm:$0xff]
      %3449 = vset.pattern.permute.xlu0 0
      %3450 = vperm.xlu0 %3449, %v3412
      %v3451 = vpop.permute.xlu0 %3450
      %3454 = vset.pattern.permute.xlu0 0
      %3455 = vperm.xlu0 %3454, %v3413
      %v3456 = vpop.permute.xlu0 %3455
      %3459 = vset.pattern.permute.xlu0 0
      %3460 = vperm.xlu0 %3459, %v3414
      %v3461 = vpop.permute.xlu0 %3460
      %3464 = vset.pattern.permute.xlu0 0
      %3465 = vperm.xlu0 %3464, %v3415
      %v3466 = vpop.permute.xlu0 %3465
      %3469 = vset.pattern.permute.xlu0 0
      %3470 = vperm.xlu0 %3469, %v3416
      %v3471 = vpop.permute.xlu0 %3470
      %3474 = vset.pattern.permute.xlu0 0
      %3475 = vperm.xlu0 %3474, %v3417
      %v3476 = vpop.permute.xlu0 %3475
      %3479 = vset.pattern.permute.xlu0 0
      %3480 = vperm.xlu0 %3479, %v3418
      %v3481 = vpop.permute.xlu0 %3480
      %3484 = vset.pattern.permute.xlu0 0
      %3485 = vperm.xlu0 %3484, %v3419
      %v3486 = vpop.permute.xlu0 %3485
      %3489 = vset.pattern.permute.xlu0 0
      %3490 = vperm.xlu0 %3489, %v3420
      %v3491 = vpop.permute.xlu0 %3490
      %3494 = vset.pattern.permute.xlu0 0
      %3495 = vperm.xlu0 %3494, %v3421
      %v3496 = vpop.permute.xlu0 %3495
      %3499 = vset.pattern.permute.xlu0 0
      %3500 = vperm.xlu0 %3499, %v3422
      %v3501 = vpop.permute.xlu0 %3500
      %3504 = vset.pattern.permute.xlu0 0
      %3505 = vperm.xlu0 %3504, %v3423
      %v3506 = vpop.permute.xlu0 %3505
      %3509 = vset.pattern.permute.xlu0 0
      %3510 = vperm.xlu0 %3509, %v3424
      %v3511 = vpop.permute.xlu0 %3510
      %3514 = vset.pattern.permute.xlu0 0
      %3515 = vperm.xlu0 %3514, %v3425
      %v3516 = vpop.permute.xlu0 %3515
      %3519 = vset.pattern.permute.xlu0 0
      %3520 = vperm.xlu0 %3519, %v3426
      %v3521 = vpop.permute.xlu0 %3520
      %3524 = vset.pattern.permute.xlu0 0
      %3525 = vperm.xlu0 %3524, %v3427
      %v3526 = vpop.permute.xlu0 %3525
      %3529 = vset.pattern.permute.xlu0 0
      %3530 = vperm.xlu0 %3529, %v3428
      %v3531 = vpop.permute.xlu0 %3530
      %3534 = vset.pattern.permute.xlu0 0
      %3535 = vperm.xlu0 %3534, %v3429
      %v3536 = vpop.permute.xlu0 %3535
      %3539 = vset.pattern.permute.xlu0 0
      %3540 = vperm.xlu0 %3539, %v3430
      %v3541 = vpop.permute.xlu0 %3540
      %3544 = vset.pattern.permute.xlu0 0
      %3545 = vperm.xlu0 %3544, %v3431
      %v3546 = vpop.permute.xlu0 %3545
      %3549 = vset.pattern.permute.xlu0 0
      %3550 = vperm.xlu0 %3549, %v3432
      %v3551 = vpop.permute.xlu0 %3550
      %3554 = vset.pattern.permute.xlu0 0
      %3555 = vperm.xlu0 %3554, %v3433
      %v3556 = vpop.permute.xlu0 %3555
      %3559 = vset.pattern.permute.xlu0 0
      %3560 = vperm.xlu0 %3559, %v3434
      %v3561 = vpop.permute.xlu0 %3560
      %3564 = vset.pattern.permute.xlu0 0
      %3565 = vperm.xlu0 %3564, %v3435
      %v3566 = vpop.permute.xlu0 %3565
      %3569 = vset.pattern.permute.xlu0 0
      %3570 = vperm.xlu0 %3569, %v3436
      %v3571 = vpop.permute.xlu0 %3570
      %3574 = vset.pattern.permute.xlu0 0
      %3575 = vperm.xlu0 %3574, %v3437
      %v3576 = vpop.permute.xlu0 %3575
      %3579 = vset.pattern.permute.xlu0 0
      %3580 = vperm.xlu0 %3579, %v3438
      %v3581 = vpop.permute.xlu0 %3580
      %3584 = vset.pattern.permute.xlu0 0
      %3585 = vperm.xlu0 %3584, %v3439
      %v3586 = vpop.permute.xlu0 %3585
      %3589 = vset.pattern.permute.xlu0 0
      %3590 = vperm.xlu0 %3589, %v3440
      %v3591 = vpop.permute.xlu0 %3590
      %3594 = vset.pattern.permute.xlu0 0
      %3595 = vperm.xlu0 %3594, %v3441
      %v3596 = vpop.permute.xlu0 %3595
      %3599 = vset.pattern.permute.xlu0 0
      %3600 = vperm.xlu0 %3599, %v3442
      %v3601 = vpop.permute.xlu0 %3600
      %3604 = vset.pattern.permute.xlu0 0
      %3605 = vperm.xlu0 %3604, %v3443
      %v3606 = vpop.permute.xlu0 %3605
      %3609 = vset.pattern.permute.xlu0 0
      %3610 = vperm.xlu0 %3609, %v3444
      %v3611 = vpop.permute.xlu0 %3610
      %3614 = vset.pattern.permute.xlu0 0
      %3615 = vperm.xlu0 %3614, %v3445
      %v3616 = vpop.permute.xlu0 %3615
      %3619 = vset.pattern.permute.xlu0 0
      %3620 = vperm.xlu0 %3619, %v3446
      %v3621 = vpop.permute.xlu0 %3620
      %3624 = vset.pattern.permute.xlu0 0
      %3625 = vperm.xlu0 %3624, %v3447
      %v3626 = vpop.permute.xlu0 %3625
      %v3628 = vmul.f32 %v3196, %v3451
      %v3629 = vmul.f32 %v3197, %v3456
      %v3630 = vmul.f32 %v3198, %v3461
      %v3631 = vmul.f32 %v3199, %v3466
      %v3632 = vmul.f32 %v3200, %v3471
      %v3633 = vmul.f32 %v3201, %v3476
      %v3634 = vmul.f32 %v3202, %v3481
      %v3635 = vmul.f32 %v3203, %v3486
      %v3636 = vmul.f32 %v3204, %v3491
      %v3637 = vmul.f32 %v3205, %v3496
      %v3638 = vmul.f32 %v3206, %v3501
      %v3639 = vmul.f32 %v3207, %v3506
      %v3640 = vmul.f32 %v3208, %v3511
      %v3641 = vmul.f32 %v3209, %v3516
      %v3642 = vmul.f32 %v3210, %v3521
      %v3643 = vmul.f32 %v3211, %v3526
      %v3644 = vmul.f32 %v3212, %v3531
      %v3645 = vmul.f32 %v3213, %v3536
      %v3646 = vmul.f32 %v3214, %v3541
      %v3647 = vmul.f32 %v3215, %v3546
      %v3648 = vmul.f32 %v3216, %v3551
      %v3649 = vmul.f32 %v3217, %v3556
      %v3650 = vmul.f32 %v3218, %v3561
      %v3651 = vmul.f32 %v3219, %v3566
      %v3652 = vmul.f32 %v3220, %v3571
      %v3653 = vmul.f32 %v3221, %v3576
      %v3654 = vmul.f32 %v3222, %v3581
      %v3655 = vmul.f32 %v3223, %v3586
      %v3656 = vmul.f32 %v3224, %v3591
      %v3657 = vmul.f32 %v3225, %v3596
      %v3658 = vmul.f32 %v3226, %v3601
      %v3659 = vmul.f32 %v3227, %v3606
      %v3660 = vmul.f32 %v3228, %v3611
      %v3661 = vmul.f32 %v3229, %v3616
      %v3662 = vmul.f32 %v3230, %v3621
      %v3663 = vmul.f32 %v3231, %v3626
      %v3664 = vadd.f32 %v3628, %v3629
      %v3665 = vadd.f32 %v3664, %v3630
      %v3666 = vadd.f32 %v3665, %v3631
      %v3667 = vadd.f32 %v3666, %v3632
      %v3668 = vadd.f32 %v3667, %v3633
      %v3669 = vadd.f32 %v3668, %v3634
      %v3670 = vadd.f32 %v3669, %v3635
      %v3671 = vadd.f32 %v3670, %v3636
      %v3672 = vadd.f32 %v3671, %v3637
      %v3673 = vadd.f32 %v3672, %v3638
      %v3674 = vadd.f32 %v3673, %v3639
      %v3675 = vadd.f32 %v3674, %v3640
      %v3676 = vadd.f32 %v3675, %v3641
      %v3677 = vadd.f32 %v3676, %v3642
      %v3678 = vadd.f32 %v3677, %v3643
      %v3679 = vadd.f32 %v3678, %v3644
      %v3680 = vadd.f32 %v3679, %v3645
      %v3681 = vadd.f32 %v3680, %v3646
      %v3682 = vadd.f32 %v3681, %v3647
      %v3683 = vadd.f32 %v3682, %v3648
      %v3684 = vadd.f32 %v3683, %v3649
      %v3685 = vadd.f32 %v3684, %v3650
      %v3686 = vadd.f32 %v3685, %v3651
      %v3687 = vadd.f32 %v3686, %v3652
      %v3688 = vadd.f32 %v3687, %v3653
      %v3689 = vadd.f32 %v3688, %v3654
      %v3690 = vadd.f32 %v3689, %v3655
      %v3691 = vadd.f32 %v3690, %v3656
      %v3692 = vadd.f32 %v3691, %v3657
      %v3693 = vadd.f32 %v3692, %v3658
      %v3694 = vadd.f32 %v3693, %v3659
      %v3695 = vadd.f32 %v3694, %v3660
      %v3696 = vadd.f32 %v3695, %v3661
      %v3697 = vadd.f32 %v3696, %v3662
      %v3698 = vadd.f32 %v3697, %v3663
      %v3699 = vrot.slane %v3698, 4
      %v3700 = vadd.f32 %v3698, %v3699
      %v3701 = vrot.slane %v3700, 2
      %v3702 = vadd.f32 %v3700, %v3701
      %v3703 = vrot.slane %v3702, 1
      %v3704 = vadd.f32 %v3702, %v3703
      %3705 = vst [vmem:[%s288] sm:$0x1] %v3704
      %v3706 = vmul.f32 %v3628, %v3628
      %v3707 = vmul.f32 %v3629, %v3629
      %v3708 = vmul.f32 %v3630, %v3630
      %v3709 = vmul.f32 %v3631, %v3631
      %v3710 = vmul.f32 %v3632, %v3632
      %v3711 = vmul.f32 %v3633, %v3633
      %v3712 = vmul.f32 %v3634, %v3634
      %v3713 = vmul.f32 %v3635, %v3635
      %v3714 = vmul.f32 %v3636, %v3636
      %v3715 = vmul.f32 %v3637, %v3637
      %v3716 = vmul.f32 %v3638, %v3638
      %v3717 = vmul.f32 %v3639, %v3639
      %v3718 = vmul.f32 %v3640, %v3640
      %v3719 = vmul.f32 %v3641, %v3641
      %v3720 = vmul.f32 %v3642, %v3642
      %v3721 = vmul.f32 %v3643, %v3643
      %v3722 = vmul.f32 %v3644, %v3644
      %v3723 = vmul.f32 %v3645, %v3645
      %v3724 = vmul.f32 %v3646, %v3646
      %v3725 = vmul.f32 %v3647, %v3647
      %v3726 = vmul.f32 %v3648, %v3648
      %v3727 = vmul.f32 %v3649, %v3649
      %v3728 = vmul.f32 %v3650, %v3650
      %v3729 = vmul.f32 %v3651, %v3651
      %v3730 = vmul.f32 %v3652, %v3652
      %v3731 = vmul.f32 %v3653, %v3653
      %v3732 = vmul.f32 %v3654, %v3654
      %v3733 = vmul.f32 %v3655, %v3655
      %v3734 = vmul.f32 %v3656, %v3656
      %v3735 = vmul.f32 %v3657, %v3657
      %v3736 = vmul.f32 %v3658, %v3658
      %v3737 = vmul.f32 %v3659, %v3659
      %v3738 = vmul.f32 %v3660, %v3660
      %v3739 = vmul.f32 %v3661, %v3661
      %v3740 = vmul.f32 %v3662, %v3662
      %v3741 = vmul.f32 %v3663, %v3663
      %v3742 = vadd.f32 %v3706, %v3707
      %v3743 = vadd.f32 %v3742, %v3708
      %v3744 = vadd.f32 %v3743, %v3709
      %v3745 = vadd.f32 %v3744, %v3710
      %v3746 = vadd.f32 %v3745, %v3711
      %v3747 = vadd.f32 %v3746, %v3712
      %v3748 = vadd.f32 %v3747, %v3713
      %v3749 = vadd.f32 %v3748, %v3714
      %v3750 = vadd.f32 %v3749, %v3715
      %v3751 = vadd.f32 %v3750, %v3716
      %v3752 = vadd.f32 %v3751, %v3717
      %v3753 = vadd.f32 %v3752, %v3718
      %v3754 = vadd.f32 %v3753, %v3719
      %v3755 = vadd.f32 %v3754, %v3720
      %v3756 = vadd.f32 %v3755, %v3721
      %v3757 = vadd.f32 %v3756, %v3722
      %v3758 = vadd.f32 %v3757, %v3723
      %v3759 = vadd.f32 %v3758, %v3724
      %v3760 = vadd.f32 %v3759, %v3725
      %v3761 = vadd.f32 %v3760, %v3726
      %v3762 = vadd.f32 %v3761, %v3727
      %v3763 = vadd.f32 %v3762, %v3728
      %v3764 = vadd.f32 %v3763, %v3729
      %v3765 = vadd.f32 %v3764, %v3730
      %v3766 = vadd.f32 %v3765, %v3731
      %v3767 = vadd.f32 %v3766, %v3732
      %v3768 = vadd.f32 %v3767, %v3733
      %v3769 = vadd.f32 %v3768, %v3734
      %v3770 = vadd.f32 %v3769, %v3735
      %v3771 = vadd.f32 %v3770, %v3736
      %v3772 = vadd.f32 %v3771, %v3737
      %v3773 = vadd.f32 %v3772, %v3738
      %v3774 = vadd.f32 %v3773, %v3739
      %v3775 = vadd.f32 %v3774, %v3740
      %v3776 = vadd.f32 %v3775, %v3741
      %v3777 = vrot.slane %v3776, 4
      %v3778 = vadd.f32 %v3776, %v3777
      %v3779 = vrot.slane %v3778, 2
      %v3780 = vadd.f32 %v3778, %v3779
      %v3781 = vrot.slane %v3780, 1
      %v3782 = vadd.f32 %v3780, %v3781
      %3783 = vst [vmem:[%s288 + $0x1] sm:$0x1] %v3782
      %s3784 = smul.u32 36, %s22
      %p3785 = scmp.lt.s32.totalorder %s21, 1
      %s3786 = scalar_select %p3785, %s21, 1
      %p3787 = scmp.lt.s32.totalorder %s3784, 35
      %s3788 = scalar_select %p3787, %s3784, 35
      %s3789 = smul.addr %s3786, 36
      %s3790 = sadd.s32 %s3788, %s3789
      %s3791 = smul.addr %s3790, 4
      %s3792 = scalar_lea.vmem %s4, %s3791
      %p3793 = scmp.lt.s32.totalorder %s21, 1
      %s3794 = scalar_select %p3793, %s21, 1
      %p3795 = scmp.lt.s32.totalorder %s22, 0
      %s3796 = scalar_select %p3795, %s22, 0
      %s3797 = sadd.s32 %s3796, %s3794
      %s3798 = smul.addr %s3797, 2
      %s3799 = scalar_lea.vmem %s5, %s3798
      // Predicated region
      $region37: #{basic_block_dec.3} parent=35 // pred_check
        %p3800 = pneg %p143
      $region38: #{basic_block_dec.3} parent=35 // pred_check_branch
        %3802 = sbr.rel (%p3800) target = $region40
      $region39: #{basic_block_dec.3} parent=35 // pred_region
        %s3803 = smul.u32 36, %s22
      $region40: #{basic_block_dec.3} parent=35 // pred_fallthru
        _
      // Predicated region
      $region41: #{basic_block_dec.3} parent=35 // pred_check
        %p3804 = pneg %p171
      $region42: #{basic_block_dec.3} parent=35 // pred_check_branch
        %3806 = sbr.rel (%p3804) target = $region44
      $region43: #{basic_block_dec.3} parent=35 // pred_region
        _
      $region44: #{basic_block_dec.3} parent=35 // pred_fallthru
        _
    $region36: #{basic_block_dec.3} parent=5 // pred_fallthru
      _
    %p3807 = scmp.le.s32.totalorder 2, %s12
    // Predicated region
    $region45: #{basic_block_dec.3} parent=5 // pred_check
      %p3808 = pneg %p3807
    $region46: #{basic_block_dec.3} parent=5 // pred_check_branch
      %3810 = sbr.rel (%p3808) target = $region48
    $region47: #{basic_block_dec.3} parent=5 // pred_region
      %s3811 = ssub.s32 %s12, 2
      // Predicated region
      $region49: #{basic_block_dec.3} parent=47 // pred_check
        %p3812 = pneg %p149
      $region50: #{basic_block_dec.3} parent=47 // pred_check_branch
        %3814 = sbr.rel (%p3812) target = $region52
      $region51: #{basic_block_dec.3} parent=47 // pred_region
        %s3815 = smul.u32 36, %s24
        %p3816 = scmp.lt.s32.totalorder %s23, 1
        %s3817 = scalar_select %p3816, %s23, 1
        %p3818 = scmp.lt.s32.totalorder %s3815, 35
        %s3819 = scalar_select %p3818, %s3815, 35
        %s3820 = smul.addr %s3817, 36
        %s3821 = sadd.s32 %s3819, %s3820
        %s3822 = smul.addr %s3821, 4
        %s3823 = scalar_lea.vmem %s4, %s3822
      $region52: #{basic_block_dec.3} parent=47 // pred_fallthru
        _
      // Predicated region
      $region53: #{basic_block_dec.3} parent=47 // pred_check
        %p3824 = pneg %p177
      $region54: #{basic_block_dec.3} parent=47 // pred_check_branch
        %3826 = sbr.rel (%p3824) target = $region56
      $region55: #{basic_block_dec.3} parent=47 // pred_region
        %p3827 = scmp.lt.s32.totalorder %s23, 1
        %s3828 = scalar_select %p3827, %s23, 1
        %p3829 = scmp.lt.s32.totalorder %s24, 0
        %s3830 = scalar_select %p3829, %s24, 0
        %s3831 = sadd.s32 %s3830, %s3828
        %s3832 = smul.addr %s3831, 2
        %s3833 = scalar_lea.vmem %s5, %s3832
      $region56: #{basic_block_dec.3} parent=47 // pred_fallthru
        _
    $region48: #{basic_block_dec.3} parent=5 // pred_fallthru
      _
  $region6: #{basic_block_dec.3} parent=0 // loop_footer
    %s16 = sadd.s32 1, %s12
  $region7: #{basic_block_dec.3} parent=0 // loop_footer_branch
    %11 = sbr.rel target = $region3
  $region8: #{basic_block_dec.3} parent=0 // loop_exit
    _

</llo_original>
